<compile_context>
chip_gen: v6e
topology: v6e:2x2x1
jax: 0.10.0
libtpu: 0.0.40
codegen_flags: <defaults>
</compile_context>

<pallas_src>
import math

import jax
import jax.numpy as jnp
from jax.experimental import pallas as pl
from jax.experimental.pallas import tpu as pltpu  # noqa: F401

# ---- small synthetic BERT config ----
VOCAB = 100
TYPE_VOCAB = 2
MAX_POS = 16
HIDDEN = 32
NUM_HEADS = 2
HEAD_DIM = HIDDEN // NUM_HEADS
INTERMEDIATE = 64
NUM_LAYERS = 2
OUTPUT_DIM = 2
LN_EPS = 1e-12
F32 = jnp.float32

QKV_PAD = ((3 * HIDDEN + 127) // 128) * 128   # 96 -> 128: lane-dense QKV projection output
LOGIT_PAD = 128                               # lane-dense kernel output block


# ---------------- in-kernel helpers (all f32) ----------------
def _layer_norm(x, gamma, beta):
    mu = jnp.mean(x, axis=-1, keepdims=True)
    var = jnp.mean((x - mu) ** 2, axis=-1, keepdims=True)
    return (x - mu) * jax.lax.rsqrt(var + LN_EPS) * gamma + beta


def _erf(x):
    # Abramowitz & Stegun 7.1.26 — max abs error ~1.5e-7 (exact-GELU at f32
    # precision, matching HF bert-base default "gelu" rather than tanh-approx).
    p = 0.3275911
    a1, a2, a3, a4, a5 = 0.254829592, -0.284496736, 1.421413741, -1.453152027, 1.061405429
    sgn = jnp.where(x >= 0.0, 1.0, -1.0)
    ax = jnp.abs(x)
    t = 1.0 / (1.0 + p * ax)
    poly = ((((a5 * t + a4) * t + a3) * t + a2) * t + a1) * t
    return sgn * (1.0 - poly * jnp.exp(-ax * ax))


def _gelu(x):
    return 0.5 * x * (1.0 + _erf(x * 0.7071067811865476))


def _softmax_rows(scores):
    m = jnp.max(scores, axis=-1, keepdims=True)
    p = jnp.exp(scores - m)
    return p / jnp.sum(p, axis=-1, keepdims=True)   # exact division for parity


# ---------------- fused kernel ----------------
def make_bert_kernel(batch, seq):
    bs = batch * seq

    def kernel(
        row_code_ref, key_code_ref, ids_ref, tids_ref, cls_sel_ref, pos_ref,
        wemb_ref, temb_ref, eln_g_ref, eln_b_ref,
        wqkv_ref, bqkv_ref, wo_ref, bo_ref, ln1_g_ref, ln1_b_ref,
        wi_ref, bi_ref, wo2_ref, bo2_ref, ln2_g_ref, ln2_b_ref,
        pool_w_ref, pool_b_ref, out1_w_ref, out1_b_ref, out2_w_ref, out2_b_ref,
        logits_ref,
    ):
        # ---- embeddings: gather-free one-hot matmul + type select + hoisted pos ----
        # TODO(synk): for real bert-base vocab (30522) replace the one-hot matmul
        # with a scalar-prefetch row gather and keep the table in HBM.
        ids = ids_ref[...]                                         # (BS, 1) int32
        vocab_iota = jax.lax.broadcasted_iota(jnp.int32, (bs, VOCAB), 1)
        word_oh = jnp.where(ids == vocab_iota, 1.0, 0.0)           # (BS, V) f32
        word = jnp.dot(word_oh, wemb_ref[...], preferred_element_type=F32)

        t = tids_ref[...]                                          # (BS, 1) f32
        temb = temb_ref[...]                                       # (2, H)
        typ = (1.0 - t) * temb[0:1, :] + t * temb[1:2, :]          # (BS, H)

        x = _layer_norm(word + typ + pos_ref[...], eln_g_ref[...], eln_b_ref[...])

        # ---- additive attention bias: padding mask + block-diagonal batch mask.
        # key_code[j] = batch_id(j) if token j is valid else -1, so a query row
        # only attends to valid keys of its own batch element.
        # TODO(synk): for B > 2 compute per-batch (S, S) scores instead of the
        # fused (B*S, B*S) form (O(B) redundant MXU work otherwise).
        allowed = row_code_ref[...] == key_code_ref[...]           # (BS, BS) bool
        mask_bias = jnp.where(allowed, 0.0, -1e9).astype(F32)

        scale = 1.0 / math.sqrt(HEAD_DIM)
        dn_qkT = (((1,), (1,)), ((), ()))                          # q @ k^T

        # Static unroll over layers; all weights stay VMEM-resident for the
        # whole kernel (total ~100 KB).
        # TODO(synk): real bert-base (~14 MB/layer) needs per-layer streaming
        # (grid axis over layers / emit_pipeline) instead of full residency.
        for l in range(NUM_LAYERS):
            qkv = jnp.dot(x, wqkv_ref[l], preferred_element_type=F32) + bqkv_ref[l]
            q = qkv[:, 0 * HIDDEN:1 * HIDDEN]
            k = qkv[:, 1 * HIDDEN:2 * HIDDEN]
            v = qkv[:, 2 * HIDDEN:3 * HIDDEN]

            # NUM_HEADS == 2: static per-head unroll keeps everything 2-D; the
            # (1,1)-contraction lets the matmul lowering consume K in its
            # projected layout (proven to lower cleanly; an explicit per-layer
            # transpose of a (16,32) block risks its own relayout at this size).
            ctx_heads = []
            for h in range(NUM_HEADS):
                sl = slice(h * HEAD_DIM, (h + 1) * HEAD_DIM)
                qh = q[:, sl]
                kh = k[:, sl]
                vh = v[:, sl]
                scores = jax.lax.dot_general(qh, kh, dn_qkT,
                                             preferred_element_type=F32)
                scores = scores * scale + mask_bias
                p = _softmax_rows(scores)
                ctx_heads.append(jnp.dot(p, vh, preferred_element_type=F32))
            ctx = jnp.concatenate(ctx_heads, axis=-1)              # (BS, H)

            attn_out = jnp.dot(ctx, wo_ref[l], preferred_element_type=F32) + bo_ref[l]
            x1 = _layer_norm(x + attn_out, ln1_g_ref[l], ln1_b_ref[l])

            hmid = _gelu(jnp.dot(x1, wi_ref[l], preferred_element_type=F32) + bi_ref[l])
            ffn = jnp.dot(hmid, wo2_ref[l], preferred_element_type=F32) + bo2_ref[l]
            x = _layer_norm(x1 + ffn, ln2_g_ref[l], ln2_b_ref[l])

        # ---- pooler (CLS -> dense -> tanh) + classifier head ----
        # CLS rows extracted with a (B, BS) one-hot selector matmul on the MXU
        # (no per-row slice/concat).  The three tiny dependent dots at the end
        # are fixed-latency MXU pushes; accepted for this launch-bound kernel.
        cls = jnp.dot(cls_sel_ref[...], x, preferred_element_type=F32)   # (B, H)
        pooled = jnp.tanh(
            jnp.dot(cls, pool_w_ref[...], preferred_element_type=F32) + pool_b_ref[...])
        h1 = jnp.maximum(
            jnp.dot(pooled, out1_w_ref[...], preferred_element_type=F32) + out1_b_ref[...],
            0.0)
        # out2 weight/bias are padded to 128 output lanes -> unmasked full-lane store.
        logits_ref[...] = (
            jnp.dot(h1, out2_w_ref[...], preferred_element_type=F32) + out2_b_ref[...])

    return kernel


# ---------------- wrapper: one pallas_call for the whole forward ----------------
def bert_sentiment_forward(input_ids, token_type_ids, attention_mask, params):
    B, S = input_ids.shape
    BS = B * S

    ids = input_ids.reshape(BS, 1).astype(jnp.int32)
    tids = token_type_ids.reshape(BS, 1).astype(F32)

    batch_id = jnp.arange(BS, dtype=jnp.int32) // S
    row_code = batch_id.reshape(BS, 1)                             # batch id per query row
    key_code = jnp.where(attention_mask.reshape(BS).astype(jnp.int32) > 0,
                         batch_id, -1).reshape(1, BS)              # batch id per valid key, -1 if pad

    # Hoisted out of the kernel (review): position-embedding broadcast and the
    # one-hot CLS-row selector.
    pos_full = jnp.tile(params["pos_emb"][:S], (B, 1))             # (BS, H)
    cls_sel = (jnp.arange(BS, dtype=jnp.int32)[None, :] ==
               (jnp.arange(B, dtype=jnp.int32) * S)[:, None]).astype(F32)   # (B, BS)

    kernel = make_bert_kernel(B, S)
    # No grid / BlockSpecs: every operand is tiny and passed as a full
    # VMEM-resident block; one kernel launch covers the whole forward pass.
    # TODO(synk): for B > 2 add a leading batch grid axis with
    # dimension_semantics=("parallel",) so v7x's second TensorCore is used.
    out_padded = pl.pallas_call(
        kernel,
        out_shape=jax.ShapeDtypeStruct((B, LOGIT_PAD), F32),
    )(
        row_code, key_code, ids, tids, cls_sel, pos_full,
        params["word_emb"], params["type_emb"],
        params["emb_ln_g"], params["emb_ln_b"],
        params["wqkv"], params["bqkv"], params["wo"], params["bo"],
        params["ln1_g"], params["ln1_b"],
        params["wi"], params["bi"], params["wo2"], params["bo2"],
        params["ln2_g"], params["ln2_b"],
        params["pooler_w"], params["pooler_b"],
        params["out1_w"], params["out1_b"],
        params["out2_w"], params["out2_b"],
    )
    return out_padded[:, :OUTPUT_DIM]


# ---------------- deterministic parameter init (all f32, matching fp32 reference) ----------------
def init_params(key):
    keys = iter(jax.random.split(key, 64))

    def nrm(shape, scale=0.02):
        return scale * jax.random.normal(next(keys), shape, dtype=F32)

    zeros = lambda shape: jnp.zeros(shape, F32)
    ones = lambda shape: jnp.ones(shape, F32)

    p = {
        "word_emb": nrm((VOCAB, HIDDEN)),
        "type_emb": nrm((TYPE_VOCAB, HIDDEN)),
        "pos_emb": nrm((MAX_POS, HIDDEN)),
        "emb_ln_g": ones((1, HIDDEN)),
        "emb_ln_b": zeros((1, HIDDEN)),
    }

    wqkv, wo, wi, wo2 = [], [], [], []
    for _ in range(NUM_LAYERS):
        w = jnp.concatenate([nrm((HIDDEN, HIDDEN)) for _ in range(3)], axis=1)   # (H, 3H)
        wqkv.append(jnp.pad(w, ((0, 0), (0, QKV_PAD - 3 * HIDDEN))))             # lane-pad to 128
        wo.append(nrm((HIDDEN, HIDDEN)))
        wi.append(nrm((HIDDEN, INTERMEDIATE)))
        wo2.append(nrm((INTERMEDIATE, HIDDEN)))

    p["wqkv"] = jnp.stack(wqkv)                                    # (L, H, 128)
    p["bqkv"] = zeros((NUM_LAYERS, 1, QKV_PAD))
    p["wo"] = jnp.stack(wo)                                        # (L, H, H)
    p["bo"] = zeros((NUM_LAYERS, 1, HIDDEN))
    p["ln1_g"] = jnp.ones((NUM_LAYERS, 1, HIDDEN), F32)
    p["ln1_b"] = zeros((NUM_LAYERS, 1, HIDDEN))
    p["wi"] = jnp.stack(wi)                                        # (L, H, I)
    p["bi"] = zeros((NUM_LAYERS, 1, INTERMEDIATE))
    p["wo2"] = jnp.stack(wo2)                                      # (L, I, H)
    p["bo2"] = zeros((NUM_LAYERS, 1, HIDDEN))
    p["ln2_g"] = jnp.ones((NUM_LAYERS, 1, HIDDEN), F32)
    p["ln2_b"] = zeros((NUM_LAYERS, 1, HIDDEN))

    p["pooler_w"] = nrm((HIDDEN, HIDDEN))
    p["pooler_b"] = zeros((1, HIDDEN))
    p["out1_w"] = nrm((HIDDEN, HIDDEN // 2))
    p["out1_b"] = zeros((1, HIDDEN // 2))
    # Final classifier padded to a lane-dense 128-wide output block.
    p["out2_w"] = jnp.pad(nrm((HIDDEN // 2, OUTPUT_DIM)),
                          ((0, 0), (0, LOGIT_PAD - OUTPUT_DIM)))
    p["out2_b"] = zeros((1, LOGIT_PAD))
    return p


if __name__ == "__main__":
    key = jax.random.PRNGKey(0)
    pkey, ikey = jax.random.split(key)
    params = init_params(pkey)

    B, S = 2, 8
    input_ids = jax.random.randint(ikey, (B, S), 0, VOCAB, dtype=jnp.int32)
    token_type_ids = jnp.concatenate(
        [jnp.zeros((B, S // 2), jnp.int32), jnp.ones((B, S // 2), jnp.int32)], axis=1
    )
    attention_mask = jnp.array(
        [[1] * S, [1] * (S - 2) + [0, 0]], dtype=jnp.int32
    )  # second example has 2 padding tokens

    # TODO(synk): pretrained bert-base-uncased weights & tokenizer are not loadable
    # here; a deterministic synthetic config with identical forward structure is used.
    forward = jax.jit(bert_sentiment_forward)
    logits = jax.block_until_ready(
        forward(input_ids, token_type_ids, attention_mask, params)
    )
    assert logits.shape == (B, OUTPUT_DIM) and logits.dtype == jnp.float32
    assert bool(jnp.all(jnp.isfinite(logits)))
    print("KERNEL_OK")
</pallas_src>

<mosaic_0001>
module attributes {stable_mosaic.version = 11 : i64} {
  func.func @kernel(%arg0: memref<16x1xi32, #tpu.memory_space<vmem>>, %arg1: memref<1x16xi32, #tpu.memory_space<vmem>>, %arg2: memref<16x1xi32, #tpu.memory_space<vmem>>, %arg3: memref<16x1xf32, #tpu.memory_space<vmem>>, %arg4: memref<2x16xf32, #tpu.memory_space<vmem>>, %arg5: memref<16x32xf32, #tpu.memory_space<vmem>>, %arg6: memref<100x32xf32, #tpu.memory_space<vmem>>, %arg7: memref<2x32xf32, #tpu.memory_space<vmem>>, %arg8: memref<1x32xf32, #tpu.memory_space<vmem>>, %arg9: memref<1x32xf32, #tpu.memory_space<vmem>>, %arg10: memref<2x32x128xf32, #tpu.memory_space<vmem>>, %arg11: memref<2x1x128xf32, #tpu.memory_space<vmem>>, %arg12: memref<2x32x32xf32, #tpu.memory_space<vmem>>, %arg13: memref<2x1x32xf32, #tpu.memory_space<vmem>>, %arg14: memref<2x1x32xf32, #tpu.memory_space<vmem>>, %arg15: memref<2x1x32xf32, #tpu.memory_space<vmem>>, %arg16: memref<2x32x64xf32, #tpu.memory_space<vmem>>, %arg17: memref<2x1x64xf32, #tpu.memory_space<vmem>>, %arg18: memref<2x64x32xf32, #tpu.memory_space<vmem>>, %arg19: memref<2x1x32xf32, #tpu.memory_space<vmem>>, %arg20: memref<2x1x32xf32, #tpu.memory_space<vmem>>, %arg21: memref<2x1x32xf32, #tpu.memory_space<vmem>>, %arg22: memref<32x32xf32, #tpu.memory_space<vmem>>, %arg23: memref<1x32xf32, #tpu.memory_space<vmem>>, %arg24: memref<32x16xf32, #tpu.memory_space<vmem>>, %arg25: memref<1x16xf32, #tpu.memory_space<vmem>>, %arg26: memref<16x128xf32, #tpu.memory_space<vmem>>, %arg27: memref<1x128xf32, #tpu.memory_space<vmem>>, %arg28: memref<2x128xf32, #tpu.memory_space<vmem>>) attributes {dimension_semantics = [], scalar_prefetch = 0 : i64, scratch_operands = 0 : i64, tpu.core_type = #tpu.core_type<tc>} {
    %c0 = arith.constant 0 : index
    %c0_0 = arith.constant 0 : index
    %0 = vector.load %arg2[%c0, %c0_0] : memref<16x1xi32, #tpu.memory_space<vmem>>, vector<16x1xi32>
    %1 = tpu.iota {dimensions = array<i32: 1>} : vector<16x100xi32>
    %2 = vector.broadcast %0 : vector<16x1xi32> to vector<16x100xi32>
    %3 = arith.cmpi eq, %2, %1 : vector<16x100xi32>
    %cst = arith.constant 1.000000e+00 : f32
    %cst_1 = arith.constant 0.000000e+00 : f32
    %4 = vector.broadcast %cst : f32 to vector<16x100xf32>
    %5 = vector.broadcast %cst_1 : f32 to vector<16x100xf32>
    %6 = arith.select %3, %4, %5 : vector<16x100xi1>, vector<16x100xf32>
    %c0_2 = arith.constant 0 : index
    %c0_3 = arith.constant 0 : index
    %7 = vector.load %arg6[%c0_2, %c0_3] : memref<100x32xf32, #tpu.memory_space<vmem>>, vector<100x32xf32>
    %cst_4 = arith.constant dense<0.000000e+00> : vector<16x32xf32>
    %8 = tpu.matmul %6, %7, %cst_4 {dimension_numbers = #tpu.dot_dimension_numbers<[1], [0], [0], [1], [0, 0, 1, 1], [], []>} : vector<16x100xf32>, vector<100x32xf32>, vector<16x32xf32> -> vector<16x32xf32>
    %c0_5 = arith.constant 0 : index
    %c0_6 = arith.constant 0 : index
    %9 = vector.load %arg3[%c0_5, %c0_6] : memref<16x1xf32, #tpu.memory_space<vmem>>, vector<16x1xf32>
    %c0_7 = arith.constant 0 : index
    %c0_8 = arith.constant 0 : index
    %10 = vector.load %arg7[%c0_7, %c0_8] : memref<2x32xf32, #tpu.memory_space<vmem>>, vector<2x32xf32>
    %cst_9 = arith.constant 1.000000e+00 : f32
    %11 = vector.broadcast %cst_9 : f32 to vector<16x1xf32>
    %12 = arith.subf %11, %9 : vector<16x1xf32>
    %13 = vector.extract_strided_slice %10 {offsets = [0, 0], sizes = [1, 32], strides = [1, 1]} : vector<2x32xf32> to vector<1x32xf32>
    %14 = vector.broadcast %12 : vector<16x1xf32> to vector<16x32xf32>
    %15 = vector.broadcast %13 : vector<1x32xf32> to vector<16x32xf32>
    %16 = arith.mulf %14, %15 : vector<16x32xf32>
    %17 = vector.extract_strided_slice %10 {offsets = [1, 0], sizes = [1, 32], strides = [1, 1]} : vector<2x32xf32> to vector<1x32xf32>
    %18 = vector.broadcast %9 : vector<16x1xf32> to vector<16x32xf32>
    %19 = vector.broadcast %17 : vector<1x32xf32> to vector<16x32xf32>
    %20 = arith.mulf %18, %19 : vector<16x32xf32>
    %21 = arith.addf %16, %20 : vector<16x32xf32>
    %22 = arith.addf %8, %21 : vector<16x32xf32>
    %c0_10 = arith.constant 0 : index
    %c0_11 = arith.constant 0 : index
    %23 = vector.load %arg5[%c0_10, %c0_11] : memref<16x32xf32, #tpu.memory_space<vmem>>, vector<16x32xf32>
    %24 = arith.addf %22, %23 : vector<16x32xf32>
    %c0_12 = arith.constant 0 : index
    %c0_13 = arith.constant 0 : index
    %25 = vector.load %arg8[%c0_12, %c0_13] : memref<1x32xf32, #tpu.memory_space<vmem>>, vector<1x32xf32>
    %c0_14 = arith.constant 0 : index
    %c0_15 = arith.constant 0 : index
    %26 = vector.load %arg9[%c0_14, %c0_15] : memref<1x32xf32, #tpu.memory_space<vmem>>, vector<1x32xf32>
    %cst_16 = arith.constant dense<0.000000e+00> : vector<16xf32>
    %27 = vector.multi_reduction <add>, %24, %cst_16 [1] : vector<16x32xf32> to vector<16xf32>
    %28 = vector.shape_cast %27 : vector<16xf32> to vector<16x1xf32>
    %cst_17 = arith.constant 3.200000e+01 : f32
    %29 = vector.broadcast %cst_17 : f32 to vector<16x1xf32>
    %30 = arith.divf %28, %29 : vector<16x1xf32>
    %31 = vector.broadcast %30 : vector<16x1xf32> to vector<16x32xf32>
    %32 = arith.subf %24, %31 : vector<16x32xf32>
    %33 = arith.mulf %32, %32 : vector<16x32xf32>
    %cst_18 = arith.constant dense<0.000000e+00> : vector<16xf32>
    %34 = vector.multi_reduction <add>, %33, %cst_18 [1] : vector<16x32xf32> to vector<16xf32>
    %35 = vector.shape_cast %34 : vector<16xf32> to vector<16x1xf32>
    %cst_19 = arith.constant 3.200000e+01 : f32
    %36 = vector.broadcast %cst_19 : f32 to vector<16x1xf32>
    %37 = arith.divf %35, %36 : vector<16x1xf32>
    %38 = vector.broadcast %30 : vector<16x1xf32> to vector<16x32xf32>
    %39 = arith.subf %24, %38 : vector<16x32xf32>
    %cst_20 = arith.constant 9.99999996E-13 : f32
    %40 = vector.broadcast %cst_20 : f32 to vector<16x1xf32>
    %41 = arith.addf %37, %40 : vector<16x1xf32>
    %42 = math.rsqrt %41 : vector<16x1xf32>
    %43 = vector.broadcast %42 : vector<16x1xf32> to vector<16x32xf32>
    %44 = arith.mulf %39, %43 : vector<16x32xf32>
    %45 = vector.broadcast %25 : vector<1x32xf32> to vector<16x32xf32>
    %46 = arith.mulf %44, %45 : vector<16x32xf32>
    %47 = vector.broadcast %26 : vector<1x32xf32> to vector<16x32xf32>
    %48 = arith.addf %46, %47 : vector<16x32xf32>
    %c0_21 = arith.constant 0 : index
    %c0_22 = arith.constant 0 : index
    %49 = vector.load %arg0[%c0_21, %c0_22] : memref<16x1xi32, #tpu.memory_space<vmem>>, vector<16x1xi32>
    %c0_23 = arith.constant 0 : index
    %c0_24 = arith.constant 0 : index
    %50 = vector.load %arg1[%c0_23, %c0_24] : memref<1x16xi32, #tpu.memory_space<vmem>>, vector<1x16xi32>
    %51 = vector.broadcast %49 : vector<16x1xi32> to vector<16x16xi32>
    %52 = vector.broadcast %50 : vector<1x16xi32> to vector<16x16xi32>
    %53 = arith.cmpi eq, %51, %52 : vector<16x16xi32>
    %cst_25 = arith.constant 0.000000e+00 : f32
    %cst_26 = arith.constant -1.000000e+09 : f32
    %54 = vector.broadcast %cst_25 : f32 to vector<16x16xf32>
    %55 = vector.broadcast %cst_26 : f32 to vector<16x16xf32>
    %56 = arith.select %53, %54, %55 : vector<16x16xi1>, vector<16x16xf32>
    %c0_27 = arith.constant 0 : index
    %c0_28 = arith.constant 0 : index
    %c0_29 = arith.constant 0 : index
    %57 = vector.load %arg10[%c0_27, %c0_28, %c0_29] : memref<2x32x128xf32, #tpu.memory_space<vmem>>, vector<1x32x128xf32>
    %58 = vector.shape_cast %57 : vector<1x32x128xf32> to vector<32x128xf32>
    %cst_30 = arith.constant dense<0.000000e+00> : vector<16x128xf32>
    %59 = tpu.matmul %48, %58, %cst_30 {dimension_numbers = #tpu.dot_dimension_numbers<[1], [0], [0], [1], [0, 0, 1, 1], [], []>} : vector<16x32xf32>, vector<32x128xf32>, vector<16x128xf32> -> vector<16x128xf32>
    %c0_31 = arith.constant 0 : index
    %c0_32 = arith.constant 0 : index
    %c0_33 = arith.constant 0 : index
    %60 = vector.load %arg11[%c0_31, %c0_32, %c0_33] : memref<2x1x128xf32, #tpu.memory_space<vmem>>, vector<1x1x128xf32>
    %61 = vector.shape_cast %60 : vector<1x1x128xf32> to vector<1x128xf32>
    %62 = vector.broadcast %61 : vector<1x128xf32> to vector<16x128xf32>
    %63 = arith.addf %59, %62 : vector<16x128xf32>
    %64 = vector.extract_strided_slice %63 {offsets = [0, 0], sizes = [16, 32], strides = [1, 1]} : vector<16x128xf32> to vector<16x32xf32>
    %65 = vector.extract_strided_slice %63 {offsets = [0, 32], sizes = [16, 32], strides = [1, 1]} : vector<16x128xf32> to vector<16x32xf32>
    %66 = vector.extract_strided_slice %63 {offsets = [0, 64], sizes = [16, 32], strides = [1, 1]} : vector<16x128xf32> to vector<16x32xf32>
    %67 = vector.extract_strided_slice %64 {offsets = [0, 0], sizes = [16, 16], strides = [1, 1]} : vector<16x32xf32> to vector<16x16xf32>
    %68 = vector.extract_strided_slice %65 {offsets = [0, 0], sizes = [16, 16], strides = [1, 1]} : vector<16x32xf32> to vector<16x16xf32>
    %69 = vector.extract_strided_slice %66 {offsets = [0, 0], sizes = [16, 16], strides = [1, 1]} : vector<16x32xf32> to vector<16x16xf32>
    %cst_34 = arith.constant dense<0.000000e+00> : vector<16x16xf32>
    %70 = tpu.matmul %67, %68, %cst_34 {dimension_numbers = #tpu.dot_dimension_numbers<[1], [1], [0], [0], [0, 0, 1, 0], [], []>} : vector<16x16xf32>, vector<16x16xf32>, vector<16x16xf32> -> vector<16x16xf32>
    %cst_35 = arith.constant 2.500000e-01 : f32
    %71 = vector.broadcast %cst_35 : f32 to vector<16x16xf32>
    %72 = arith.mulf %70, %71 : vector<16x16xf32>
    %73 = arith.addf %72, %56 : vector<16x16xf32>
    %cst_36 = arith.constant dense<0xFF800000> : vector<16xf32>
    %74 = vector.multi_reduction <maximumf>, %73, %cst_36 [1] : vector<16x16xf32> to vector<16xf32>
    %75 = vector.shape_cast %74 : vector<16xf32> to vector<16x1xf32>
    %76 = vector.broadcast %75 : vector<16x1xf32> to vector<16x16xf32>
    %77 = arith.subf %73, %76 : vector<16x16xf32>
    %78 = math.exp %77 : vector<16x16xf32>
    %cst_37 = arith.constant dense<0.000000e+00> : vector<16xf32>
    %79 = vector.multi_reduction <add>, %78, %cst_37 [1] : vector<16x16xf32> to vector<16xf32>
    %80 = vector.shape_cast %79 : vector<16xf32> to vector<16x1xf32>
    %81 = vector.broadcast %80 : vector<16x1xf32> to vector<16x16xf32>
    %82 = arith.divf %78, %81 : vector<16x16xf32>
    %cst_38 = arith.constant dense<0.000000e+00> : vector<16x16xf32>
    %83 = tpu.matmul %82, %69, %cst_38 {dimension_numbers = #tpu.dot_dimension_numbers<[1], [0], [0], [1], [0, 0, 1, 1], [], []>} : vector<16x16xf32>, vector<16x16xf32>, vector<16x16xf32> -> vector<16x16xf32>
    %84 = vector.extract_strided_slice %64 {offsets = [0, 16], sizes = [16, 16], strides = [1, 1]} : vector<16x32xf32> to vector<16x16xf32>
    %85 = vector.extract_strided_slice %65 {offsets = [0, 16], sizes = [16, 16], strides = [1, 1]} : vector<16x32xf32> to vector<16x16xf32>
    %86 = vector.extract_strided_slice %66 {offsets = [0, 16], sizes = [16, 16], strides = [1, 1]} : vector<16x32xf32> to vector<16x16xf32>
    %cst_39 = arith.constant dense<0.000000e+00> : vector<16x16xf32>
    %87 = tpu.matmul %84, %85, %cst_39 {dimension_numbers = #tpu.dot_dimension_numbers<[1], [1], [0], [0], [0, 0, 1, 0], [], []>} : vector<16x16xf32>, vector<16x16xf32>, vector<16x16xf32> -> vector<16x16xf32>
    %cst_40 = arith.constant 2.500000e-01 : f32
    %88 = vector.broadcast %cst_40 : f32 to vector<16x16xf32>
    %89 = arith.mulf %87, %88 : vector<16x16xf32>
    %90 = arith.addf %89, %56 : vector<16x16xf32>
    %cst_41 = arith.constant dense<0xFF800000> : vector<16xf32>
    %91 = vector.multi_reduction <maximumf>, %90, %cst_41 [1] : vector<16x16xf32> to vector<16xf32>
    %92 = vector.shape_cast %91 : vector<16xf32> to vector<16x1xf32>
    %93 = vector.broadcast %92 : vector<16x1xf32> to vector<16x16xf32>
    %94 = arith.subf %90, %93 : vector<16x16xf32>
    %95 = math.exp %94 : vector<16x16xf32>
    %cst_42 = arith.constant dense<0.000000e+00> : vector<16xf32>
    %96 = vector.multi_reduction <add>, %95, %cst_42 [1] : vector<16x16xf32> to vector<16xf32>
    %97 = vector.shape_cast %96 : vector<16xf32> to vector<16x1xf32>
    %98 = vector.broadcast %97 : vector<16x1xf32> to vector<16x16xf32>
    %99 = arith.divf %95, %98 : vector<16x16xf32>
    %cst_43 = arith.constant dense<0.000000e+00> : vector<16x16xf32>
    %100 = tpu.matmul %99, %86, %cst_43 {dimension_numbers = #tpu.dot_dimension_numbers<[1], [0], [0], [1], [0, 0, 1, 1], [], []>} : vector<16x16xf32>, vector<16x16xf32>, vector<16x16xf32> -> vector<16x16xf32>
    %101 = tpu.concatenate %83, %100 in 1 : vector<16x16xf32>, vector<16x16xf32> -> vector<16x32xf32>
    %c0_44 = arith.constant 0 : index
    %c0_45 = arith.constant 0 : index
    %c0_46 = arith.constant 0 : index
    %102 = vector.load %arg12[%c0_44, %c0_45, %c0_46] : memref<2x32x32xf32, #tpu.memory_space<vmem>>, vector<1x32x32xf32>
    %103 = vector.shape_cast %102 : vector<1x32x32xf32> to vector<32x32xf32>
    %cst_47 = arith.constant dense<0.000000e+00> : vector<16x32xf32>
    %104 = tpu.matmul %101, %103, %cst_47 {dimension_numbers = #tpu.dot_dimension_numbers<[1], [0], [0], [1], [0, 0, 1, 1], [], []>} : vector<16x32xf32>, vector<32x32xf32>, vector<16x32xf32> -> vector<16x32xf32>
    %c0_48 = arith.constant 0 : index
    %c0_49 = arith.constant 0 : index
    %c0_50 = arith.constant 0 : index
    %105 = vector.load %arg13[%c0_48, %c0_49, %c0_50] : memref<2x1x32xf32, #tpu.memory_space<vmem>>, vector<1x1x32xf32>
    %106 = vector.shape_cast %105 : vector<1x1x32xf32> to vector<1x32xf32>
    %107 = vector.broadcast %106 : vector<1x32xf32> to vector<16x32xf32>
    %108 = arith.addf %104, %107 : vector<16x32xf32>
    %109 = arith.addf %48, %108 : vector<16x32xf32>
    %c0_51 = arith.constant 0 : index
    %c0_52 = arith.constant 0 : index
    %c0_53 = arith.constant 0 : index
    %110 = vector.load %arg14[%c0_51, %c0_52, %c0_53] : memref<2x1x32xf32, #tpu.memory_space<vmem>>, vector<1x1x32xf32>
    %111 = vector.shape_cast %110 : vector<1x1x32xf32> to vector<1x32xf32>
    %c0_54 = arith.constant 0 : index
    %c0_55 = arith.constant 0 : index
    %c0_56 = arith.constant 0 : index
    %112 = vector.load %arg15[%c0_54, %c0_55, %c0_56] : memref<2x1x32xf32, #tpu.memory_space<vmem>>, vector<1x1x32xf32>
    %113 = vector.shape_cast %112 : vector<1x1x32xf32> to vector<1x32xf32>
    %cst_57 = arith.constant dense<0.000000e+00> : vector<16xf32>
    %114 = vector.multi_reduction <add>, %109, %cst_57 [1] : vector<16x32xf32> to vector<16xf32>
    %115 = vector.shape_cast %114 : vector<16xf32> to vector<16x1xf32>
    %cst_58 = arith.constant 3.200000e+01 : f32
    %116 = vector.broadcast %cst_58 : f32 to vector<16x1xf32>
    %117 = arith.divf %115, %116 : vector<16x1xf32>
    %118 = vector.broadcast %117 : vector<16x1xf32> to vector<16x32xf32>
    %119 = arith.subf %109, %118 : vector<16x32xf32>
    %120 = arith.mulf %119, %119 : vector<16x32xf32>
    %cst_59 = arith.constant dense<0.000000e+00> : vector<16xf32>
    %121 = vector.multi_reduction <add>, %120, %cst_59 [1] : vector<16x32xf32> to vector<16xf32>
    %122 = vector.shape_cast %121 : vector<16xf32> to vector<16x1xf32>
    %cst_60 = arith.constant 3.200000e+01 : f32
    %123 = vector.broadcast %cst_60 : f32 to vector<16x1xf32>
    %124 = arith.divf %122, %123 : vector<16x1xf32>
    %125 = vector.broadcast %117 : vector<16x1xf32> to vector<16x32xf32>
    %126 = arith.subf %109, %125 : vector<16x32xf32>
    %cst_61 = arith.constant 9.99999996E-13 : f32
    %127 = vector.broadcast %cst_61 : f32 to vector<16x1xf32>
    %128 = arith.addf %124, %127 : vector<16x1xf32>
    %129 = math.rsqrt %128 : vector<16x1xf32>
    %130 = vector.broadcast %129 : vector<16x1xf32> to vector<16x32xf32>
    %131 = arith.mulf %126, %130 : vector<16x32xf32>
    %132 = vector.broadcast %111 : vector<1x32xf32> to vector<16x32xf32>
    %133 = arith.mulf %131, %132 : vector<16x32xf32>
    %134 = vector.broadcast %113 : vector<1x32xf32> to vector<16x32xf32>
    %135 = arith.addf %133, %134 : vector<16x32xf32>
    %c0_62 = arith.constant 0 : index
    %c0_63 = arith.constant 0 : index
    %c0_64 = arith.constant 0 : index
    %136 = vector.load %arg16[%c0_62, %c0_63, %c0_64] : memref<2x32x64xf32, #tpu.memory_space<vmem>>, vector<1x32x64xf32>
    %137 = vector.shape_cast %136 : vector<1x32x64xf32> to vector<32x64xf32>
    %cst_65 = arith.constant dense<0.000000e+00> : vector<16x64xf32>
    %138 = tpu.matmul %135, %137, %cst_65 {dimension_numbers = #tpu.dot_dimension_numbers<[1], [0], [0], [1], [0, 0, 1, 1], [], []>} : vector<16x32xf32>, vector<32x64xf32>, vector<16x64xf32> -> vector<16x64xf32>
    %c0_66 = arith.constant 0 : index
    %c0_67 = arith.constant 0 : index
    %c0_68 = arith.constant 0 : index
    %139 = vector.load %arg17[%c0_66, %c0_67, %c0_68] : memref<2x1x64xf32, #tpu.memory_space<vmem>>, vector<1x1x64xf32>
    %140 = vector.shape_cast %139 : vector<1x1x64xf32> to vector<1x64xf32>
    %141 = vector.broadcast %140 : vector<1x64xf32> to vector<16x64xf32>
    %142 = arith.addf %138, %141 : vector<16x64xf32>
    %cst_69 = arith.constant 5.000000e-01 : f32
    %143 = vector.broadcast %cst_69 : f32 to vector<16x64xf32>
    %144 = arith.mulf %143, %142 : vector<16x64xf32>
    %cst_70 = arith.constant 0.707106769 : f32
    %145 = vector.broadcast %cst_70 : f32 to vector<16x64xf32>
    %146 = arith.mulf %142, %145 : vector<16x64xf32>
    %cst_71 = arith.constant 0.000000e+00 : f32
    %147 = vector.broadcast %cst_71 : f32 to vector<16x64xf32>
    %148 = arith.cmpf oge, %146, %147 : vector<16x64xf32>
    %cst_72 = arith.constant 1.000000e+00 : f32
    %cst_73 = arith.constant -1.000000e+00 : f32
    %149 = vector.broadcast %cst_72 : f32 to vector<16x64xf32>
    %150 = vector.broadcast %cst_73 : f32 to vector<16x64xf32>
    %151 = arith.select %148, %149, %150 : vector<16x64xi1>, vector<16x64xf32>
    %152 = math.absf %146 : vector<16x64xf32>
    %cst_74 = arith.constant 0.327591091 : f32
    %153 = vector.broadcast %cst_74 : f32 to vector<16x64xf32>
    %154 = arith.mulf %153, %152 : vector<16x64xf32>
    %cst_75 = arith.constant 1.000000e+00 : f32
    %155 = vector.broadcast %cst_75 : f32 to vector<16x64xf32>
    %156 = arith.addf %155, %154 : vector<16x64xf32>
    %cst_76 = arith.constant 1.000000e+00 : f32
    %157 = vector.broadcast %cst_76 : f32 to vector<16x64xf32>
    %158 = arith.divf %157, %156 : vector<16x64xf32>
    %cst_77 = arith.constant 1.06140542 : f32
    %159 = vector.broadcast %cst_77 : f32 to vector<16x64xf32>
    %160 = arith.mulf %159, %158 : vector<16x64xf32>
    %cst_78 = arith.constant -1.45315206 : f32
    %161 = vector.broadcast %cst_78 : f32 to vector<16x64xf32>
    %162 = arith.addf %160, %161 : vector<16x64xf32>
    %163 = arith.mulf %162, %158 : vector<16x64xf32>
    %cst_79 = arith.constant 1.42141378 : f32
    %164 = vector.broadcast %cst_79 : f32 to vector<16x64xf32>
    %165 = arith.addf %163, %164 : vector<16x64xf32>
    %166 = arith.mulf %165, %158 : vector<16x64xf32>
    %cst_80 = arith.constant -0.284496725 : f32
    %167 = vector.broadcast %cst_80 : f32 to vector<16x64xf32>
    %168 = arith.addf %166, %167 : vector<16x64xf32>
    %169 = arith.mulf %168, %158 : vector<16x64xf32>
    %cst_81 = arith.constant 0.254829586 : f32
    %170 = vector.broadcast %cst_81 : f32 to vector<16x64xf32>
    %171 = arith.addf %169, %170 : vector<16x64xf32>
    %172 = arith.mulf %171, %158 : vector<16x64xf32>
    %cst_82 = arith.constant 0.000000e+00 : f32
    %173 = vector.broadcast %cst_82 : f32 to vector<16x64xf32>
    %174 = arith.subf %173, %152 : vector<16x64xf32>
    %175 = arith.mulf %174, %152 : vector<16x64xf32>
    %176 = math.exp %175 : vector<16x64xf32>
    %177 = arith.mulf %172, %176 : vector<16x64xf32>
    %cst_83 = arith.constant 1.000000e+00 : f32
    %178 = vector.broadcast %cst_83 : f32 to vector<16x64xf32>
    %179 = arith.subf %178, %177 : vector<16x64xf32>
    %180 = arith.mulf %151, %179 : vector<16x64xf32>
    %cst_84 = arith.constant 1.000000e+00 : f32
    %181 = vector.broadcast %cst_84 : f32 to vector<16x64xf32>
    %182 = arith.addf %181, %180 : vector<16x64xf32>
    %183 = arith.mulf %144, %182 : vector<16x64xf32>
    %c0_85 = arith.constant 0 : index
    %c0_86 = arith.constant 0 : index
    %c0_87 = arith.constant 0 : index
    %184 = vector.load %arg18[%c0_85, %c0_86, %c0_87] : memref<2x64x32xf32, #tpu.memory_space<vmem>>, vector<1x64x32xf32>
    %185 = vector.shape_cast %184 : vector<1x64x32xf32> to vector<64x32xf32>
    %cst_88 = arith.constant dense<0.000000e+00> : vector<16x32xf32>
    %186 = tpu.matmul %183, %185, %cst_88 {dimension_numbers = #tpu.dot_dimension_numbers<[1], [0], [0], [1], [0, 0, 1, 1], [], []>} : vector<16x64xf32>, vector<64x32xf32>, vector<16x32xf32> -> vector<16x32xf32>
    %c0_89 = arith.constant 0 : index
    %c0_90 = arith.constant 0 : index
    %c0_91 = arith.constant 0 : index
    %187 = vector.load %arg19[%c0_89, %c0_90, %c0_91] : memref<2x1x32xf32, #tpu.memory_space<vmem>>, vector<1x1x32xf32>
    %188 = vector.shape_cast %187 : vector<1x1x32xf32> to vector<1x32xf32>
    %189 = vector.broadcast %188 : vector<1x32xf32> to vector<16x32xf32>
    %190 = arith.addf %186, %189 : vector<16x32xf32>
    %191 = arith.addf %135, %190 : vector<16x32xf32>
    %c0_92 = arith.constant 0 : index
    %c0_93 = arith.constant 0 : index
    %c0_94 = arith.constant 0 : index
    %192 = vector.load %arg20[%c0_92, %c0_93, %c0_94] : memref<2x1x32xf32, #tpu.memory_space<vmem>>, vector<1x1x32xf32>
    %193 = vector.shape_cast %192 : vector<1x1x32xf32> to vector<1x32xf32>
    %c0_95 = arith.constant 0 : index
    %c0_96 = arith.constant 0 : index
    %c0_97 = arith.constant 0 : index
    %194 = vector.load %arg21[%c0_95, %c0_96, %c0_97] : memref<2x1x32xf32, #tpu.memory_space<vmem>>, vector<1x1x32xf32>
    %195 = vector.shape_cast %194 : vector<1x1x32xf32> to vector<1x32xf32>
    %cst_98 = arith.constant dense<0.000000e+00> : vector<16xf32>
    %196 = vector.multi_reduction <add>, %191, %cst_98 [1] : vector<16x32xf32> to vector<16xf32>
    %197 = vector.shape_cast %196 : vector<16xf32> to vector<16x1xf32>
    %cst_99 = arith.constant 3.200000e+01 : f32
    %198 = vector.broadcast %cst_99 : f32 to vector<16x1xf32>
    %199 = arith.divf %197, %198 : vector<16x1xf32>
    %200 = vector.broadcast %199 : vector<16x1xf32> to vector<16x32xf32>
    %201 = arith.subf %191, %200 : vector<16x32xf32>
    %202 = arith.mulf %201, %201 : vector<16x32xf32>
    %cst_100 = arith.constant dense<0.000000e+00> : vector<16xf32>
    %203 = vector.multi_reduction <add>, %202, %cst_100 [1] : vector<16x32xf32> to vector<16xf32>
    %204 = vector.shape_cast %203 : vector<16xf32> to vector<16x1xf32>
    %cst_101 = arith.constant 3.200000e+01 : f32
    %205 = vector.broadcast %cst_101 : f32 to vector<16x1xf32>
    %206 = arith.divf %204, %205 : vector<16x1xf32>
    %207 = vector.broadcast %199 : vector<16x1xf32> to vector<16x32xf32>
    %208 = arith.subf %191, %207 : vector<16x32xf32>
    %cst_102 = arith.constant 9.99999996E-13 : f32
    %209 = vector.broadcast %cst_102 : f32 to vector<16x1xf32>
    %210 = arith.addf %206, %209 : vector<16x1xf32>
    %211 = math.rsqrt %210 : vector<16x1xf32>
    %212 = vector.broadcast %211 : vector<16x1xf32> to vector<16x32xf32>
    %213 = arith.mulf %208, %212 : vector<16x32xf32>
    %214 = vector.broadcast %193 : vector<1x32xf32> to vector<16x32xf32>
    %215 = arith.mulf %213, %214 : vector<16x32xf32>
    %216 = vector.broadcast %195 : vector<1x32xf32> to vector<16x32xf32>
    %217 = arith.addf %215, %216 : vector<16x32xf32>
    %c1 = arith.constant 1 : index
    %c0_103 = arith.constant 0 : index
    %c0_104 = arith.constant 0 : index
    %218 = vector.load %arg10[%c1, %c0_103, %c0_104] : memref<2x32x128xf32, #tpu.memory_space<vmem>>, vector<1x32x128xf32>
    %219 = vector.shape_cast %218 : vector<1x32x128xf32> to vector<32x128xf32>
    %cst_105 = arith.constant dense<0.000000e+00> : vector<16x128xf32>
    %220 = tpu.matmul %217, %219, %cst_105 {dimension_numbers = #tpu.dot_dimension_numbers<[1], [0], [0], [1], [0, 0, 1, 1], [], []>} : vector<16x32xf32>, vector<32x128xf32>, vector<16x128xf32> -> vector<16x128xf32>
    %c1_106 = arith.constant 1 : index
    %c0_107 = arith.constant 0 : index
    %c0_108 = arith.constant 0 : index
    %221 = vector.load %arg11[%c1_106, %c0_107, %c0_108] : memref<2x1x128xf32, #tpu.memory_space<vmem>>, vector<1x1x128xf32>
    %222 = vector.shape_cast %221 : vector<1x1x128xf32> to vector<1x128xf32>
    %223 = vector.broadcast %222 : vector<1x128xf32> to vector<16x128xf32>
    %224 = arith.addf %220, %223 : vector<16x128xf32>
    %225 = vector.extract_strided_slice %224 {offsets = [0, 0], sizes = [16, 32], strides = [1, 1]} : vector<16x128xf32> to vector<16x32xf32>
    %226 = vector.extract_strided_slice %224 {offsets = [0, 32], sizes = [16, 32], strides = [1, 1]} : vector<16x128xf32> to vector<16x32xf32>
    %227 = vector.extract_strided_slice %224 {offsets = [0, 64], sizes = [16, 32], strides = [1, 1]} : vector<16x128xf32> to vector<16x32xf32>
    %228 = vector.extract_strided_slice %225 {offsets = [0, 0], sizes = [16, 16], strides = [1, 1]} : vector<16x32xf32> to vector<16x16xf32>
    %229 = vector.extract_strided_slice %226 {offsets = [0, 0], sizes = [16, 16], strides = [1, 1]} : vector<16x32xf32> to vector<16x16xf32>
    %230 = vector.extract_strided_slice %227 {offsets = [0, 0], sizes = [16, 16], strides = [1, 1]} : vector<16x32xf32> to vector<16x16xf32>
    %cst_109 = arith.constant dense<0.000000e+00> : vector<16x16xf32>
    %231 = tpu.matmul %228, %229, %cst_109 {dimension_numbers = #tpu.dot_dimension_numbers<[1], [1], [0], [0], [0, 0, 1, 0], [], []>} : vector<16x16xf32>, vector<16x16xf32>, vector<16x16xf32> -> vector<16x16xf32>
    %cst_110 = arith.constant 2.500000e-01 : f32
    %232 = vector.broadcast %cst_110 : f32 to vector<16x16xf32>
    %233 = arith.mulf %231, %232 : vector<16x16xf32>
    %234 = arith.addf %233, %56 : vector<16x16xf32>
    %cst_111 = arith.constant dense<0xFF800000> : vector<16xf32>
    %235 = vector.multi_reduction <maximumf>, %234, %cst_111 [1] : vector<16x16xf32> to vector<16xf32>
    %236 = vector.shape_cast %235 : vector<16xf32> to vector<16x1xf32>
    %237 = vector.broadcast %236 : vector<16x1xf32> to vector<16x16xf32>
    %238 = arith.subf %234, %237 : vector<16x16xf32>
    %239 = math.exp %238 : vector<16x16xf32>
    %cst_112 = arith.constant dense<0.000000e+00> : vector<16xf32>
    %240 = vector.multi_reduction <add>, %239, %cst_112 [1] : vector<16x16xf32> to vector<16xf32>
    %241 = vector.shape_cast %240 : vector<16xf32> to vector<16x1xf32>
    %242 = vector.broadcast %241 : vector<16x1xf32> to vector<16x16xf32>
    %243 = arith.divf %239, %242 : vector<16x16xf32>
    %cst_113 = arith.constant dense<0.000000e+00> : vector<16x16xf32>
    %244 = tpu.matmul %243, %230, %cst_113 {dimension_numbers = #tpu.dot_dimension_numbers<[1], [0], [0], [1], [0, 0, 1, 1], [], []>} : vector<16x16xf32>, vector<16x16xf32>, vector<16x16xf32> -> vector<16x16xf32>
    %245 = vector.extract_strided_slice %225 {offsets = [0, 16], sizes = [16, 16], strides = [1, 1]} : vector<16x32xf32> to vector<16x16xf32>
    %246 = vector.extract_strided_slice %226 {offsets = [0, 16], sizes = [16, 16], strides = [1, 1]} : vector<16x32xf32> to vector<16x16xf32>
    %247 = vector.extract_strided_slice %227 {offsets = [0, 16], sizes = [16, 16], strides = [1, 1]} : vector<16x32xf32> to vector<16x16xf32>
    %cst_114 = arith.constant dense<0.000000e+00> : vector<16x16xf32>
    %248 = tpu.matmul %245, %246, %cst_114 {dimension_numbers = #tpu.dot_dimension_numbers<[1], [1], [0], [0], [0, 0, 1, 0], [], []>} : vector<16x16xf32>, vector<16x16xf32>, vector<16x16xf32> -> vector<16x16xf32>
    %cst_115 = arith.constant 2.500000e-01 : f32
    %249 = vector.broadcast %cst_115 : f32 to vector<16x16xf32>
    %250 = arith.mulf %248, %249 : vector<16x16xf32>
    %251 = arith.addf %250, %56 : vector<16x16xf32>
    %cst_116 = arith.constant dense<0xFF800000> : vector<16xf32>
    %252 = vector.multi_reduction <maximumf>, %251, %cst_116 [1] : vector<16x16xf32> to vector<16xf32>
    %253 = vector.shape_cast %252 : vector<16xf32> to vector<16x1xf32>
    %254 = vector.broadcast %253 : vector<16x1xf32> to vector<16x16xf32>
    %255 = arith.subf %251, %254 : vector<16x16xf32>
    %256 = math.exp %255 : vector<16x16xf32>
    %cst_117 = arith.constant dense<0.000000e+00> : vector<16xf32>
    %257 = vector.multi_reduction <add>, %256, %cst_117 [1] : vector<16x16xf32> to vector<16xf32>
    %258 = vector.shape_cast %257 : vector<16xf32> to vector<16x1xf32>
    %259 = vector.broadcast %258 : vector<16x1xf32> to vector<16x16xf32>
    %260 = arith.divf %256, %259 : vector<16x16xf32>
    %cst_118 = arith.constant dense<0.000000e+00> : vector<16x16xf32>
    %261 = tpu.matmul %260, %247, %cst_118 {dimension_numbers = #tpu.dot_dimension_numbers<[1], [0], [0], [1], [0, 0, 1, 1], [], []>} : vector<16x16xf32>, vector<16x16xf32>, vector<16x16xf32> -> vector<16x16xf32>
    %262 = tpu.concatenate %244, %261 in 1 : vector<16x16xf32>, vector<16x16xf32> -> vector<16x32xf32>
    %c1_119 = arith.constant 1 : index
    %c0_120 = arith.constant 0 : index
    %c0_121 = arith.constant 0 : index
    %263 = vector.load %arg12[%c1_119, %c0_120, %c0_121] : memref<2x32x32xf32, #tpu.memory_space<vmem>>, vector<1x32x32xf32>
    %264 = vector.shape_cast %263 : vector<1x32x32xf32> to vector<32x32xf32>
    %cst_122 = arith.constant dense<0.000000e+00> : vector<16x32xf32>
    %265 = tpu.matmul %262, %264, %cst_122 {dimension_numbers = #tpu.dot_dimension_numbers<[1], [0], [0], [1], [0, 0, 1, 1], [], []>} : vector<16x32xf32>, vector<32x32xf32>, vector<16x32xf32> -> vector<16x32xf32>
    %c1_123 = arith.constant 1 : index
    %c0_124 = arith.constant 0 : index
    %c0_125 = arith.constant 0 : index
    %266 = vector.load %arg13[%c1_123, %c0_124, %c0_125] : memref<2x1x32xf32, #tpu.memory_space<vmem>>, vector<1x1x32xf32>
    %267 = vector.shape_cast %266 : vector<1x1x32xf32> to vector<1x32xf32>
    %268 = vector.broadcast %267 : vector<1x32xf32> to vector<16x32xf32>
    %269 = arith.addf %265, %268 : vector<16x32xf32>
    %270 = arith.addf %217, %269 : vector<16x32xf32>
    %c1_126 = arith.constant 1 : index
    %c0_127 = arith.constant 0 : index
    %c0_128 = arith.constant 0 : index
    %271 = vector.load %arg14[%c1_126, %c0_127, %c0_128] : memref<2x1x32xf32, #tpu.memory_space<vmem>>, vector<1x1x32xf32>
    %272 = vector.shape_cast %271 : vector<1x1x32xf32> to vector<1x32xf32>
    %c1_129 = arith.constant 1 : index
    %c0_130 = arith.constant 0 : index
    %c0_131 = arith.constant 0 : index
    %273 = vector.load %arg15[%c1_129, %c0_130, %c0_131] : memref<2x1x32xf32, #tpu.memory_space<vmem>>, vector<1x1x32xf32>
    %274 = vector.shape_cast %273 : vector<1x1x32xf32> to vector<1x32xf32>
    %cst_132 = arith.constant dense<0.000000e+00> : vector<16xf32>
    %275 = vector.multi_reduction <add>, %270, %cst_132 [1] : vector<16x32xf32> to vector<16xf32>
    %276 = vector.shape_cast %275 : vector<16xf32> to vector<16x1xf32>
    %cst_133 = arith.constant 3.200000e+01 : f32
    %277 = vector.broadcast %cst_133 : f32 to vector<16x1xf32>
    %278 = arith.divf %276, %277 : vector<16x1xf32>
    %279 = vector.broadcast %278 : vector<16x1xf32> to vector<16x32xf32>
    %280 = arith.subf %270, %279 : vector<16x32xf32>
    %281 = arith.mulf %280, %280 : vector<16x32xf32>
    %cst_134 = arith.constant dense<0.000000e+00> : vector<16xf32>
    %282 = vector.multi_reduction <add>, %281, %cst_134 [1] : vector<16x32xf32> to vector<16xf32>
    %283 = vector.shape_cast %282 : vector<16xf32> to vector<16x1xf32>
    %cst_135 = arith.constant 3.200000e+01 : f32
    %284 = vector.broadcast %cst_135 : f32 to vector<16x1xf32>
    %285 = arith.divf %283, %284 : vector<16x1xf32>
    %286 = vector.broadcast %278 : vector<16x1xf32> to vector<16x32xf32>
    %287 = arith.subf %270, %286 : vector<16x32xf32>
    %cst_136 = arith.constant 9.99999996E-13 : f32
    %288 = vector.broadcast %cst_136 : f32 to vector<16x1xf32>
    %289 = arith.addf %285, %288 : vector<16x1xf32>
    %290 = math.rsqrt %289 : vector<16x1xf32>
    %291 = vector.broadcast %290 : vector<16x1xf32> to vector<16x32xf32>
    %292 = arith.mulf %287, %291 : vector<16x32xf32>
    %293 = vector.broadcast %272 : vector<1x32xf32> to vector<16x32xf32>
    %294 = arith.mulf %292, %293 : vector<16x32xf32>
    %295 = vector.broadcast %274 : vector<1x32xf32> to vector<16x32xf32>
    %296 = arith.addf %294, %295 : vector<16x32xf32>
    %c1_137 = arith.constant 1 : index
    %c0_138 = arith.constant 0 : index
    %c0_139 = arith.constant 0 : index
    %297 = vector.load %arg16[%c1_137, %c0_138, %c0_139] : memref<2x32x64xf32, #tpu.memory_space<vmem>>, vector<1x32x64xf32>
    %298 = vector.shape_cast %297 : vector<1x32x64xf32> to vector<32x64xf32>
    %cst_140 = arith.constant dense<0.000000e+00> : vector<16x64xf32>
    %299 = tpu.matmul %296, %298, %cst_140 {dimension_numbers = #tpu.dot_dimension_numbers<[1], [0], [0], [1], [0, 0, 1, 1], [], []>} : vector<16x32xf32>, vector<32x64xf32>, vector<16x64xf32> -> vector<16x64xf32>
    %c1_141 = arith.constant 1 : index
    %c0_142 = arith.constant 0 : index
    %c0_143 = arith.constant 0 : index
    %300 = vector.load %arg17[%c1_141, %c0_142, %c0_143] : memref<2x1x64xf32, #tpu.memory_space<vmem>>, vector<1x1x64xf32>
    %301 = vector.shape_cast %300 : vector<1x1x64xf32> to vector<1x64xf32>
    %302 = vector.broadcast %301 : vector<1x64xf32> to vector<16x64xf32>
    %303 = arith.addf %299, %302 : vector<16x64xf32>
    %cst_144 = arith.constant 5.000000e-01 : f32
    %304 = vector.broadcast %cst_144 : f32 to vector<16x64xf32>
    %305 = arith.mulf %304, %303 : vector<16x64xf32>
    %cst_145 = arith.constant 0.707106769 : f32
    %306 = vector.broadcast %cst_145 : f32 to vector<16x64xf32>
    %307 = arith.mulf %303, %306 : vector<16x64xf32>
    %cst_146 = arith.constant 0.000000e+00 : f32
    %308 = vector.broadcast %cst_146 : f32 to vector<16x64xf32>
    %309 = arith.cmpf oge, %307, %308 : vector<16x64xf32>
    %cst_147 = arith.constant 1.000000e+00 : f32
    %cst_148 = arith.constant -1.000000e+00 : f32
    %310 = vector.broadcast %cst_147 : f32 to vector<16x64xf32>
    %311 = vector.broadcast %cst_148 : f32 to vector<16x64xf32>
    %312 = arith.select %309, %310, %311 : vector<16x64xi1>, vector<16x64xf32>
    %313 = math.absf %307 : vector<16x64xf32>
    %cst_149 = arith.constant 0.327591091 : f32
    %314 = vector.broadcast %cst_149 : f32 to vector<16x64xf32>
    %315 = arith.mulf %314, %313 : vector<16x64xf32>
    %cst_150 = arith.constant 1.000000e+00 : f32
    %316 = vector.broadcast %cst_150 : f32 to vector<16x64xf32>
    %317 = arith.addf %316, %315 : vector<16x64xf32>
    %cst_151 = arith.constant 1.000000e+00 : f32
    %318 = vector.broadcast %cst_151 : f32 to vector<16x64xf32>
    %319 = arith.divf %318, %317 : vector<16x64xf32>
    %cst_152 = arith.constant 1.06140542 : f32
    %320 = vector.broadcast %cst_152 : f32 to vector<16x64xf32>
    %321 = arith.mulf %320, %319 : vector<16x64xf32>
    %cst_153 = arith.constant -1.45315206 : f32
    %322 = vector.broadcast %cst_153 : f32 to vector<16x64xf32>
    %323 = arith.addf %321, %322 : vector<16x64xf32>
    %324 = arith.mulf %323, %319 : vector<16x64xf32>
    %cst_154 = arith.constant 1.42141378 : f32
    %325 = vector.broadcast %cst_154 : f32 to vector<16x64xf32>
    %326 = arith.addf %324, %325 : vector<16x64xf32>
    %327 = arith.mulf %326, %319 : vector<16x64xf32>
    %cst_155 = arith.constant -0.284496725 : f32
    %328 = vector.broadcast %cst_155 : f32 to vector<16x64xf32>
    %329 = arith.addf %327, %328 : vector<16x64xf32>
    %330 = arith.mulf %329, %319 : vector<16x64xf32>
    %cst_156 = arith.constant 0.254829586 : f32
    %331 = vector.broadcast %cst_156 : f32 to vector<16x64xf32>
    %332 = arith.addf %330, %331 : vector<16x64xf32>
    %333 = arith.mulf %332, %319 : vector<16x64xf32>
    %cst_157 = arith.constant 0.000000e+00 : f32
    %334 = vector.broadcast %cst_157 : f32 to vector<16x64xf32>
    %335 = arith.subf %334, %313 : vector<16x64xf32>
    %336 = arith.mulf %335, %313 : vector<16x64xf32>
    %337 = math.exp %336 : vector<16x64xf32>
    %338 = arith.mulf %333, %337 : vector<16x64xf32>
    %cst_158 = arith.constant 1.000000e+00 : f32
    %339 = vector.broadcast %cst_158 : f32 to vector<16x64xf32>
    %340 = arith.subf %339, %338 : vector<16x64xf32>
    %341 = arith.mulf %312, %340 : vector<16x64xf32>
    %cst_159 = arith.constant 1.000000e+00 : f32
    %342 = vector.broadcast %cst_159 : f32 to vector<16x64xf32>
    %343 = arith.addf %342, %341 : vector<16x64xf32>
    %344 = arith.mulf %305, %343 : vector<16x64xf32>
    %c1_160 = arith.constant 1 : index
    %c0_161 = arith.constant 0 : index
    %c0_162 = arith.constant 0 : index
    %345 = vector.load %arg18[%c1_160, %c0_161, %c0_162] : memref<2x64x32xf32, #tpu.memory_space<vmem>>, vector<1x64x32xf32>
    %346 = vector.shape_cast %345 : vector<1x64x32xf32> to vector<64x32xf32>
    %cst_163 = arith.constant dense<0.000000e+00> : vector<16x32xf32>
    %347 = tpu.matmul %344, %346, %cst_163 {dimension_numbers = #tpu.dot_dimension_numbers<[1], [0], [0], [1], [0, 0, 1, 1], [], []>} : vector<16x64xf32>, vector<64x32xf32>, vector<16x32xf32> -> vector<16x32xf32>
    %c1_164 = arith.constant 1 : index
    %c0_165 = arith.constant 0 : index
    %c0_166 = arith.constant 0 : index
    %348 = vector.load %arg19[%c1_164, %c0_165, %c0_166] : memref<2x1x32xf32, #tpu.memory_space<vmem>>, vector<1x1x32xf32>
    %349 = vector.shape_cast %348 : vector<1x1x32xf32> to vector<1x32xf32>
    %350 = vector.broadcast %349 : vector<1x32xf32> to vector<16x32xf32>
    %351 = arith.addf %347, %350 : vector<16x32xf32>
    %352 = arith.addf %296, %351 : vector<16x32xf32>
    %c1_167 = arith.constant 1 : index
    %c0_168 = arith.constant 0 : index
    %c0_169 = arith.constant 0 : index
    %353 = vector.load %arg20[%c1_167, %c0_168, %c0_169] : memref<2x1x32xf32, #tpu.memory_space<vmem>>, vector<1x1x32xf32>
    %354 = vector.shape_cast %353 : vector<1x1x32xf32> to vector<1x32xf32>
    %c1_170 = arith.constant 1 : index
    %c0_171 = arith.constant 0 : index
    %c0_172 = arith.constant 0 : index
    %355 = vector.load %arg21[%c1_170, %c0_171, %c0_172] : memref<2x1x32xf32, #tpu.memory_space<vmem>>, vector<1x1x32xf32>
    %356 = vector.shape_cast %355 : vector<1x1x32xf32> to vector<1x32xf32>
    %cst_173 = arith.constant dense<0.000000e+00> : vector<16xf32>
    %357 = vector.multi_reduction <add>, %352, %cst_173 [1] : vector<16x32xf32> to vector<16xf32>
    %358 = vector.shape_cast %357 : vector<16xf32> to vector<16x1xf32>
    %cst_174 = arith.constant 3.200000e+01 : f32
    %359 = vector.broadcast %cst_174 : f32 to vector<16x1xf32>
    %360 = arith.divf %358, %359 : vector<16x1xf32>
    %361 = vector.broadcast %360 : vector<16x1xf32> to vector<16x32xf32>
    %362 = arith.subf %352, %361 : vector<16x32xf32>
    %363 = arith.mulf %362, %362 : vector<16x32xf32>
    %cst_175 = arith.constant dense<0.000000e+00> : vector<16xf32>
    %364 = vector.multi_reduction <add>, %363, %cst_175 [1] : vector<16x32xf32> to vector<16xf32>
    %365 = vector.shape_cast %364 : vector<16xf32> to vector<16x1xf32>
    %cst_176 = arith.constant 3.200000e+01 : f32
    %366 = vector.broadcast %cst_176 : f32 to vector<16x1xf32>
    %367 = arith.divf %365, %366 : vector<16x1xf32>
    %368 = vector.broadcast %360 : vector<16x1xf32> to vector<16x32xf32>
    %369 = arith.subf %352, %368 : vector<16x32xf32>
    %cst_177 = arith.constant 9.99999996E-13 : f32
    %370 = vector.broadcast %cst_177 : f32 to vector<16x1xf32>
    %371 = arith.addf %367, %370 : vector<16x1xf32>
    %372 = math.rsqrt %371 : vector<16x1xf32>
    %373 = vector.broadcast %372 : vector<16x1xf32> to vector<16x32xf32>
    %374 = arith.mulf %369, %373 : vector<16x32xf32>
    %375 = vector.broadcast %354 : vector<1x32xf32> to vector<16x32xf32>
    %376 = arith.mulf %374, %375 : vector<16x32xf32>
    %377 = vector.broadcast %356 : vector<1x32xf32> to vector<16x32xf32>
    %378 = arith.addf %376, %377 : vector<16x32xf32>
    %c0_178 = arith.constant 0 : index
    %c0_179 = arith.constant 0 : index
    %379 = vector.load %arg4[%c0_178, %c0_179] : memref<2x16xf32, #tpu.memory_space<vmem>>, vector<2x16xf32>
    %cst_180 = arith.constant dense<0.000000e+00> : vector<2x32xf32>
    %380 = tpu.matmul %379, %378, %cst_180 {dimension_numbers = #tpu.dot_dimension_numbers<[1], [0], [0], [1], [0, 0, 1, 1], [], []>} : vector<2x16xf32>, vector<16x32xf32>, vector<2x32xf32> -> vector<2x32xf32>
    %c0_181 = arith.constant 0 : index
    %c0_182 = arith.constant 0 : index
    %381 = vector.load %arg22[%c0_181, %c0_182] : memref<32x32xf32, #tpu.memory_space<vmem>>, vector<32x32xf32>
    %cst_183 = arith.constant dense<0.000000e+00> : vector<2x32xf32>
    %382 = tpu.matmul %380, %381, %cst_183 {dimension_numbers = #tpu.dot_dimension_numbers<[1], [0], [0], [1], [0, 0, 1, 1], [], []>} : vector<2x32xf32>, vector<32x32xf32>, vector<2x32xf32> -> vector<2x32xf32>
    %c0_184 = arith.constant 0 : index
    %c0_185 = arith.constant 0 : index
    %383 = vector.load %arg23[%c0_184, %c0_185] : memref<1x32xf32, #tpu.memory_space<vmem>>, vector<1x32xf32>
    %384 = vector.broadcast %383 : vector<1x32xf32> to vector<2x32xf32>
    %385 = arith.addf %382, %384 : vector<2x32xf32>
    %386 = math.tanh %385 : vector<2x32xf32>
    %c0_186 = arith.constant 0 : index
    %c0_187 = arith.constant 0 : index
    %387 = vector.load %arg24[%c0_186, %c0_187] : memref<32x16xf32, #tpu.memory_space<vmem>>, vector<32x16xf32>
    %cst_188 = arith.constant dense<0.000000e+00> : vector<2x16xf32>
    %388 = tpu.matmul %386, %387, %cst_188 {dimension_numbers = #tpu.dot_dimension_numbers<[1], [0], [0], [1], [0, 0, 1, 1], [], []>} : vector<2x32xf32>, vector<32x16xf32>, vector<2x16xf32> -> vector<2x16xf32>
    %c0_189 = arith.constant 0 : index
    %c0_190 = arith.constant 0 : index
    %389 = vector.load %arg25[%c0_189, %c0_190] : memref<1x16xf32, #tpu.memory_space<vmem>>, vector<1x16xf32>
    %390 = vector.broadcast %389 : vector<1x16xf32> to vector<2x16xf32>
    %391 = arith.addf %388, %390 : vector<2x16xf32>
    %cst_191 = arith.constant 0.000000e+00 : f32
    %392 = vector.broadcast %cst_191 : f32 to vector<2x16xf32>
    %393 = arith.maximumf %391, %392 : vector<2x16xf32>
    %c0_192 = arith.constant 0 : index
    %c0_193 = arith.constant 0 : index
    %394 = vector.load %arg26[%c0_192, %c0_193] : memref<16x128xf32, #tpu.memory_space<vmem>>, vector<16x128xf32>
    %cst_194 = arith.constant dense<0.000000e+00> : vector<2x128xf32>
    %395 = tpu.matmul %393, %394, %cst_194 {dimension_numbers = #tpu.dot_dimension_numbers<[1], [0], [0], [1], [0, 0, 1, 1], [], []>} : vector<2x16xf32>, vector<16x128xf32>, vector<2x128xf32> -> vector<2x128xf32>
    %c0_195 = arith.constant 0 : index
    %c0_196 = arith.constant 0 : index
    %396 = vector.load %arg27[%c0_195, %c0_196] : memref<1x128xf32, #tpu.memory_space<vmem>>, vector<1x128xf32>
    %397 = vector.broadcast %396 : vector<1x128xf32> to vector<2x128xf32>
    %398 = arith.addf %395, %397 : vector<2x128xf32>
    %c0_197 = arith.constant 0 : index
    %c0_198 = arith.constant 0 : index
    %399 = vector.load %arg28[%c0_197, %c0_198] : memref<2x128xf32, #tpu.memory_space<vmem>>, vector<2x128xf32>
    tpu.vector_store %arg28[%c0_197, %c0_198], %398 {strides = array<i32>} : memref<2x128xf32, #tpu.memory_space<vmem>>, vector<2x128xf32>,
    return
  }
}

</mosaic_0001>

<llo_original>
// kernel: bert_sentiment_forward.1
$region0: #{bert_sentiment_forward.1}
  #allocation0 [shape = 'u32[]', space=smem, size = 0x4, offset = 0x4, fixed_abs, tag = 'smem constant byte address 0x4 - core index']
  #allocation1 [shape = 'u32[144,128]{1,0:T(1,128)}', space=vmem, size = 0x12000, scoped, tag = 'internal scratch']
  %s0 = inlined_call_operand.vmem [shape: s32[16,1], index: 0, kind: input, shape index: {}]
  %s1 = inlined_call_operand.vmem [shape: s32[1,16], index: 1, kind: input, shape index: {}]
  %s2 = inlined_call_operand.vmem [shape: s32[16,1], index: 2, kind: input, shape index: {}]
  %s3 = inlined_call_operand.vmem [shape: f32[16,1], index: 3, kind: input, shape index: {}]
  %s4 = inlined_call_operand.vmem [shape: f32[2,16], index: 4, kind: input, shape index: {}]
  %s5 = inlined_call_operand.vmem [shape: f32[16,32], index: 5, kind: input, shape index: {}]
  %s6 = inlined_call_operand.vmem [shape: f32[100,32], index: 6, kind: input, shape index: {}]
  %s7 = inlined_call_operand.vmem [shape: f32[2,32], index: 7, kind: input, shape index: {}]
  %s8 = inlined_call_operand.vmem [shape: f32[1,32], index: 8, kind: input, shape index: {}]
  %s9 = inlined_call_operand.vmem [shape: f32[1,32], index: 9, kind: input, shape index: {}]
  %s10 = inlined_call_operand.vmem [shape: f32[2,32,128], index: 10, kind: input, shape index: {}]
  %s11 = inlined_call_operand.vmem [shape: f32[2,1,128], index: 11, kind: input, shape index: {}]
  %s12 = inlined_call_operand.vmem [shape: f32[2,32,32], index: 12, kind: input, shape index: {}]
  %s13 = inlined_call_operand.vmem [shape: f32[2,1,32], index: 13, kind: input, shape index: {}]
  %s14 = inlined_call_operand.vmem [shape: f32[2,1,32], index: 14, kind: input, shape index: {}]
  %s15 = inlined_call_operand.vmem [shape: f32[2,1,32], index: 15, kind: input, shape index: {}]
  %s16 = inlined_call_operand.vmem [shape: f32[2,32,64], index: 16, kind: input, shape index: {}]
  %s17 = inlined_call_operand.vmem [shape: f32[2,1,64], index: 17, kind: input, shape index: {}]
  %s18 = inlined_call_operand.vmem [shape: f32[2,64,32], index: 18, kind: input, shape index: {}]
  %s19 = inlined_call_operand.vmem [shape: f32[2,1,32], index: 19, kind: input, shape index: {}]
  %s20 = inlined_call_operand.vmem [shape: f32[2,1,32], index: 20, kind: input, shape index: {}]
  %s21 = inlined_call_operand.vmem [shape: f32[2,1,32], index: 21, kind: input, shape index: {}]
  %s22 = inlined_call_operand.vmem [shape: f32[32,32], index: 22, kind: input, shape index: {}]
  %s23 = inlined_call_operand.vmem [shape: f32[1,32], index: 23, kind: input, shape index: {}]
  %s24 = inlined_call_operand.vmem [shape: f32[32,16], index: 24, kind: input, shape index: {}]
  %s25 = inlined_call_operand.vmem [shape: f32[1,16], index: 25, kind: input, shape index: {}]
  %s26 = inlined_call_operand.vmem [shape: f32[16,128], index: 26, kind: input, shape index: {}]
  %s27 = inlined_call_operand.vmem [shape: f32[1,128], index: 27, kind: input, shape index: {}]
  %s28 = inlined_call_operand.hbm [shape: f32[2,128], index: 28, kind: output, shape index: {}]
  %s29 = sld [smem:[#allocation0]]
  $region122: #{bert_sentiment_forward.1} parent=0
    _
  %s31 = ssub.s32 1, %s29
  %s32 = scalar_select 0, %s31, %s29
  $region1: #{bert_sentiment_forward.1} parent=0
    #allocation2 [shape = 'u8[1024]{0}', space=vmem, size = 0x400, scoped, tag = 'output window, operand 0, single buffered']
    #allocation3 [shape = 's32[1]{0}', space=sflag, size = 0x4, scoped, tag = 'scoped memory for bert_sentiment_forward.1']
    %33 = vsyncpa [#allocation3], 0
    // Predicated region
    $region2: #{bert_sentiment_forward.1} parent=1 // pred_check
      _
    $region3: #{bert_sentiment_forward.1} parent=1 // pred_check_branch
      %35 = sbr.rel (0) target = $region5
    $region4: #{bert_sentiment_forward.1} parent=1 // pred_region
      _
    $region5: #{bert_sentiment_forward.1} parent=1 // pred_fallthru
      _
    // Predicated region
    $region6: #{bert_sentiment_forward.1} parent=1 // pred_check
      _
    $region7: #{bert_sentiment_forward.1} parent=1 // pred_check_branch
      %37 = sbr.rel (0) target = $region9
    $region8: #{bert_sentiment_forward.1} parent=1 // pred_region
      _
    $region9: #{bert_sentiment_forward.1} parent=1 // pred_fallthru
      _
    // Predicated region
    $region10: #{bert_sentiment_forward.1} parent=1 // pred_check
      _
    $region11: #{bert_sentiment_forward.1} parent=1 // pred_check_branch
      %39 = sbr.rel (0) target = $region13
    $region12: #{bert_sentiment_forward.1} parent=1 // pred_region
      _
    $region13: #{bert_sentiment_forward.1} parent=1 // pred_fallthru
      _
    // Predicated region
    $region14: #{bert_sentiment_forward.1} parent=1 // pred_check
      _
    $region15: #{bert_sentiment_forward.1} parent=1 // pred_check_branch
      %41 = sbr.rel (0) target = $region17
    $region16: #{bert_sentiment_forward.1} parent=1 // pred_region
      _
    $region17: #{bert_sentiment_forward.1} parent=1 // pred_fallthru
      _
    // Predicated region
    $region18: #{bert_sentiment_forward.1} parent=1 // pred_check
      _
    $region19: #{bert_sentiment_forward.1} parent=1 // pred_check_branch
      %43 = sbr.rel (0) target = $region21
    $region20: #{bert_sentiment_forward.1} parent=1 // pred_region
      _
    $region21: #{bert_sentiment_forward.1} parent=1 // pred_fallthru
      _
    // Predicated region
    $region22: #{bert_sentiment_forward.1} parent=1 // pred_check
      _
    $region23: #{bert_sentiment_forward.1} parent=1 // pred_check_branch
      %45 = sbr.rel (0) target = $region25
    $region24: #{bert_sentiment_forward.1} parent=1 // pred_region
      _
    $region25: #{bert_sentiment_forward.1} parent=1 // pred_fallthru
      _
    // Predicated region
    $region26: #{bert_sentiment_forward.1} parent=1 // pred_check
      _
    $region27: #{bert_sentiment_forward.1} parent=1 // pred_check_branch
      %47 = sbr.rel (0) target = $region29
    $region28: #{bert_sentiment_forward.1} parent=1 // pred_region
      _
    $region29: #{bert_sentiment_forward.1} parent=1 // pred_fallthru
      _
    // Predicated region
    $region30: #{bert_sentiment_forward.1} parent=1 // pred_check
      _
    $region31: #{bert_sentiment_forward.1} parent=1 // pred_check_branch
      %49 = sbr.rel (0) target = $region33
    $region32: #{bert_sentiment_forward.1} parent=1 // pred_region
      _
    $region33: #{bert_sentiment_forward.1} parent=1 // pred_fallthru
      _
    // Predicated region
    $region34: #{bert_sentiment_forward.1} parent=1 // pred_check
      _
    $region35: #{bert_sentiment_forward.1} parent=1 // pred_check_branch
      %51 = sbr.rel (0) target = $region37
    $region36: #{bert_sentiment_forward.1} parent=1 // pred_region
      _
    $region37: #{bert_sentiment_forward.1} parent=1 // pred_fallthru
      _
    // Predicated region
    $region38: #{bert_sentiment_forward.1} parent=1 // pred_check
      _
    $region39: #{bert_sentiment_forward.1} parent=1 // pred_check_branch
      %53 = sbr.rel (0) target = $region41
    $region40: #{bert_sentiment_forward.1} parent=1 // pred_region
      _
    $region41: #{bert_sentiment_forward.1} parent=1 // pred_fallthru
      _
    // Predicated region
    $region42: #{bert_sentiment_forward.1} parent=1 // pred_check
      _
    $region43: #{bert_sentiment_forward.1} parent=1 // pred_check_branch
      %55 = sbr.rel (0) target = $region45
    $region44: #{bert_sentiment_forward.1} parent=1 // pred_region
      _
    $region45: #{bert_sentiment_forward.1} parent=1 // pred_fallthru
      _
    // Predicated region
    $region46: #{bert_sentiment_forward.1} parent=1 // pred_check
      _
    $region47: #{bert_sentiment_forward.1} parent=1 // pred_check_branch
      %57 = sbr.rel (0) target = $region49
    $region48: #{bert_sentiment_forward.1} parent=1 // pred_region
      _
    $region49: #{bert_sentiment_forward.1} parent=1 // pred_fallthru
      _
    // Predicated region
    $region50: #{bert_sentiment_forward.1} parent=1 // pred_check
      _
    $region51: #{bert_sentiment_forward.1} parent=1 // pred_check_branch
      %59 = sbr.rel (0) target = $region53
    $region52: #{bert_sentiment_forward.1} parent=1 // pred_region
      _
    $region53: #{bert_sentiment_forward.1} parent=1 // pred_fallthru
      _
    // Predicated region
    $region54: #{bert_sentiment_forward.1} parent=1 // pred_check
      _
    $region55: #{bert_sentiment_forward.1} parent=1 // pred_check_branch
      %61 = sbr.rel (0) target = $region57
    $region56: #{bert_sentiment_forward.1} parent=1 // pred_region
      _
    $region57: #{bert_sentiment_forward.1} parent=1 // pred_fallthru
      _
    // Predicated region
    $region58: #{bert_sentiment_forward.1} parent=1 // pred_check
      _
    $region59: #{bert_sentiment_forward.1} parent=1 // pred_check_branch
      %63 = sbr.rel (0) target = $region61
    $region60: #{bert_sentiment_forward.1} parent=1 // pred_region
      _
    $region61: #{bert_sentiment_forward.1} parent=1 // pred_fallthru
      _
    // Predicated region
    $region62: #{bert_sentiment_forward.1} parent=1 // pred_check
      _
    $region63: #{bert_sentiment_forward.1} parent=1 // pred_check_branch
      %65 = sbr.rel (0) target = $region65
    $region64: #{bert_sentiment_forward.1} parent=1 // pred_region
      _
    $region65: #{bert_sentiment_forward.1} parent=1 // pred_fallthru
      _
    // Predicated region
    $region66: #{bert_sentiment_forward.1} parent=1 // pred_check
      _
    $region67: #{bert_sentiment_forward.1} parent=1 // pred_check_branch
      %67 = sbr.rel (0) target = $region69
    $region68: #{bert_sentiment_forward.1} parent=1 // pred_region
      _
    $region69: #{bert_sentiment_forward.1} parent=1 // pred_fallthru
      _
    // Predicated region
    $region70: #{bert_sentiment_forward.1} parent=1 // pred_check
      _
    $region71: #{bert_sentiment_forward.1} parent=1 // pred_check_branch
      %69 = sbr.rel (0) target = $region73
    $region72: #{bert_sentiment_forward.1} parent=1 // pred_region
      _
    $region73: #{bert_sentiment_forward.1} parent=1 // pred_fallthru
      _
    // Predicated region
    $region74: #{bert_sentiment_forward.1} parent=1 // pred_check
      _
    $region75: #{bert_sentiment_forward.1} parent=1 // pred_check_branch
      %71 = sbr.rel (0) target = $region77
    $region76: #{bert_sentiment_forward.1} parent=1 // pred_region
      _
    $region77: #{bert_sentiment_forward.1} parent=1 // pred_fallthru
      _
    // Predicated region
    $region78: #{bert_sentiment_forward.1} parent=1 // pred_check
      _
    $region79: #{bert_sentiment_forward.1} parent=1 // pred_check_branch
      %73 = sbr.rel (0) target = $region81
    $region80: #{bert_sentiment_forward.1} parent=1 // pred_region
      _
    $region81: #{bert_sentiment_forward.1} parent=1 // pred_fallthru
      _
    // Predicated region
    $region82: #{bert_sentiment_forward.1} parent=1 // pred_check
      _
    $region83: #{bert_sentiment_forward.1} parent=1 // pred_check_branch
      %75 = sbr.rel (0) target = $region85
    $region84: #{bert_sentiment_forward.1} parent=1 // pred_region
      _
    $region85: #{bert_sentiment_forward.1} parent=1 // pred_fallthru
      _
    // Predicated region
    $region86: #{bert_sentiment_forward.1} parent=1 // pred_check
      _
    $region87: #{bert_sentiment_forward.1} parent=1 // pred_check_branch
      %77 = sbr.rel (0) target = $region89
    $region88: #{bert_sentiment_forward.1} parent=1 // pred_region
      _
    $region89: #{bert_sentiment_forward.1} parent=1 // pred_fallthru
      _
    // Predicated region
    $region90: #{bert_sentiment_forward.1} parent=1 // pred_check
      _
    $region91: #{bert_sentiment_forward.1} parent=1 // pred_check_branch
      %79 = sbr.rel (0) target = $region93
    $region92: #{bert_sentiment_forward.1} parent=1 // pred_region
      _
    $region93: #{bert_sentiment_forward.1} parent=1 // pred_fallthru
      _
    // Predicated region
    $region94: #{bert_sentiment_forward.1} parent=1 // pred_check
      _
    $region95: #{bert_sentiment_forward.1} parent=1 // pred_check_branch
      %81 = sbr.rel (0) target = $region97
    $region96: #{bert_sentiment_forward.1} parent=1 // pred_region
      _
    $region97: #{bert_sentiment_forward.1} parent=1 // pred_fallthru
      _
    // Predicated region
    $region98: #{bert_sentiment_forward.1} parent=1 // pred_check
      _
    $region99: #{bert_sentiment_forward.1} parent=1 // pred_check_branch
      %83 = sbr.rel (0) target = $region101
    $region100: #{bert_sentiment_forward.1} parent=1 // pred_region
      _
    $region101: #{bert_sentiment_forward.1} parent=1 // pred_fallthru
      _
    // Predicated region
    $region102: #{bert_sentiment_forward.1} parent=1 // pred_check
      _
    $region103: #{bert_sentiment_forward.1} parent=1 // pred_check_branch
      %85 = sbr.rel (0) target = $region105
    $region104: #{bert_sentiment_forward.1} parent=1 // pred_region
      _
    $region105: #{bert_sentiment_forward.1} parent=1 // pred_fallthru
      _
    // Predicated region
    $region106: #{bert_sentiment_forward.1} parent=1 // pred_check
      _
    $region107: #{bert_sentiment_forward.1} parent=1 // pred_check_branch
      %87 = sbr.rel (0) target = $region109
    $region108: #{bert_sentiment_forward.1} parent=1 // pred_region
      _
    $region109: #{bert_sentiment_forward.1} parent=1 // pred_fallthru
      _
    // Predicated region
    $region110: #{bert_sentiment_forward.1} parent=1 // pred_check
      _
    $region111: #{bert_sentiment_forward.1} parent=1 // pred_check_branch
      %89 = sbr.rel (0) target = $region113
    $region112: #{bert_sentiment_forward.1} parent=1 // pred_region
      _
    $region113: #{bert_sentiment_forward.1} parent=1 // pred_fallthru
      _
    %v90 = vld [vmem:[%s2] sm:$0xff]
    %v91 = vld [vmem:[%s2 + $0x8] sm:$0xff]
    %v92 = vlaneseq
    %v93 = vand.u32 %v92, 127
    %94 = vset.pattern.permute.xlu0 0
    %95 = vperm.xlu0 %94, %v90
    %v96 = vpop.permute.xlu0 %95
    %97 = vset.pattern.permute.xlu0 0
    %98 = vperm.xlu0 %97, %v91
    %v99 = vpop.permute.xlu0 %98
    %vm100 = vcmp.eq.s32.totalorder %v96, %v93
    %vm101 = vcmp.eq.s32.totalorder %v99, %v93
    %v102 = vsel %vm100, 1.0, 0.0
    %v103 = vsel %vm101, 1.0, 0.0
    %v104 = vld [vmem:[%s6] sm:$0xff]
    %v105 = vld [vmem:[%s6 + $0x8] sm:$0xff]
    %v106 = vld [vmem:[%s6 + $0x10] sm:$0xff]
    %v107 = vld [vmem:[%s6 + $0x18] sm:$0xff]
    %v108 = vld [vmem:[%s6 + $0x20] sm:$0xff]
    %v109 = vld [vmem:[%s6 + $0x28] sm:$0xff]
    %v110 = vld [vmem:[%s6 + $0x30] sm:$0xff]
    %v111 = vld [vmem:[%s6 + $0x38] sm:$0xff]
    %v112 = vld [vmem:[%s6 + $0x40] sm:$0xff]
    %v113 = vld [vmem:[%s6 + $0x48] sm:$0xff]
    %v114 = vld [vmem:[%s6 + $0x50] sm:$0xff]
    %v115 = vld [vmem:[%s6 + $0x58] sm:$0xff]
    %v116 = vld [vmem:[%s6 + $0x60] sm:$0xf]
    %v117 = vld [vmem:[%s3] sm:$0xff]
    %v118 = vld [vmem:[%s3 + $0x8] sm:$0xff]
    %v119 = vld [vmem:[%s7] sm:$0x3]
    %v120 = vsub.f32 1.0, %v117
    %v121 = vsub.f32 1.0, %v118
    %123 = vset.pattern.permute.xlu0 0
    %124 = vperm.xlu0 %123, %v120
    %v125 = vpop.permute.xlu0 %124
    %128 = vset.pattern.permute.xlu0 0
    %129 = vperm.xlu0 %128, %v121
    %v130 = vpop.permute.xlu0 %129
    %v132 = vlaneseq
    %v133 = vshrl.u32 %v132, 7
    %v134 = vsub.s32 0, %v133
    %v135 = vrot.slane %v119, %v134
    %v136 = vmul.f32 %v125, %v135
    %v137 = vmul.f32 %v130, %v135
    %139 = vset.pattern.permute.xlu0 0
    %140 = vperm.xlu0 %139, %v117
    %v141 = vpop.permute.xlu0 %140
    %144 = vset.pattern.permute.xlu0 0
    %145 = vperm.xlu0 %144, %v118
    %v146 = vpop.permute.xlu0 %145
    %v148 = vlaneseq
    %v149 = vshrl.u32 %v148, 7
    %v150 = vsub.s32 1, %v149
    %v151 = vrot.slane %v119, %v150
    %v152 = vmul.f32 %v141, %v151
    %v153 = vmul.f32 %v146, %v151
    %v154 = vadd.f32 %v136, %v152
    %v155 = vadd.f32 %v137, %v153
    %vm156 = vcmask 818176
    %v158 = vsel %vm156, %v102, 0
    %v161 = vsel %vm156, %v103, 0
    %vm163 = vcmask 1043456
    %v165 = vsel %vm163, %v116, 0
    %167 = vmatprep.subr.mxu0 0.0
    %168 = vmatpush1.msra.mxu0 0.0
    %169 = vmatprep.subr.mxu0 0.0
    %170 = vmatpush1.msra.mxu0 0.0
    %171 = vmatprep.subr.mxu0 0.0
    %172 = vmatpush1.msra.mxu0 0.0
    %173 = vmatprep.subr.mxu0 0.0
    %174 = vmatpush1.msra.mxu0 %v165
    %175 = vmatprep.subr.mxu0 0.0
    %176 = vmatpush1.msra.mxu0 %v115
    %177 = vmatprep.subr.mxu0 0.0
    %178 = vmatpush1.msra.mxu0 %v114
    %179 = vmatprep.subr.mxu0 0.0
    %180 = vmatpush1.msra.mxu0 %v113
    %181 = vmatprep.subr.mxu0 0.0
    %182 = vmatpush1.msra.mxu0 %v112
    %183 = vmatprep.subr.mxu0 0.0
    %184 = vmatpush1.msra.mxu0 %v111
    %185 = vmatprep.subr.mxu0 0.0
    %186 = vmatpush1.msra.mxu0 %v110
    %187 = vmatprep.subr.mxu0 0.0
    %188 = vmatpush1.msra.mxu0 %v109
    %189 = vmatprep.subr.mxu0 0.0
    %190 = vmatpush1.msra.mxu0 %v108
    %191 = vmatprep.subr.mxu0 0.0
    %192 = vmatpush1.msra.mxu0 %v107
    %193 = vmatprep.subr.mxu0 0.0
    %194 = vmatpush1.msra.mxu0 %v106
    %195 = vmatprep.subr.mxu0 0.0
    %196 = vmatpush1.msra.mxu0 %v105
    %197 = vmatprep.subr.mxu0 0.0
    %198 = vmatpush1.msra.mxu0 %v104
    %199 = vmatprep.subr.mxu0 0.0
    %200 = vmatpush2.msra.mxu0 0.0
    %201 = vmatprep.subr.mxu0 0.0
    %202 = vmatpush2.msra.mxu0 0.0
    %203 = vmatprep.subr.mxu0 0.0
    %204 = vmatpush2.msra.mxu0 0.0
    %205 = vmatprep.subr.mxu0 0.0
    %206 = vmatpush2.msra.mxu0 0.0
    %207 = vmatprep.subr.mxu0 0.0
    %208 = vmatpush2.msra.mxu0 0.0
    %209 = vmatprep.subr.mxu0 0.0
    %210 = vmatpush2.msra.mxu0 0.0
    %211 = vmatprep.subr.mxu0 0.0
    %212 = vmatpush2.msra.mxu0 0.0
    %213 = vmatprep.subr.mxu0 0.0
    %214 = vmatpush2.msra.mxu0 0.0
    %215 = vmatprep.subr.mxu0 0.0
    %216 = vmatpush2.msra.mxu0 0.0
    %217 = vmatprep.subr.mxu0 0.0
    %218 = vmatpush2.msra.mxu0 0.0
    %219 = vmatprep.subr.mxu0 0.0
    %220 = vmatpush2.msra.mxu0 0.0
    %221 = vmatprep.subr.mxu0 0.0
    %222 = vmatpush2.msra.mxu0 0.0
    %223 = vmatprep.subr.mxu0 0.0
    %224 = vmatpush2.msra.mxu0 0.0
    %225 = vmatprep.subr.mxu0 0.0
    %226 = vmatpush2.msra.mxu0 0.0
    %227 = vmatprep.subr.mxu0 0.0
    %228 = vmatpush2.msra.mxu0 0.0
    %229 = vmatprep.subr.mxu0 0.0
    %230 = vmatpush2.msra.mxu0 0.0
    %231 = vmatprep.mubr.f32.mxu0 0.0
    %232 = vmatmul.mubr.f32.gmra.mxu0 %v158
    %v233 = vpop.f32.mrf.mxu0
    %v234 = vadd.f32 %v154, %v233
    %v235 = vpop.f32.mrf.mxu0
    %236 = vmatprep.mubr.f32.mxu0 0.0
    %237 = vmatmul.mubr.f32.gmra.mxu0 %v161
    %v238 = vpop.f32.mrf.mxu0
    %v239 = vadd.f32 %v155, %v238
    %v240 = vpop.f32.mrf.mxu0
    %241 = vdwg.mxu0
    %v242 = vld [vmem:[%s5] sm:$0xff]
    %v243 = vld [vmem:[%s5 + $0x8] sm:$0xff]
    %v244 = vadd.f32 %v234, %v242
    %v245 = vadd.f32 %v239, %v243
    %v246 = vld [vmem:[%s8] sm:$0x1]
    %v247 = vld [vmem:[%s9] sm:$0x1]
    %vm248 = vcmask 261120
    %v249 = vsel %vm248, %v244, 0.0
    %250 = vadd.xlane.f32.xlu0 %v249
    %v251 = vpop.xlane.xlu0 %250
    %v252 = vsel %vm248, %v245, 0.0
    %253 = vadd.xlane.f32.xlu0 %v252
    %v254 = vpop.xlane.xlu0 %253
    %v255 = vrcp.pop 32.0
    %v256 = vmul.f32 %v251, %v255
    %v257 = vmul.f32 %v254, %v255
    %v258 = vsub.f32 %v244, %v256
    %v259 = vsub.f32 %v245, %v257
    %v260 = vmul.f32 %v258, %v258
    %v261 = vmul.f32 %v259, %v259
    %v262 = vsel %vm248, %v260, 0.0
    %263 = vadd.xlane.f32.xlu0 %v262
    %v264 = vpop.xlane.xlu0 %263
    %v265 = vsel %vm248, %v261, 0.0
    %266 = vadd.xlane.f32.xlu0 %v265
    %v267 = vpop.xlane.xlu0 %266
    %v268 = vmul.f32 %v264, %v255
    %v269 = vmul.f32 %v267, %v255
    %v270 = vadd.f32 %v268, 1e-12
    %v271 = vadd.f32 %v269, 1e-12
    %v272 = vrsqrt.pop %v270
    %v273 = vrsqrt.pop %v271
    %v274 = vmul.f32 %v258, %v272
    %v275 = vmul.f32 %v259, %v273
    %v277 = vlaneseq
    %v278 = vshrl.u32 %v277, 7
    %v279 = vsub.s32 0, %v278
    %v280 = vrot.slane %v246, %v279
    %v282 = vmul.f32 %v274, %v280
    %v283 = vmul.f32 %v275, %v280
    %v285 = vlaneseq
    %v286 = vshrl.u32 %v285, 7
    %v287 = vsub.s32 0, %v286
    %v288 = vrot.slane %v247, %v287
    %v290 = vadd.f32 %v282, %v288
    %v291 = vadd.f32 %v283, %v288
    %v292 = vld [vmem:[%s0] sm:$0xff]
    %v293 = vld [vmem:[%s0 + $0x8] sm:$0xff]
    %v294 = vld [vmem:[%s1] sm:$0x1]
    %295 = vset.pattern.permute.xlu0 0
    %296 = vperm.xlu0 %295, %v292
    %v297 = vpop.permute.xlu0 %296
    %298 = vset.pattern.permute.xlu0 0
    %299 = vperm.xlu0 %298, %v293
    %v300 = vpop.permute.xlu0 %299
    %v301 = vlaneseq
    %v302 = vshrl.u32 %v301, 7
    %v303 = vsub.s32 0, %v302
    %v304 = vrot.slane %v294, %v303
    %vm305 = vcmp.eq.s32.totalorder %v297, %v304
    %vm306 = vcmp.eq.s32.totalorder %v300, %v304
    %v307 = vsel %vm305, 0.0, -1e+09
    %v308 = vsel %vm306, 0.0, -1e+09
    %v309 = vld [vmem:[%s10] sm:$0xff]
    %v310 = vld [vmem:[%s10 + $0x8] sm:$0xff]
    %v311 = vld [vmem:[%s10 + $0x10] sm:$0xff]
    %v312 = vld [vmem:[%s10 + $0x18] sm:$0xff]
    %v313 = vld [vmem:[%s11] sm:$0x1]
    %v315 = vlaneseq
    %v316 = vshrl.u32 %v315, 7
    %v317 = vsub.s32 0, %v316
    %v318 = vrot.slane %v313, %v317
    %v321 = vsel %vm248, %v290, 0
    %v324 = vsel %vm248, %v291, 0
    %326 = vmatprep.subr.mxu0 0.0
    %327 = vmatpush1.msra.mxu0 0.0
    %328 = vmatprep.subr.mxu0 0.0
    %329 = vmatpush1.msra.mxu0 0.0
    %330 = vmatprep.subr.mxu0 0.0
    %331 = vmatpush1.msra.mxu0 0.0
    %332 = vmatprep.subr.mxu0 0.0
    %333 = vmatpush1.msra.mxu0 0.0
    %334 = vmatprep.subr.mxu0 0.0
    %335 = vmatpush1.msra.mxu0 0.0
    %336 = vmatprep.subr.mxu0 0.0
    %337 = vmatpush1.msra.mxu0 0.0
    %338 = vmatprep.subr.mxu0 0.0
    %339 = vmatpush1.msra.mxu0 0.0
    %340 = vmatprep.subr.mxu0 0.0
    %341 = vmatpush1.msra.mxu0 0.0
    %342 = vmatprep.subr.mxu0 0.0
    %343 = vmatpush1.msra.mxu0 0.0
    %344 = vmatprep.subr.mxu0 0.0
    %345 = vmatpush1.msra.mxu0 0.0
    %346 = vmatprep.subr.mxu0 0.0
    %347 = vmatpush1.msra.mxu0 0.0
    %348 = vmatprep.subr.mxu0 0.0
    %349 = vmatpush1.msra.mxu0 0.0
    %350 = vmatprep.subr.mxu0 0.0
    %351 = vmatpush1.msra.mxu0 %v312
    %352 = vmatprep.subr.mxu0 0.0
    %353 = vmatpush1.msra.mxu0 %v311
    %354 = vmatprep.subr.mxu0 0.0
    %355 = vmatpush1.msra.mxu0 %v310
    %356 = vmatprep.subr.mxu0 0.0
    %357 = vmatpush1.msra.mxu0 %v309
    %358 = vmatprep.subr.mxu0 0.0
    %359 = vmatpush2.msra.mxu0 0.0
    %360 = vmatprep.subr.mxu0 0.0
    %361 = vmatpush2.msra.mxu0 0.0
    %362 = vmatprep.subr.mxu0 0.0
    %363 = vmatpush2.msra.mxu0 0.0
    %364 = vmatprep.subr.mxu0 0.0
    %365 = vmatpush2.msra.mxu0 0.0
    %366 = vmatprep.subr.mxu0 0.0
    %367 = vmatpush2.msra.mxu0 0.0
    %368 = vmatprep.subr.mxu0 0.0
    %369 = vmatpush2.msra.mxu0 0.0
    %370 = vmatprep.subr.mxu0 0.0
    %371 = vmatpush2.msra.mxu0 0.0
    %372 = vmatprep.subr.mxu0 0.0
    %373 = vmatpush2.msra.mxu0 0.0
    %374 = vmatprep.subr.mxu0 0.0
    %375 = vmatpush2.msra.mxu0 0.0
    %376 = vmatprep.subr.mxu0 0.0
    %377 = vmatpush2.msra.mxu0 0.0
    %378 = vmatprep.subr.mxu0 0.0
    %379 = vmatpush2.msra.mxu0 0.0
    %380 = vmatprep.subr.mxu0 0.0
    %381 = vmatpush2.msra.mxu0 0.0
    %382 = vmatprep.subr.mxu0 0.0
    %383 = vmatpush2.msra.mxu0 0.0
    %384 = vmatprep.subr.mxu0 0.0
    %385 = vmatpush2.msra.mxu0 0.0
    %386 = vmatprep.subr.mxu0 0.0
    %387 = vmatpush2.msra.mxu0 0.0
    %388 = vmatprep.subr.mxu0 0.0
    %389 = vmatpush2.msra.mxu0 0.0
    %390 = vmatprep.mubr.f32.mxu0 0.0
    %391 = vmatmul.mubr.f32.gmra.mxu0 %v321
    %v392 = vpop.f32.mrf.mxu0
    %v393 = vadd.f32 %v318, %v392
    %v394 = vpop.f32.mrf.mxu0
    %395 = vmatprep.mubr.f32.mxu0 0.0
    %396 = vmatmul.mubr.f32.gmra.mxu0 %v324
    %v397 = vpop.f32.mrf.mxu0
    %v398 = vadd.f32 %v318, %v397
    %v399 = vpop.f32.mrf.mxu0
    %400 = vdwg.mxu0
    %403 = vrot.lane.b32.xlu0 %v393, 96
    %v404 = vpop.permute.xlu0 %403
    %405 = vrot.lane.b32.xlu0 %v398, 96
    %v406 = vpop.permute.xlu0 %405
    %vm407 = vcmask 130048
    %v408 = vsel %vm407, %v393, 0
    %v410 = vsel %vm407, %v398, 0
    %v412 = vsel %vm407, %v404, 0
    %v414 = vsel %vm407, %v406, 0
    %416 = vmatprep.subr.mxu0 0.0
    %417 = vmatpush1.xpose.msra.mxu0 0.0
    %418 = vmatprep.subr.mxu0 0.0
    %419 = vmatpush1.xpose.msra.mxu0 0.0
    %420 = vmatprep.subr.mxu0 0.0
    %421 = vmatpush1.xpose.msra.mxu0 0.0
    %422 = vmatprep.subr.mxu0 0.0
    %423 = vmatpush1.xpose.msra.mxu0 0.0
    %424 = vmatprep.subr.mxu0 0.0
    %425 = vmatpush1.xpose.msra.mxu0 0.0
    %426 = vmatprep.subr.mxu0 0.0
    %427 = vmatpush1.xpose.msra.mxu0 0.0
    %428 = vmatprep.subr.mxu0 0.0
    %429 = vmatpush1.xpose.msra.mxu0 0.0
    %430 = vmatprep.subr.mxu0 0.0
    %431 = vmatpush1.xpose.msra.mxu0 0.0
    %432 = vmatprep.subr.mxu0 0.0
    %433 = vmatpush1.xpose.msra.mxu0 0.0
    %434 = vmatprep.subr.mxu0 0.0
    %435 = vmatpush1.xpose.msra.mxu0 0.0
    %436 = vmatprep.subr.mxu0 0.0
    %437 = vmatpush1.xpose.msra.mxu0 0.0
    %438 = vmatprep.subr.mxu0 0.0
    %439 = vmatpush1.xpose.msra.mxu0 0.0
    %440 = vmatprep.subr.mxu0 0.0
    %441 = vmatpush1.xpose.msra.mxu0 0.0
    %442 = vmatprep.subr.mxu0 0.0
    %443 = vmatpush1.xpose.msra.mxu0 0.0
    %444 = vmatprep.subr.mxu0 0.0
    %445 = vmatpush1.xpose.msra.mxu0 %v414
    %446 = vmatprep.subr.mxu0 0.0
    %447 = vmatpush1.xpose.msra.mxu0 %v412
    %448 = vmatprep.subr.mxu0 0.0
    %449 = vmatpush2.xpose.msra.mxu0 0.0
    %450 = vmatprep.subr.mxu0 0.0
    %451 = vmatpush2.xpose.msra.mxu0 0.0
    %452 = vmatprep.subr.mxu0 0.0
    %453 = vmatpush2.xpose.msra.mxu0 0.0
    %454 = vmatprep.subr.mxu0 0.0
    %455 = vmatpush2.xpose.msra.mxu0 0.0
    %456 = vmatprep.subr.mxu0 0.0
    %457 = vmatpush2.xpose.msra.mxu0 0.0
    %458 = vmatprep.subr.mxu0 0.0
    %459 = vmatpush2.xpose.msra.mxu0 0.0
    %460 = vmatprep.subr.mxu0 0.0
    %461 = vmatpush2.xpose.msra.mxu0 0.0
    %462 = vmatprep.subr.mxu0 0.0
    %463 = vmatpush2.xpose.msra.mxu0 0.0
    %464 = vmatprep.subr.mxu0 0.0
    %465 = vmatpush2.xpose.msra.mxu0 0.0
    %466 = vmatprep.subr.mxu0 0.0
    %467 = vmatpush2.xpose.msra.mxu0 0.0
    %468 = vmatprep.subr.mxu0 0.0
    %469 = vmatpush2.xpose.msra.mxu0 0.0
    %470 = vmatprep.subr.mxu0 0.0
    %471 = vmatpush2.xpose.msra.mxu0 0.0
    %472 = vmatprep.subr.mxu0 0.0
    %473 = vmatpush2.xpose.msra.mxu0 0.0
    %474 = vmatprep.subr.mxu0 0.0
    %475 = vmatpush2.xpose.msra.mxu0 0.0
    %476 = vmatprep.subr.mxu0 0.0
    %477 = vmatpush2.xpose.msra.mxu0 0.0
    %478 = vmatprep.subr.mxu0 0.0
    %479 = vmatpush2.xpose.msra.mxu0 0.0
    %480 = vmatprep.mubr.f32.mxu0 0.0
    %481 = vmatmul.mubr.f32.gmra.mxu0 %v408
    %v482 = vpop.f32.mrf.mxu0
    %v483 = vadd.f32 0.0, %v482
    %v484 = vpop.f32.mrf.mxu0
    %485 = vmatprep.mubr.f32.mxu0 0.0
    %486 = vmatmul.mubr.f32.gmra.mxu0 %v410
    %v487 = vpop.f32.mrf.mxu0
    %v488 = vadd.f32 0.0, %v487
    %v489 = vpop.f32.mrf.mxu0
    %490 = vdwg.mxu0
    %v491 = vmul.f32 %v483, 0.25
    %v492 = vmul.f32 %v488, 0.25
    %v493 = vadd.f32 %v491, %v307
    %v494 = vadd.f32 %v492, %v308
    %v495 = vsel %vm407, %v493, -inf
    %496 = vmax.xlane.f32.xlu0 %v495
    %v497 = vpop.xlane.xlu0 %496
    %v498 = vsel %vm407, %v494, -inf
    %499 = vmax.xlane.f32.xlu0 %v498
    %v500 = vpop.xlane.xlu0 %499
    %v501 = vsub.f32 %v493, %v497
    %v502 = vsub.f32 %v494, %v500
    %v503 = vmul.f32 %v501, 1.442695
    %v504 = vpow.pop %v503
    %v505 = vmul.f32 %v502, 1.442695
    %v506 = vpow.pop %v505
    %v507 = vsel %vm407, %v504, 0.0
    %508 = vadd.xlane.f32.xlu0 %v507
    %v509 = vpop.xlane.xlu0 %508
    %v510 = vsel %vm407, %v506, 0.0
    %511 = vadd.xlane.f32.xlu0 %v510
    %v512 = vpop.xlane.xlu0 %511
    %v513 = vrcp.pop %v509
    %v514 = vmul.f32 %v504, %v513
    %v515 = vrcp.pop %v512
    %v516 = vmul.f32 %v506, %v515
    %517 = vrot.lane.b32.xlu0 %v393, 64
    %v518 = vpop.permute.xlu0 %517
    %519 = vrot.lane.b32.xlu0 %v398, 64
    %v520 = vpop.permute.xlu0 %519
    %v524 = vsel %vm407, %v514, 0
    %v527 = vsel %vm407, %v516, 0
    %529 = vmatprep.subr.mxu0 0.0
    %530 = vmatpush1.msra.mxu0 0.0
    %531 = vmatprep.subr.mxu0 0.0
    %532 = vmatpush1.msra.mxu0 0.0
    %533 = vmatprep.subr.mxu0 0.0
    %534 = vmatpush1.msra.mxu0 0.0
    %535 = vmatprep.subr.mxu0 0.0
    %536 = vmatpush1.msra.mxu0 0.0
    %537 = vmatprep.subr.mxu0 0.0
    %538 = vmatpush1.msra.mxu0 0.0
    %539 = vmatprep.subr.mxu0 0.0
    %540 = vmatpush1.msra.mxu0 0.0
    %541 = vmatprep.subr.mxu0 0.0
    %542 = vmatpush1.msra.mxu0 0.0
    %543 = vmatprep.subr.mxu0 0.0
    %544 = vmatpush1.msra.mxu0 0.0
    %545 = vmatprep.subr.mxu0 0.0
    %546 = vmatpush1.msra.mxu0 0.0
    %547 = vmatprep.subr.mxu0 0.0
    %548 = vmatpush1.msra.mxu0 0.0
    %549 = vmatprep.subr.mxu0 0.0
    %550 = vmatpush1.msra.mxu0 0.0
    %551 = vmatprep.subr.mxu0 0.0
    %552 = vmatpush1.msra.mxu0 0.0
    %553 = vmatprep.subr.mxu0 0.0
    %554 = vmatpush1.msra.mxu0 0.0
    %555 = vmatprep.subr.mxu0 0.0
    %556 = vmatpush1.msra.mxu0 0.0
    %557 = vmatprep.subr.mxu0 0.0
    %558 = vmatpush1.msra.mxu0 %v520
    %559 = vmatprep.subr.mxu0 0.0
    %560 = vmatpush1.msra.mxu0 %v518
    %561 = vmatprep.subr.mxu0 0.0
    %562 = vmatpush2.msra.mxu0 0.0
    %563 = vmatprep.subr.mxu0 0.0
    %564 = vmatpush2.msra.mxu0 0.0
    %565 = vmatprep.subr.mxu0 0.0
    %566 = vmatpush2.msra.mxu0 0.0
    %567 = vmatprep.subr.mxu0 0.0
    %568 = vmatpush2.msra.mxu0 0.0
    %569 = vmatprep.subr.mxu0 0.0
    %570 = vmatpush2.msra.mxu0 0.0
    %571 = vmatprep.subr.mxu0 0.0
    %572 = vmatpush2.msra.mxu0 0.0
    %573 = vmatprep.subr.mxu0 0.0
    %574 = vmatpush2.msra.mxu0 0.0
    %575 = vmatprep.subr.mxu0 0.0
    %576 = vmatpush2.msra.mxu0 0.0
    %577 = vmatprep.subr.mxu0 0.0
    %578 = vmatpush2.msra.mxu0 0.0
    %579 = vmatprep.subr.mxu0 0.0
    %580 = vmatpush2.msra.mxu0 0.0
    %581 = vmatprep.subr.mxu0 0.0
    %582 = vmatpush2.msra.mxu0 0.0
    %583 = vmatprep.subr.mxu0 0.0
    %584 = vmatpush2.msra.mxu0 0.0
    %585 = vmatprep.subr.mxu0 0.0
    %586 = vmatpush2.msra.mxu0 0.0
    %587 = vmatprep.subr.mxu0 0.0
    %588 = vmatpush2.msra.mxu0 0.0
    %589 = vmatprep.subr.mxu0 0.0
    %590 = vmatpush2.msra.mxu0 0.0
    %591 = vmatprep.subr.mxu0 0.0
    %592 = vmatpush2.msra.mxu0 0.0
    %593 = vmatprep.mubr.f32.mxu0 0.0
    %594 = vmatmul.mubr.f32.gmra.mxu0 %v524
    %v595 = vpop.f32.mrf.mxu0
    %v596 = vadd.f32 0.0, %v595
    %v597 = vpop.f32.mrf.mxu0
    %598 = vmatprep.mubr.f32.mxu0 0.0
    %599 = vmatmul.mubr.f32.gmra.mxu0 %v527
    %v600 = vpop.f32.mrf.mxu0
    %v601 = vadd.f32 0.0, %v600
    %v602 = vpop.f32.mrf.mxu0
    %603 = vdwg.mxu0
    %604 = vrot.lane.b32.xlu0 %v393, 112
    %v605 = vpop.permute.xlu0 %604
    %606 = vrot.lane.b32.xlu0 %v398, 112
    %v607 = vpop.permute.xlu0 %606
    %608 = vrot.lane.b32.xlu0 %v393, 80
    %v609 = vpop.permute.xlu0 %608
    %610 = vrot.lane.b32.xlu0 %v398, 80
    %v611 = vpop.permute.xlu0 %610
    %v612 = vsel %vm407, %v605, 0
    %v614 = vsel %vm407, %v607, 0
    %v616 = vsel %vm407, %v609, 0
    %v618 = vsel %vm407, %v611, 0
    %620 = vmatprep.subr.mxu0 0.0
    %621 = vmatpush1.xpose.msra.mxu0 0.0
    %622 = vmatprep.subr.mxu0 0.0
    %623 = vmatpush1.xpose.msra.mxu0 0.0
    %624 = vmatprep.subr.mxu0 0.0
    %625 = vmatpush1.xpose.msra.mxu0 0.0
    %626 = vmatprep.subr.mxu0 0.0
    %627 = vmatpush1.xpose.msra.mxu0 0.0
    %628 = vmatprep.subr.mxu0 0.0
    %629 = vmatpush1.xpose.msra.mxu0 0.0
    %630 = vmatprep.subr.mxu0 0.0
    %631 = vmatpush1.xpose.msra.mxu0 0.0
    %632 = vmatprep.subr.mxu0 0.0
    %633 = vmatpush1.xpose.msra.mxu0 0.0
    %634 = vmatprep.subr.mxu0 0.0
    %635 = vmatpush1.xpose.msra.mxu0 0.0
    %636 = vmatprep.subr.mxu0 0.0
    %637 = vmatpush1.xpose.msra.mxu0 0.0
    %638 = vmatprep.subr.mxu0 0.0
    %639 = vmatpush1.xpose.msra.mxu0 0.0
    %640 = vmatprep.subr.mxu0 0.0
    %641 = vmatpush1.xpose.msra.mxu0 0.0
    %642 = vmatprep.subr.mxu0 0.0
    %643 = vmatpush1.xpose.msra.mxu0 0.0
    %644 = vmatprep.subr.mxu0 0.0
    %645 = vmatpush1.xpose.msra.mxu0 0.0
    %646 = vmatprep.subr.mxu0 0.0
    %647 = vmatpush1.xpose.msra.mxu0 0.0
    %648 = vmatprep.subr.mxu0 0.0
    %649 = vmatpush1.xpose.msra.mxu0 %v618
    %650 = vmatprep.subr.mxu0 0.0
    %651 = vmatpush1.xpose.msra.mxu0 %v616
    %652 = vmatprep.subr.mxu0 0.0
    %653 = vmatpush2.xpose.msra.mxu0 0.0
    %654 = vmatprep.subr.mxu0 0.0
    %655 = vmatpush2.xpose.msra.mxu0 0.0
    %656 = vmatprep.subr.mxu0 0.0
    %657 = vmatpush2.xpose.msra.mxu0 0.0
    %658 = vmatprep.subr.mxu0 0.0
    %659 = vmatpush2.xpose.msra.mxu0 0.0
    %660 = vmatprep.subr.mxu0 0.0
    %661 = vmatpush2.xpose.msra.mxu0 0.0
    %662 = vmatprep.subr.mxu0 0.0
    %663 = vmatpush2.xpose.msra.mxu0 0.0
    %664 = vmatprep.subr.mxu0 0.0
    %665 = vmatpush2.xpose.msra.mxu0 0.0
    %666 = vmatprep.subr.mxu0 0.0
    %667 = vmatpush2.xpose.msra.mxu0 0.0
    %668 = vmatprep.subr.mxu0 0.0
    %669 = vmatpush2.xpose.msra.mxu0 0.0
    %670 = vmatprep.subr.mxu0 0.0
    %671 = vmatpush2.xpose.msra.mxu0 0.0
    %672 = vmatprep.subr.mxu0 0.0
    %673 = vmatpush2.xpose.msra.mxu0 0.0
    %674 = vmatprep.subr.mxu0 0.0
    %675 = vmatpush2.xpose.msra.mxu0 0.0
    %676 = vmatprep.subr.mxu0 0.0
    %677 = vmatpush2.xpose.msra.mxu0 0.0
    %678 = vmatprep.subr.mxu0 0.0
    %679 = vmatpush2.xpose.msra.mxu0 0.0
    %680 = vmatprep.subr.mxu0 0.0
    %681 = vmatpush2.xpose.msra.mxu0 0.0
    %682 = vmatprep.subr.mxu0 0.0
    %683 = vmatpush2.xpose.msra.mxu0 0.0
    %684 = vmatprep.mubr.f32.mxu0 0.0
    %685 = vmatmul.mubr.f32.gmra.mxu0 %v612
    %v686 = vpop.f32.mrf.mxu0
    %v687 = vadd.f32 0.0, %v686
    %v688 = vpop.f32.mrf.mxu0
    %689 = vmatprep.mubr.f32.mxu0 0.0
    %690 = vmatmul.mubr.f32.gmra.mxu0 %v614
    %v691 = vpop.f32.mrf.mxu0
    %v692 = vadd.f32 0.0, %v691
    %v693 = vpop.f32.mrf.mxu0
    %694 = vdwg.mxu0
    %v695 = vmul.f32 %v687, 0.25
    %v696 = vmul.f32 %v692, 0.25
    %v697 = vadd.f32 %v695, %v307
    %v698 = vadd.f32 %v696, %v308
    %v699 = vsel %vm407, %v697, -inf
    %700 = vmax.xlane.f32.xlu0 %v699
    %v701 = vpop.xlane.xlu0 %700
    %v702 = vsel %vm407, %v698, -inf
    %703 = vmax.xlane.f32.xlu0 %v702
    %v704 = vpop.xlane.xlu0 %703
    %v705 = vsub.f32 %v697, %v701
    %v706 = vsub.f32 %v698, %v704
    %v707 = vmul.f32 %v705, 1.442695
    %v708 = vpow.pop %v707
    %v709 = vmul.f32 %v706, 1.442695
    %v710 = vpow.pop %v709
    %v711 = vsel %vm407, %v708, 0.0
    %712 = vadd.xlane.f32.xlu0 %v711
    %v713 = vpop.xlane.xlu0 %712
    %v714 = vsel %vm407, %v710, 0.0
    %715 = vadd.xlane.f32.xlu0 %v714
    %v716 = vpop.xlane.xlu0 %715
    %v717 = vrcp.pop %v713
    %v718 = vmul.f32 %v708, %v717
    %v719 = vrcp.pop %v716
    %v720 = vmul.f32 %v710, %v719
    %721 = vrot.lane.b32.xlu0 %v393, 48
    %v722 = vpop.permute.xlu0 %721
    %723 = vrot.lane.b32.xlu0 %v398, 48
    %v724 = vpop.permute.xlu0 %723
    %v728 = vsel %vm407, %v718, 0
    %v731 = vsel %vm407, %v720, 0
    %733 = vmatprep.subr.mxu0 0.0
    %734 = vmatpush1.msra.mxu0 0.0
    %735 = vmatprep.subr.mxu0 0.0
    %736 = vmatpush1.msra.mxu0 0.0
    %737 = vmatprep.subr.mxu0 0.0
    %738 = vmatpush1.msra.mxu0 0.0
    %739 = vmatprep.subr.mxu0 0.0
    %740 = vmatpush1.msra.mxu0 0.0
    %741 = vmatprep.subr.mxu0 0.0
    %742 = vmatpush1.msra.mxu0 0.0
    %743 = vmatprep.subr.mxu0 0.0
    %744 = vmatpush1.msra.mxu0 0.0
    %745 = vmatprep.subr.mxu0 0.0
    %746 = vmatpush1.msra.mxu0 0.0
    %747 = vmatprep.subr.mxu0 0.0
    %748 = vmatpush1.msra.mxu0 0.0
    %749 = vmatprep.subr.mxu0 0.0
    %750 = vmatpush1.msra.mxu0 0.0
    %751 = vmatprep.subr.mxu0 0.0
    %752 = vmatpush1.msra.mxu0 0.0
    %753 = vmatprep.subr.mxu0 0.0
    %754 = vmatpush1.msra.mxu0 0.0
    %755 = vmatprep.subr.mxu0 0.0
    %756 = vmatpush1.msra.mxu0 0.0
    %757 = vmatprep.subr.mxu0 0.0
    %758 = vmatpush1.msra.mxu0 0.0
    %759 = vmatprep.subr.mxu0 0.0
    %760 = vmatpush1.msra.mxu0 0.0
    %761 = vmatprep.subr.mxu0 0.0
    %762 = vmatpush1.msra.mxu0 %v724
    %763 = vmatprep.subr.mxu0 0.0
    %764 = vmatpush1.msra.mxu0 %v722
    %765 = vmatprep.subr.mxu0 0.0
    %766 = vmatpush2.msra.mxu0 0.0
    %767 = vmatprep.subr.mxu0 0.0
    %768 = vmatpush2.msra.mxu0 0.0
    %769 = vmatprep.subr.mxu0 0.0
    %770 = vmatpush2.msra.mxu0 0.0
    %771 = vmatprep.subr.mxu0 0.0
    %772 = vmatpush2.msra.mxu0 0.0
    %773 = vmatprep.subr.mxu0 0.0
    %774 = vmatpush2.msra.mxu0 0.0
    %775 = vmatprep.subr.mxu0 0.0
    %776 = vmatpush2.msra.mxu0 0.0
    %777 = vmatprep.subr.mxu0 0.0
    %778 = vmatpush2.msra.mxu0 0.0
    %779 = vmatprep.subr.mxu0 0.0
    %780 = vmatpush2.msra.mxu0 0.0
    %781 = vmatprep.subr.mxu0 0.0
    %782 = vmatpush2.msra.mxu0 0.0
    %783 = vmatprep.subr.mxu0 0.0
    %784 = vmatpush2.msra.mxu0 0.0
    %785 = vmatprep.subr.mxu0 0.0
    %786 = vmatpush2.msra.mxu0 0.0
    %787 = vmatprep.subr.mxu0 0.0
    %788 = vmatpush2.msra.mxu0 0.0
    %789 = vmatprep.subr.mxu0 0.0
    %790 = vmatpush2.msra.mxu0 0.0
    %791 = vmatprep.subr.mxu0 0.0
    %792 = vmatpush2.msra.mxu0 0.0
    %793 = vmatprep.subr.mxu0 0.0
    %794 = vmatpush2.msra.mxu0 0.0
    %795 = vmatprep.subr.mxu0 0.0
    %796 = vmatpush2.msra.mxu0 0.0
    %797 = vmatprep.mubr.f32.mxu0 0.0
    %798 = vmatmul.mubr.f32.gmra.mxu0 %v728
    %v799 = vpop.f32.mrf.mxu0
    %v800 = vadd.f32 0.0, %v799
    %v801 = vpop.f32.mrf.mxu0
    %802 = vmatprep.mubr.f32.mxu0 0.0
    %803 = vmatmul.mubr.f32.gmra.mxu0 %v731
    %v804 = vpop.f32.mrf.mxu0
    %v805 = vadd.f32 0.0, %v804
    %v806 = vpop.f32.mrf.mxu0
    %807 = vdwg.mxu0
    %810 = vrot.lane.b32.xlu0 %v800, 16
    %v811 = vpop.permute.xlu0 %810
    %812 = vrot.lane.b32.xlu0 %v805, 16
    %v813 = vpop.permute.xlu0 %812
    %v816 = vsel %vm407, %v596, %v811
    %v817 = vsel %vm407, %v601, %v813
    %v818 = vld [vmem:[%s12] sm:$0xff]
    %v819 = vld [vmem:[%s12 + $0x8] sm:$0xff]
    %v820 = vld [vmem:[%s12 + $0x10] sm:$0xff]
    %v821 = vld [vmem:[%s12 + $0x18] sm:$0xff]
    %v822 = vld [vmem:[%s13] sm:$0x1]
    %v824 = vlaneseq
    %v825 = vshrl.u32 %v824, 7
    %v826 = vsub.s32 0, %v825
    %v827 = vrot.slane %v822, %v826
    %v830 = vsel %vm248, %v816, 0
    %v833 = vsel %vm248, %v817, 0
    %835 = vmatprep.subr.mxu0 0.0
    %836 = vmatpush1.msra.mxu0 0.0
    %837 = vmatprep.subr.mxu0 0.0
    %838 = vmatpush1.msra.mxu0 0.0
    %839 = vmatprep.subr.mxu0 0.0
    %840 = vmatpush1.msra.mxu0 0.0
    %841 = vmatprep.subr.mxu0 0.0
    %842 = vmatpush1.msra.mxu0 0.0
    %843 = vmatprep.subr.mxu0 0.0
    %844 = vmatpush1.msra.mxu0 0.0
    %845 = vmatprep.subr.mxu0 0.0
    %846 = vmatpush1.msra.mxu0 0.0
    %847 = vmatprep.subr.mxu0 0.0
    %848 = vmatpush1.msra.mxu0 0.0
    %849 = vmatprep.subr.mxu0 0.0
    %850 = vmatpush1.msra.mxu0 0.0
    %851 = vmatprep.subr.mxu0 0.0
    %852 = vmatpush1.msra.mxu0 0.0
    %853 = vmatprep.subr.mxu0 0.0
    %854 = vmatpush1.msra.mxu0 0.0
    %855 = vmatprep.subr.mxu0 0.0
    %856 = vmatpush1.msra.mxu0 0.0
    %857 = vmatprep.subr.mxu0 0.0
    %858 = vmatpush1.msra.mxu0 0.0
    %859 = vmatprep.subr.mxu0 0.0
    %860 = vmatpush1.msra.mxu0 %v821
    %861 = vmatprep.subr.mxu0 0.0
    %862 = vmatpush1.msra.mxu0 %v820
    %863 = vmatprep.subr.mxu0 0.0
    %864 = vmatpush1.msra.mxu0 %v819
    %865 = vmatprep.subr.mxu0 0.0
    %866 = vmatpush1.msra.mxu0 %v818
    %867 = vmatprep.subr.mxu0 0.0
    %868 = vmatpush2.msra.mxu0 0.0
    %869 = vmatprep.subr.mxu0 0.0
    %870 = vmatpush2.msra.mxu0 0.0
    %871 = vmatprep.subr.mxu0 0.0
    %872 = vmatpush2.msra.mxu0 0.0
    %873 = vmatprep.subr.mxu0 0.0
    %874 = vmatpush2.msra.mxu0 0.0
    %875 = vmatprep.subr.mxu0 0.0
    %876 = vmatpush2.msra.mxu0 0.0
    %877 = vmatprep.subr.mxu0 0.0
    %878 = vmatpush2.msra.mxu0 0.0
    %879 = vmatprep.subr.mxu0 0.0
    %880 = vmatpush2.msra.mxu0 0.0
    %881 = vmatprep.subr.mxu0 0.0
    %882 = vmatpush2.msra.mxu0 0.0
    %883 = vmatprep.subr.mxu0 0.0
    %884 = vmatpush2.msra.mxu0 0.0
    %885 = vmatprep.subr.mxu0 0.0
    %886 = vmatpush2.msra.mxu0 0.0
    %887 = vmatprep.subr.mxu0 0.0
    %888 = vmatpush2.msra.mxu0 0.0
    %889 = vmatprep.subr.mxu0 0.0
    %890 = vmatpush2.msra.mxu0 0.0
    %891 = vmatprep.subr.mxu0 0.0
    %892 = vmatpush2.msra.mxu0 0.0
    %893 = vmatprep.subr.mxu0 0.0
    %894 = vmatpush2.msra.mxu0 0.0
    %895 = vmatprep.subr.mxu0 0.0
    %896 = vmatpush2.msra.mxu0 0.0
    %897 = vmatprep.subr.mxu0 0.0
    %898 = vmatpush2.msra.mxu0 0.0
    %899 = vmatprep.mubr.f32.mxu0 0.0
    %900 = vmatmul.mubr.f32.gmra.mxu0 %v830
    %v901 = vpop.f32.mrf.mxu0
    %v902 = vadd.f32 %v827, %v901
    %v903 = vpop.f32.mrf.mxu0
    %904 = vmatprep.mubr.f32.mxu0 0.0
    %905 = vmatmul.mubr.f32.gmra.mxu0 %v833
    %v906 = vpop.f32.mrf.mxu0
    %v907 = vadd.f32 %v827, %v906
    %v908 = vpop.f32.mrf.mxu0
    %909 = vdwg.mxu0
    %v910 = vadd.f32 %v290, %v902
    %v911 = vadd.f32 %v291, %v907
    %v912 = vld [vmem:[%s14] sm:$0x1]
    %v913 = vld [vmem:[%s15] sm:$0x1]
    %v914 = vsel %vm248, %v910, 0.0
    %915 = vadd.xlane.f32.xlu0 %v914
    %v916 = vpop.xlane.xlu0 %915
    %v917 = vsel %vm248, %v911, 0.0
    %918 = vadd.xlane.f32.xlu0 %v917
    %v919 = vpop.xlane.xlu0 %918
    %v920 = vmul.f32 %v916, %v255
    %v921 = vmul.f32 %v919, %v255
    %v922 = vsub.f32 %v910, %v920
    %v923 = vsub.f32 %v911, %v921
    %v924 = vmul.f32 %v922, %v922
    %v925 = vmul.f32 %v923, %v923
    %v926 = vsel %vm248, %v924, 0.0
    %927 = vadd.xlane.f32.xlu0 %v926
    %v928 = vpop.xlane.xlu0 %927
    %v929 = vsel %vm248, %v925, 0.0
    %930 = vadd.xlane.f32.xlu0 %v929
    %v931 = vpop.xlane.xlu0 %930
    %v932 = vmul.f32 %v928, %v255
    %v933 = vmul.f32 %v931, %v255
    %v934 = vadd.f32 %v932, 1e-12
    %v935 = vadd.f32 %v933, 1e-12
    %v936 = vrsqrt.pop %v934
    %v937 = vrsqrt.pop %v935
    %v938 = vmul.f32 %v922, %v936
    %v939 = vmul.f32 %v923, %v937
    %v941 = vlaneseq
    %v942 = vshrl.u32 %v941, 7
    %v943 = vsub.s32 0, %v942
    %v944 = vrot.slane %v912, %v943
    %v946 = vmul.f32 %v938, %v944
    %v947 = vmul.f32 %v939, %v944
    %v949 = vlaneseq
    %v950 = vshrl.u32 %v949, 7
    %v951 = vsub.s32 0, %v950
    %v952 = vrot.slane %v913, %v951
    %v954 = vadd.f32 %v946, %v952
    %v955 = vadd.f32 %v947, %v952
    %v956 = vld [vmem:[%s16] sm:$0xff]
    %v957 = vld [vmem:[%s16 + $0x8] sm:$0xff]
    %v958 = vld [vmem:[%s16 + $0x10] sm:$0xff]
    %v959 = vld [vmem:[%s16 + $0x18] sm:$0xff]
    %v960 = vld [vmem:[%s17] sm:$0x1]
    %v962 = vlaneseq
    %v963 = vshrl.u32 %v962, 7
    %v964 = vsub.s32 0, %v963
    %v965 = vrot.slane %v960, %v964
    %v968 = vsel %vm248, %v954, 0
    %v971 = vsel %vm248, %v955, 0
    %973 = vmatprep.subr.mxu0 0.0
    %974 = vmatpush1.msra.mxu0 0.0
    %975 = vmatprep.subr.mxu0 0.0
    %976 = vmatpush1.msra.mxu0 0.0
    %977 = vmatprep.subr.mxu0 0.0
    %978 = vmatpush1.msra.mxu0 0.0
    %979 = vmatprep.subr.mxu0 0.0
    %980 = vmatpush1.msra.mxu0 0.0
    %981 = vmatprep.subr.mxu0 0.0
    %982 = vmatpush1.msra.mxu0 0.0
    %983 = vmatprep.subr.mxu0 0.0
    %984 = vmatpush1.msra.mxu0 0.0
    %985 = vmatprep.subr.mxu0 0.0
    %986 = vmatpush1.msra.mxu0 0.0
    %987 = vmatprep.subr.mxu0 0.0
    %988 = vmatpush1.msra.mxu0 0.0
    %989 = vmatprep.subr.mxu0 0.0
    %990 = vmatpush1.msra.mxu0 0.0
    %991 = vmatprep.subr.mxu0 0.0
    %992 = vmatpush1.msra.mxu0 0.0
    %993 = vmatprep.subr.mxu0 0.0
    %994 = vmatpush1.msra.mxu0 0.0
    %995 = vmatprep.subr.mxu0 0.0
    %996 = vmatpush1.msra.mxu0 0.0
    %997 = vmatprep.subr.mxu0 0.0
    %998 = vmatpush1.msra.mxu0 %v959
    %999 = vmatprep.subr.mxu0 0.0
    %1000 = vmatpush1.msra.mxu0 %v958
    %1001 = vmatprep.subr.mxu0 0.0
    %1002 = vmatpush1.msra.mxu0 %v957
    %1003 = vmatprep.subr.mxu0 0.0
    %1004 = vmatpush1.msra.mxu0 %v956
    %1005 = vmatprep.subr.mxu0 0.0
    %1006 = vmatpush2.msra.mxu0 0.0
    %1007 = vmatprep.subr.mxu0 0.0
    %1008 = vmatpush2.msra.mxu0 0.0
    %1009 = vmatprep.subr.mxu0 0.0
    %1010 = vmatpush2.msra.mxu0 0.0
    %1011 = vmatprep.subr.mxu0 0.0
    %1012 = vmatpush2.msra.mxu0 0.0
    %1013 = vmatprep.subr.mxu0 0.0
    %1014 = vmatpush2.msra.mxu0 0.0
    %1015 = vmatprep.subr.mxu0 0.0
    %1016 = vmatpush2.msra.mxu0 0.0
    %1017 = vmatprep.subr.mxu0 0.0
    %1018 = vmatpush2.msra.mxu0 0.0
    %1019 = vmatprep.subr.mxu0 0.0
    %1020 = vmatpush2.msra.mxu0 0.0
    %1021 = vmatprep.subr.mxu0 0.0
    %1022 = vmatpush2.msra.mxu0 0.0
    %1023 = vmatprep.subr.mxu0 0.0
    %1024 = vmatpush2.msra.mxu0 0.0
    %1025 = vmatprep.subr.mxu0 0.0
    %1026 = vmatpush2.msra.mxu0 0.0
    %1027 = vmatprep.subr.mxu0 0.0
    %1028 = vmatpush2.msra.mxu0 0.0
    %1029 = vmatprep.subr.mxu0 0.0
    %1030 = vmatpush2.msra.mxu0 0.0
    %1031 = vmatprep.subr.mxu0 0.0
    %1032 = vmatpush2.msra.mxu0 0.0
    %1033 = vmatprep.subr.mxu0 0.0
    %1034 = vmatpush2.msra.mxu0 0.0
    %1035 = vmatprep.subr.mxu0 0.0
    %1036 = vmatpush2.msra.mxu0 0.0
    %1037 = vmatprep.mubr.f32.mxu0 0.0
    %1038 = vmatmul.mubr.f32.gmra.mxu0 %v968
    %v1039 = vpop.f32.mrf.mxu0
    %v1040 = vadd.f32 %v965, %v1039
    %v1041 = vpop.f32.mrf.mxu0
    %1042 = vmatprep.mubr.f32.mxu0 0.0
    %1043 = vmatmul.mubr.f32.gmra.mxu0 %v971
    %v1044 = vpop.f32.mrf.mxu0
    %v1045 = vadd.f32 %v965, %v1044
    %v1046 = vpop.f32.mrf.mxu0
    %1047 = vdwg.mxu0
    %v1048 = vmul.f32 %v1040, 0.5
    %v1049 = vmul.f32 %v1045, 0.5
    %v1050 = vmul.f32 %v1040, 0.70710677
    %v1051 = vmul.f32 %v1045, 0.70710677
    %vm1052 = vcmp.ge.f32.partialorder %v1050, 0.0
    %vm1053 = vcmp.ge.f32.partialorder %v1051, 0.0
    %v1054 = vsel %vm1052, 1.0, -1.0
    %v1055 = vsel %vm1053, 1.0, -1.0
    %v1056 = vand.u32 2147483647, %v1050
    %v1057 = vand.u32 2147483647, %v1051
    %v1058 = vmul.f32 %v1056, 0.3275911
    %v1059 = vmul.f32 %v1057, 0.3275911
    %v1060 = vadd.f32 %v1058, 1.0
    %v1061 = vadd.f32 %v1059, 1.0
    %v1062 = vrcp.pop %v1060
    %v1063 = vmul.f32 1.0, %v1062
    %v1064 = vrcp.pop %v1061
    %v1065 = vmul.f32 1.0, %v1064
    %v1066 = vmul.f32 %v1063, 1.0614054
    %v1067 = vmul.f32 %v1065, 1.0614054
    %v1068 = vadd.f32 %v1066, -1.4531521
    %v1069 = vadd.f32 %v1067, -1.4531521
    %v1070 = vmul.f32 %v1068, %v1063
    %v1071 = vmul.f32 %v1069, %v1065
    %v1072 = vadd.f32 %v1070, 1.4214138
    %v1073 = vadd.f32 %v1071, 1.4214138
    %v1074 = vmul.f32 %v1072, %v1063
    %v1075 = vmul.f32 %v1073, %v1065
    %v1076 = vadd.f32 %v1074, -0.28449672
    %v1077 = vadd.f32 %v1075, -0.28449672
    %v1078 = vmul.f32 %v1076, %v1063
    %v1079 = vmul.f32 %v1077, %v1065
    %v1080 = vadd.f32 %v1078, 0.2548296
    %v1081 = vadd.f32 %v1079, 0.2548296
    %v1082 = vmul.f32 %v1080, %v1063
    %v1083 = vmul.f32 %v1081, %v1065
    %v1084 = vsub.f32 0.0, %v1056
    %v1085 = vsub.f32 0.0, %v1057
    %v1086 = vmul.f32 %v1084, %v1056
    %v1087 = vmul.f32 %v1085, %v1057
    %v1088 = vmul.f32 %v1086, 1.442695
    %v1089 = vpow.pop %v1088
    %v1090 = vmul.f32 %v1087, 1.442695
    %v1091 = vpow.pop %v1090
    %v1092 = vmul.f32 %v1082, %v1089
    %v1093 = vmul.f32 %v1083, %v1091
    %v1094 = vsub.f32 1.0, %v1092
    %v1095 = vsub.f32 1.0, %v1093
    %v1096 = vmul.f32 %v1054, %v1094
    %v1097 = vmul.f32 %v1055, %v1095
    %v1098 = vadd.f32 %v1096, 1.0
    %v1099 = vadd.f32 %v1097, 1.0
    %v1100 = vmul.f32 %v1048, %v1098
    %v1101 = vmul.f32 %v1049, %v1099
    %v1102 = vld [vmem:[%s18] sm:$0xff]
    %v1103 = vld [vmem:[%s18 + $0x8] sm:$0xff]
    %v1104 = vld [vmem:[%s18 + $0x10] sm:$0xff]
    %v1105 = vld [vmem:[%s18 + $0x18] sm:$0xff]
    %v1106 = vld [vmem:[%s18 + $0x20] sm:$0xff]
    %v1107 = vld [vmem:[%s18 + $0x28] sm:$0xff]
    %v1108 = vld [vmem:[%s18 + $0x30] sm:$0xff]
    %v1109 = vld [vmem:[%s18 + $0x38] sm:$0xff]
    %v1110 = vld [vmem:[%s19] sm:$0x1]
    %v1112 = vlaneseq
    %v1113 = vshrl.u32 %v1112, 7
    %v1114 = vsub.s32 0, %v1113
    %v1115 = vrot.slane %v1110, %v1114
    %vm1117 = vcmask 523264
    %v1119 = vsel %vm1117, %v1100, 0
    %v1122 = vsel %vm1117, %v1101, 0
    %1124 = vmatprep.subr.mxu0 0.0
    %1125 = vmatpush1.msra.mxu0 0.0
    %1126 = vmatprep.subr.mxu0 0.0
    %1127 = vmatpush1.msra.mxu0 0.0
    %1128 = vmatprep.subr.mxu0 0.0
    %1129 = vmatpush1.msra.mxu0 0.0
    %1130 = vmatprep.subr.mxu0 0.0
    %1131 = vmatpush1.msra.mxu0 0.0
    %1132 = vmatprep.subr.mxu0 0.0
    %1133 = vmatpush1.msra.mxu0 0.0
    %1134 = vmatprep.subr.mxu0 0.0
    %1135 = vmatpush1.msra.mxu0 0.0
    %1136 = vmatprep.subr.mxu0 0.0
    %1137 = vmatpush1.msra.mxu0 0.0
    %1138 = vmatprep.subr.mxu0 0.0
    %1139 = vmatpush1.msra.mxu0 0.0
    %1140 = vmatprep.subr.mxu0 0.0
    %1141 = vmatpush1.msra.mxu0 %v1109
    %1142 = vmatprep.subr.mxu0 0.0
    %1143 = vmatpush1.msra.mxu0 %v1108
    %1144 = vmatprep.subr.mxu0 0.0
    %1145 = vmatpush1.msra.mxu0 %v1107
    %1146 = vmatprep.subr.mxu0 0.0
    %1147 = vmatpush1.msra.mxu0 %v1106
    %1148 = vmatprep.subr.mxu0 0.0
    %1149 = vmatpush1.msra.mxu0 %v1105
    %1150 = vmatprep.subr.mxu0 0.0
    %1151 = vmatpush1.msra.mxu0 %v1104
    %1152 = vmatprep.subr.mxu0 0.0
    %1153 = vmatpush1.msra.mxu0 %v1103
    %1154 = vmatprep.subr.mxu0 0.0
    %1155 = vmatpush1.msra.mxu0 %v1102
    %1156 = vmatprep.subr.mxu0 0.0
    %1157 = vmatpush2.msra.mxu0 0.0
    %1158 = vmatprep.subr.mxu0 0.0
    %1159 = vmatpush2.msra.mxu0 0.0
    %1160 = vmatprep.subr.mxu0 0.0
    %1161 = vmatpush2.msra.mxu0 0.0
    %1162 = vmatprep.subr.mxu0 0.0
    %1163 = vmatpush2.msra.mxu0 0.0
    %1164 = vmatprep.subr.mxu0 0.0
    %1165 = vmatpush2.msra.mxu0 0.0
    %1166 = vmatprep.subr.mxu0 0.0
    %1167 = vmatpush2.msra.mxu0 0.0
    %1168 = vmatprep.subr.mxu0 0.0
    %1169 = vmatpush2.msra.mxu0 0.0
    %1170 = vmatprep.subr.mxu0 0.0
    %1171 = vmatpush2.msra.mxu0 0.0
    %1172 = vmatprep.subr.mxu0 0.0
    %1173 = vmatpush2.msra.mxu0 0.0
    %1174 = vmatprep.subr.mxu0 0.0
    %1175 = vmatpush2.msra.mxu0 0.0
    %1176 = vmatprep.subr.mxu0 0.0
    %1177 = vmatpush2.msra.mxu0 0.0
    %1178 = vmatprep.subr.mxu0 0.0
    %1179 = vmatpush2.msra.mxu0 0.0
    %1180 = vmatprep.subr.mxu0 0.0
    %1181 = vmatpush2.msra.mxu0 0.0
    %1182 = vmatprep.subr.mxu0 0.0
    %1183 = vmatpush2.msra.mxu0 0.0
    %1184 = vmatprep.subr.mxu0 0.0
    %1185 = vmatpush2.msra.mxu0 0.0
    %1186 = vmatprep.subr.mxu0 0.0
    %1187 = vmatpush2.msra.mxu0 0.0
    %1188 = vmatprep.mubr.f32.mxu0 0.0
    %1189 = vmatmul.mubr.f32.gmra.mxu0 %v1119
    %v1190 = vpop.f32.mrf.mxu0
    %v1191 = vadd.f32 %v1115, %v1190
    %v1192 = vpop.f32.mrf.mxu0
    %1193 = vmatprep.mubr.f32.mxu0 0.0
    %1194 = vmatmul.mubr.f32.gmra.mxu0 %v1122
    %v1195 = vpop.f32.mrf.mxu0
    %v1196 = vadd.f32 %v1115, %v1195
    %v1197 = vpop.f32.mrf.mxu0
    %1198 = vdwg.mxu0
    %v1199 = vadd.f32 %v954, %v1191
    %v1200 = vadd.f32 %v955, %v1196
    %v1201 = vld [vmem:[%s20] sm:$0x1]
    %v1202 = vld [vmem:[%s21] sm:$0x1]
    %v1203 = vsel %vm248, %v1199, 0.0
    %1204 = vadd.xlane.f32.xlu0 %v1203
    %v1205 = vpop.xlane.xlu0 %1204
    %v1206 = vsel %vm248, %v1200, 0.0
    %1207 = vadd.xlane.f32.xlu0 %v1206
    %v1208 = vpop.xlane.xlu0 %1207
    %v1209 = vmul.f32 %v1205, %v255
    %v1210 = vmul.f32 %v1208, %v255
    %v1211 = vsub.f32 %v1199, %v1209
    %v1212 = vsub.f32 %v1200, %v1210
    %v1213 = vmul.f32 %v1211, %v1211
    %v1214 = vmul.f32 %v1212, %v1212
    %v1215 = vsel %vm248, %v1213, 0.0
    %1216 = vadd.xlane.f32.xlu0 %v1215
    %v1217 = vpop.xlane.xlu0 %1216
    %v1218 = vsel %vm248, %v1214, 0.0
    %1219 = vadd.xlane.f32.xlu0 %v1218
    %v1220 = vpop.xlane.xlu0 %1219
    %v1221 = vmul.f32 %v1217, %v255
    %v1222 = vmul.f32 %v1220, %v255
    %v1223 = vadd.f32 %v1221, 1e-12
    %v1224 = vadd.f32 %v1222, 1e-12
    %v1225 = vrsqrt.pop %v1223
    %v1226 = vrsqrt.pop %v1224
    %v1227 = vmul.f32 %v1211, %v1225
    %v1228 = vmul.f32 %v1212, %v1226
    %v1230 = vlaneseq
    %v1231 = vshrl.u32 %v1230, 7
    %v1232 = vsub.s32 0, %v1231
    %v1233 = vrot.slane %v1201, %v1232
    %v1235 = vmul.f32 %v1227, %v1233
    %v1236 = vmul.f32 %v1228, %v1233
    %v1238 = vlaneseq
    %v1239 = vshrl.u32 %v1238, 7
    %v1240 = vsub.s32 0, %v1239
    %v1241 = vrot.slane %v1202, %v1240
    %v1243 = vadd.f32 %v1235, %v1241
    %v1244 = vadd.f32 %v1236, %v1241
    %s1245 = scalar_lea.vmem %s10, 32
    %v1246 = vld [vmem:[%s1245] sm:$0xff]
    %v1247 = vld [vmem:[%s1245 + $0x8] sm:$0xff]
    %v1248 = vld [vmem:[%s1245 + $0x10] sm:$0xff]
    %v1249 = vld [vmem:[%s1245 + $0x18] sm:$0xff]
    %s1250 = scalar_lea.vmem %s11, 1
    %v1251 = vld [vmem:[%s1250] sm:$0x1]
    %v1253 = vlaneseq
    %v1254 = vshrl.u32 %v1253, 7
    %v1255 = vsub.s32 0, %v1254
    %v1256 = vrot.slane %v1251, %v1255
    %v1259 = vsel %vm248, %v1243, 0
    %v1262 = vsel %vm248, %v1244, 0
    %1264 = vmatprep.subr.mxu0 0.0
    %1265 = vmatpush1.msra.mxu0 0.0
    %1266 = vmatprep.subr.mxu0 0.0
    %1267 = vmatpush1.msra.mxu0 0.0
    %1268 = vmatprep.subr.mxu0 0.0
    %1269 = vmatpush1.msra.mxu0 0.0
    %1270 = vmatprep.subr.mxu0 0.0
    %1271 = vmatpush1.msra.mxu0 0.0
    %1272 = vmatprep.subr.mxu0 0.0
    %1273 = vmatpush1.msra.mxu0 0.0
    %1274 = vmatprep.subr.mxu0 0.0
    %1275 = vmatpush1.msra.mxu0 0.0
    %1276 = vmatprep.subr.mxu0 0.0
    %1277 = vmatpush1.msra.mxu0 0.0
    %1278 = vmatprep.subr.mxu0 0.0
    %1279 = vmatpush1.msra.mxu0 0.0
    %1280 = vmatprep.subr.mxu0 0.0
    %1281 = vmatpush1.msra.mxu0 0.0
    %1282 = vmatprep.subr.mxu0 0.0
    %1283 = vmatpush1.msra.mxu0 0.0
    %1284 = vmatprep.subr.mxu0 0.0
    %1285 = vmatpush1.msra.mxu0 0.0
    %1286 = vmatprep.subr.mxu0 0.0
    %1287 = vmatpush1.msra.mxu0 0.0
    %1288 = vmatprep.subr.mxu0 0.0
    %1289 = vmatpush1.msra.mxu0 %v1249
    %1290 = vmatprep.subr.mxu0 0.0
    %1291 = vmatpush1.msra.mxu0 %v1248
    %1292 = vmatprep.subr.mxu0 0.0
    %1293 = vmatpush1.msra.mxu0 %v1247
    %1294 = vmatprep.subr.mxu0 0.0
    %1295 = vmatpush1.msra.mxu0 %v1246
    %1296 = vmatprep.subr.mxu0 0.0
    %1297 = vmatpush2.msra.mxu0 0.0
    %1298 = vmatprep.subr.mxu0 0.0
    %1299 = vmatpush2.msra.mxu0 0.0
    %1300 = vmatprep.subr.mxu0 0.0
    %1301 = vmatpush2.msra.mxu0 0.0
    %1302 = vmatprep.subr.mxu0 0.0
    %1303 = vmatpush2.msra.mxu0 0.0
    %1304 = vmatprep.subr.mxu0 0.0
    %1305 = vmatpush2.msra.mxu0 0.0
    %1306 = vmatprep.subr.mxu0 0.0
    %1307 = vmatpush2.msra.mxu0 0.0
    %1308 = vmatprep.subr.mxu0 0.0
    %1309 = vmatpush2.msra.mxu0 0.0
    %1310 = vmatprep.subr.mxu0 0.0
    %1311 = vmatpush2.msra.mxu0 0.0
    %1312 = vmatprep.subr.mxu0 0.0
    %1313 = vmatpush2.msra.mxu0 0.0
    %1314 = vmatprep.subr.mxu0 0.0
    %1315 = vmatpush2.msra.mxu0 0.0
    %1316 = vmatprep.subr.mxu0 0.0
    %1317 = vmatpush2.msra.mxu0 0.0
    %1318 = vmatprep.subr.mxu0 0.0
    %1319 = vmatpush2.msra.mxu0 0.0
    %1320 = vmatprep.subr.mxu0 0.0
    %1321 = vmatpush2.msra.mxu0 0.0
    %1322 = vmatprep.subr.mxu0 0.0
    %1323 = vmatpush2.msra.mxu0 0.0
    %1324 = vmatprep.subr.mxu0 0.0
    %1325 = vmatpush2.msra.mxu0 0.0
    %1326 = vmatprep.subr.mxu0 0.0
    %1327 = vmatpush2.msra.mxu0 0.0
    %1328 = vmatprep.mubr.f32.mxu0 0.0
    %1329 = vmatmul.mubr.f32.gmra.mxu0 %v1259
    %v1330 = vpop.f32.mrf.mxu0
    %v1331 = vadd.f32 %v1256, %v1330
    %v1332 = vpop.f32.mrf.mxu0
    %1333 = vmatprep.mubr.f32.mxu0 0.0
    %1334 = vmatmul.mubr.f32.gmra.mxu0 %v1262
    %v1335 = vpop.f32.mrf.mxu0
    %v1336 = vadd.f32 %v1256, %v1335
    %v1337 = vpop.f32.mrf.mxu0
    %1338 = vdwg.mxu0
    %1341 = vrot.lane.b32.xlu0 %v1331, 96
    %v1342 = vpop.permute.xlu0 %1341
    %1343 = vrot.lane.b32.xlu0 %v1336, 96
    %v1344 = vpop.permute.xlu0 %1343
    %v1345 = vsel %vm407, %v1331, 0
    %v1347 = vsel %vm407, %v1336, 0
    %v1349 = vsel %vm407, %v1342, 0
    %v1351 = vsel %vm407, %v1344, 0
    %1353 = vmatprep.subr.mxu0 0.0
    %1354 = vmatpush1.xpose.msra.mxu0 0.0
    %1355 = vmatprep.subr.mxu0 0.0
    %1356 = vmatpush1.xpose.msra.mxu0 0.0
    %1357 = vmatprep.subr.mxu0 0.0
    %1358 = vmatpush1.xpose.msra.mxu0 0.0
    %1359 = vmatprep.subr.mxu0 0.0
    %1360 = vmatpush1.xpose.msra.mxu0 0.0
    %1361 = vmatprep.subr.mxu0 0.0
    %1362 = vmatpush1.xpose.msra.mxu0 0.0
    %1363 = vmatprep.subr.mxu0 0.0
    %1364 = vmatpush1.xpose.msra.mxu0 0.0
    %1365 = vmatprep.subr.mxu0 0.0
    %1366 = vmatpush1.xpose.msra.mxu0 0.0
    %1367 = vmatprep.subr.mxu0 0.0
    %1368 = vmatpush1.xpose.msra.mxu0 0.0
    %1369 = vmatprep.subr.mxu0 0.0
    %1370 = vmatpush1.xpose.msra.mxu0 0.0
    %1371 = vmatprep.subr.mxu0 0.0
    %1372 = vmatpush1.xpose.msra.mxu0 0.0
    %1373 = vmatprep.subr.mxu0 0.0
    %1374 = vmatpush1.xpose.msra.mxu0 0.0
    %1375 = vmatprep.subr.mxu0 0.0
    %1376 = vmatpush1.xpose.msra.mxu0 0.0
    %1377 = vmatprep.subr.mxu0 0.0
    %1378 = vmatpush1.xpose.msra.mxu0 0.0
    %1379 = vmatprep.subr.mxu0 0.0
    %1380 = vmatpush1.xpose.msra.mxu0 0.0
    %1381 = vmatprep.subr.mxu0 0.0
    %1382 = vmatpush1.xpose.msra.mxu0 %v1351
    %1383 = vmatprep.subr.mxu0 0.0
    %1384 = vmatpush1.xpose.msra.mxu0 %v1349
    %1385 = vmatprep.subr.mxu0 0.0
    %1386 = vmatpush2.xpose.msra.mxu0 0.0
    %1387 = vmatprep.subr.mxu0 0.0
    %1388 = vmatpush2.xpose.msra.mxu0 0.0
    %1389 = vmatprep.subr.mxu0 0.0
    %1390 = vmatpush2.xpose.msra.mxu0 0.0
    %1391 = vmatprep.subr.mxu0 0.0
    %1392 = vmatpush2.xpose.msra.mxu0 0.0
    %1393 = vmatprep.subr.mxu0 0.0
    %1394 = vmatpush2.xpose.msra.mxu0 0.0
    %1395 = vmatprep.subr.mxu0 0.0
    %1396 = vmatpush2.xpose.msra.mxu0 0.0
    %1397 = vmatprep.subr.mxu0 0.0
    %1398 = vmatpush2.xpose.msra.mxu0 0.0
    %1399 = vmatprep.subr.mxu0 0.0
    %1400 = vmatpush2.xpose.msra.mxu0 0.0
    %1401 = vmatprep.subr.mxu0 0.0
    %1402 = vmatpush2.xpose.msra.mxu0 0.0
    %1403 = vmatprep.subr.mxu0 0.0
    %1404 = vmatpush2.xpose.msra.mxu0 0.0
    %1405 = vmatprep.subr.mxu0 0.0
    %1406 = vmatpush2.xpose.msra.mxu0 0.0
    %1407 = vmatprep.subr.mxu0 0.0
    %1408 = vmatpush2.xpose.msra.mxu0 0.0
    %1409 = vmatprep.subr.mxu0 0.0
    %1410 = vmatpush2.xpose.msra.mxu0 0.0
    %1411 = vmatprep.subr.mxu0 0.0
    %1412 = vmatpush2.xpose.msra.mxu0 0.0
    %1413 = vmatprep.subr.mxu0 0.0
    %1414 = vmatpush2.xpose.msra.mxu0 0.0
    %1415 = vmatprep.subr.mxu0 0.0
    %1416 = vmatpush2.xpose.msra.mxu0 0.0
    %1417 = vmatprep.mubr.f32.mxu0 0.0
    %1418 = vmatmul.mubr.f32.gmra.mxu0 %v1345
    %v1419 = vpop.f32.mrf.mxu0
    %v1420 = vadd.f32 0.0, %v1419
    %v1421 = vpop.f32.mrf.mxu0
    %1422 = vmatprep.mubr.f32.mxu0 0.0
    %1423 = vmatmul.mubr.f32.gmra.mxu0 %v1347
    %v1424 = vpop.f32.mrf.mxu0
    %v1425 = vadd.f32 0.0, %v1424
    %v1426 = vpop.f32.mrf.mxu0
    %1427 = vdwg.mxu0
    %v1428 = vmul.f32 %v1420, 0.25
    %v1429 = vmul.f32 %v1425, 0.25
    %v1430 = vadd.f32 %v1428, %v307
    %v1431 = vadd.f32 %v1429, %v308
    %v1432 = vsel %vm407, %v1430, -inf
    %1433 = vmax.xlane.f32.xlu0 %v1432
    %v1434 = vpop.xlane.xlu0 %1433
    %v1435 = vsel %vm407, %v1431, -inf
    %1436 = vmax.xlane.f32.xlu0 %v1435
    %v1437 = vpop.xlane.xlu0 %1436
    %v1438 = vsub.f32 %v1430, %v1434
    %v1439 = vsub.f32 %v1431, %v1437
    %v1440 = vmul.f32 %v1438, 1.442695
    %v1441 = vpow.pop %v1440
    %v1442 = vmul.f32 %v1439, 1.442695
    %v1443 = vpow.pop %v1442
    %v1444 = vsel %vm407, %v1441, 0.0
    %1445 = vadd.xlane.f32.xlu0 %v1444
    %v1446 = vpop.xlane.xlu0 %1445
    %v1447 = vsel %vm407, %v1443, 0.0
    %1448 = vadd.xlane.f32.xlu0 %v1447
    %v1449 = vpop.xlane.xlu0 %1448
    %v1450 = vrcp.pop %v1446
    %v1451 = vmul.f32 %v1441, %v1450
    %v1452 = vrcp.pop %v1449
    %v1453 = vmul.f32 %v1443, %v1452
    %1454 = vrot.lane.b32.xlu0 %v1331, 64
    %v1455 = vpop.permute.xlu0 %1454
    %1456 = vrot.lane.b32.xlu0 %v1336, 64
    %v1457 = vpop.permute.xlu0 %1456
    %v1461 = vsel %vm407, %v1451, 0
    %v1464 = vsel %vm407, %v1453, 0
    %1466 = vmatprep.subr.mxu0 0.0
    %1467 = vmatpush1.msra.mxu0 0.0
    %1468 = vmatprep.subr.mxu0 0.0
    %1469 = vmatpush1.msra.mxu0 0.0
    %1470 = vmatprep.subr.mxu0 0.0
    %1471 = vmatpush1.msra.mxu0 0.0
    %1472 = vmatprep.subr.mxu0 0.0
    %1473 = vmatpush1.msra.mxu0 0.0
    %1474 = vmatprep.subr.mxu0 0.0
    %1475 = vmatpush1.msra.mxu0 0.0
    %1476 = vmatprep.subr.mxu0 0.0
    %1477 = vmatpush1.msra.mxu0 0.0
    %1478 = vmatprep.subr.mxu0 0.0
    %1479 = vmatpush1.msra.mxu0 0.0
    %1480 = vmatprep.subr.mxu0 0.0
    %1481 = vmatpush1.msra.mxu0 0.0
    %1482 = vmatprep.subr.mxu0 0.0
    %1483 = vmatpush1.msra.mxu0 0.0
    %1484 = vmatprep.subr.mxu0 0.0
    %1485 = vmatpush1.msra.mxu0 0.0
    %1486 = vmatprep.subr.mxu0 0.0
    %1487 = vmatpush1.msra.mxu0 0.0
    %1488 = vmatprep.subr.mxu0 0.0
    %1489 = vmatpush1.msra.mxu0 0.0
    %1490 = vmatprep.subr.mxu0 0.0
    %1491 = vmatpush1.msra.mxu0 0.0
    %1492 = vmatprep.subr.mxu0 0.0
    %1493 = vmatpush1.msra.mxu0 0.0
    %1494 = vmatprep.subr.mxu0 0.0
    %1495 = vmatpush1.msra.mxu0 %v1457
    %1496 = vmatprep.subr.mxu0 0.0
    %1497 = vmatpush1.msra.mxu0 %v1455
    %1498 = vmatprep.subr.mxu0 0.0
    %1499 = vmatpush2.msra.mxu0 0.0
    %1500 = vmatprep.subr.mxu0 0.0
    %1501 = vmatpush2.msra.mxu0 0.0
    %1502 = vmatprep.subr.mxu0 0.0
    %1503 = vmatpush2.msra.mxu0 0.0
    %1504 = vmatprep.subr.mxu0 0.0
    %1505 = vmatpush2.msra.mxu0 0.0
    %1506 = vmatprep.subr.mxu0 0.0
    %1507 = vmatpush2.msra.mxu0 0.0
    %1508 = vmatprep.subr.mxu0 0.0
    %1509 = vmatpush2.msra.mxu0 0.0
    %1510 = vmatprep.subr.mxu0 0.0
    %1511 = vmatpush2.msra.mxu0 0.0
    %1512 = vmatprep.subr.mxu0 0.0
    %1513 = vmatpush2.msra.mxu0 0.0
    %1514 = vmatprep.subr.mxu0 0.0
    %1515 = vmatpush2.msra.mxu0 0.0
    %1516 = vmatprep.subr.mxu0 0.0
    %1517 = vmatpush2.msra.mxu0 0.0
    %1518 = vmatprep.subr.mxu0 0.0
    %1519 = vmatpush2.msra.mxu0 0.0
    %1520 = vmatprep.subr.mxu0 0.0
    %1521 = vmatpush2.msra.mxu0 0.0
    %1522 = vmatprep.subr.mxu0 0.0
    %1523 = vmatpush2.msra.mxu0 0.0
    %1524 = vmatprep.subr.mxu0 0.0
    %1525 = vmatpush2.msra.mxu0 0.0
    %1526 = vmatprep.subr.mxu0 0.0
    %1527 = vmatpush2.msra.mxu0 0.0
    %1528 = vmatprep.subr.mxu0 0.0
    %1529 = vmatpush2.msra.mxu0 0.0
    %1530 = vmatprep.mubr.f32.mxu0 0.0
    %1531 = vmatmul.mubr.f32.gmra.mxu0 %v1461
    %v1532 = vpop.f32.mrf.mxu0
    %v1533 = vadd.f32 0.0, %v1532
    %v1534 = vpop.f32.mrf.mxu0
    %1535 = vmatprep.mubr.f32.mxu0 0.0
    %1536 = vmatmul.mubr.f32.gmra.mxu0 %v1464
    %v1537 = vpop.f32.mrf.mxu0
    %v1538 = vadd.f32 0.0, %v1537
    %v1539 = vpop.f32.mrf.mxu0
    %1540 = vdwg.mxu0
    %1541 = vrot.lane.b32.xlu0 %v1331, 112
    %v1542 = vpop.permute.xlu0 %1541
    %1543 = vrot.lane.b32.xlu0 %v1336, 112
    %v1544 = vpop.permute.xlu0 %1543
    %1545 = vrot.lane.b32.xlu0 %v1331, 80
    %v1546 = vpop.permute.xlu0 %1545
    %1547 = vrot.lane.b32.xlu0 %v1336, 80
    %v1548 = vpop.permute.xlu0 %1547
    %v1549 = vsel %vm407, %v1542, 0
    %v1551 = vsel %vm407, %v1544, 0
    %v1553 = vsel %vm407, %v1546, 0
    %v1555 = vsel %vm407, %v1548, 0
    %1557 = vmatprep.subr.mxu0 0.0
    %1558 = vmatpush1.xpose.msra.mxu0 0.0
    %1559 = vmatprep.subr.mxu0 0.0
    %1560 = vmatpush1.xpose.msra.mxu0 0.0
    %1561 = vmatprep.subr.mxu0 0.0
    %1562 = vmatpush1.xpose.msra.mxu0 0.0
    %1563 = vmatprep.subr.mxu0 0.0
    %1564 = vmatpush1.xpose.msra.mxu0 0.0
    %1565 = vmatprep.subr.mxu0 0.0
    %1566 = vmatpush1.xpose.msra.mxu0 0.0
    %1567 = vmatprep.subr.mxu0 0.0
    %1568 = vmatpush1.xpose.msra.mxu0 0.0
    %1569 = vmatprep.subr.mxu0 0.0
    %1570 = vmatpush1.xpose.msra.mxu0 0.0
    %1571 = vmatprep.subr.mxu0 0.0
    %1572 = vmatpush1.xpose.msra.mxu0 0.0
    %1573 = vmatprep.subr.mxu0 0.0
    %1574 = vmatpush1.xpose.msra.mxu0 0.0
    %1575 = vmatprep.subr.mxu0 0.0
    %1576 = vmatpush1.xpose.msra.mxu0 0.0
    %1577 = vmatprep.subr.mxu0 0.0
    %1578 = vmatpush1.xpose.msra.mxu0 0.0
    %1579 = vmatprep.subr.mxu0 0.0
    %1580 = vmatpush1.xpose.msra.mxu0 0.0
    %1581 = vmatprep.subr.mxu0 0.0
    %1582 = vmatpush1.xpose.msra.mxu0 0.0
    %1583 = vmatprep.subr.mxu0 0.0
    %1584 = vmatpush1.xpose.msra.mxu0 0.0
    %1585 = vmatprep.subr.mxu0 0.0
    %1586 = vmatpush1.xpose.msra.mxu0 %v1555
    %1587 = vmatprep.subr.mxu0 0.0
    %1588 = vmatpush1.xpose.msra.mxu0 %v1553
    %1589 = vmatprep.subr.mxu0 0.0
    %1590 = vmatpush2.xpose.msra.mxu0 0.0
    %1591 = vmatprep.subr.mxu0 0.0
    %1592 = vmatpush2.xpose.msra.mxu0 0.0
    %1593 = vmatprep.subr.mxu0 0.0
    %1594 = vmatpush2.xpose.msra.mxu0 0.0
    %1595 = vmatprep.subr.mxu0 0.0
    %1596 = vmatpush2.xpose.msra.mxu0 0.0
    %1597 = vmatprep.subr.mxu0 0.0
    %1598 = vmatpush2.xpose.msra.mxu0 0.0
    %1599 = vmatprep.subr.mxu0 0.0
    %1600 = vmatpush2.xpose.msra.mxu0 0.0
    %1601 = vmatprep.subr.mxu0 0.0
    %1602 = vmatpush2.xpose.msra.mxu0 0.0
    %1603 = vmatprep.subr.mxu0 0.0
    %1604 = vmatpush2.xpose.msra.mxu0 0.0
    %1605 = vmatprep.subr.mxu0 0.0
    %1606 = vmatpush2.xpose.msra.mxu0 0.0
    %1607 = vmatprep.subr.mxu0 0.0
    %1608 = vmatpush2.xpose.msra.mxu0 0.0
    %1609 = vmatprep.subr.mxu0 0.0
    %1610 = vmatpush2.xpose.msra.mxu0 0.0
    %1611 = vmatprep.subr.mxu0 0.0
    %1612 = vmatpush2.xpose.msra.mxu0 0.0
    %1613 = vmatprep.subr.mxu0 0.0
    %1614 = vmatpush2.xpose.msra.mxu0 0.0
    %1615 = vmatprep.subr.mxu0 0.0
    %1616 = vmatpush2.xpose.msra.mxu0 0.0
    %1617 = vmatprep.subr.mxu0 0.0
    %1618 = vmatpush2.xpose.msra.mxu0 0.0
    %1619 = vmatprep.subr.mxu0 0.0
    %1620 = vmatpush2.xpose.msra.mxu0 0.0
    %1621 = vmatprep.mubr.f32.mxu0 0.0
    %1622 = vmatmul.mubr.f32.gmra.mxu0 %v1549
    %v1623 = vpop.f32.mrf.mxu0
    %v1624 = vadd.f32 0.0, %v1623
    %v1625 = vpop.f32.mrf.mxu0
    %1626 = vmatprep.mubr.f32.mxu0 0.0
    %1627 = vmatmul.mubr.f32.gmra.mxu0 %v1551
    %v1628 = vpop.f32.mrf.mxu0
    %v1629 = vadd.f32 0.0, %v1628
    %v1630 = vpop.f32.mrf.mxu0
    %1631 = vdwg.mxu0
    %v1632 = vmul.f32 %v1624, 0.25
    %v1633 = vmul.f32 %v1629, 0.25
    %v1634 = vadd.f32 %v1632, %v307
    %v1635 = vadd.f32 %v1633, %v308
    %v1636 = vsel %vm407, %v1634, -inf
    %1637 = vmax.xlane.f32.xlu0 %v1636
    %v1638 = vpop.xlane.xlu0 %1637
    %v1639 = vsel %vm407, %v1635, -inf
    %1640 = vmax.xlane.f32.xlu0 %v1639
    %v1641 = vpop.xlane.xlu0 %1640
    %v1642 = vsub.f32 %v1634, %v1638
    %v1643 = vsub.f32 %v1635, %v1641
    %v1644 = vmul.f32 %v1642, 1.442695
    %v1645 = vpow.pop %v1644
    %v1646 = vmul.f32 %v1643, 1.442695
    %v1647 = vpow.pop %v1646
    %v1648 = vsel %vm407, %v1645, 0.0
    %1649 = vadd.xlane.f32.xlu0 %v1648
    %v1650 = vpop.xlane.xlu0 %1649
    %v1651 = vsel %vm407, %v1647, 0.0
    %1652 = vadd.xlane.f32.xlu0 %v1651
    %v1653 = vpop.xlane.xlu0 %1652
    %v1654 = vrcp.pop %v1650
    %v1655 = vmul.f32 %v1645, %v1654
    %v1656 = vrcp.pop %v1653
    %v1657 = vmul.f32 %v1647, %v1656
    %1658 = vrot.lane.b32.xlu0 %v1331, 48
    %v1659 = vpop.permute.xlu0 %1658
    %1660 = vrot.lane.b32.xlu0 %v1336, 48
    %v1661 = vpop.permute.xlu0 %1660
    %v1665 = vsel %vm407, %v1655, 0
    %v1668 = vsel %vm407, %v1657, 0
    %1670 = vmatprep.subr.mxu0 0.0
    %1671 = vmatpush1.msra.mxu0 0.0
    %1672 = vmatprep.subr.mxu0 0.0
    %1673 = vmatpush1.msra.mxu0 0.0
    %1674 = vmatprep.subr.mxu0 0.0
    %1675 = vmatpush1.msra.mxu0 0.0
    %1676 = vmatprep.subr.mxu0 0.0
    %1677 = vmatpush1.msra.mxu0 0.0
    %1678 = vmatprep.subr.mxu0 0.0
    %1679 = vmatpush1.msra.mxu0 0.0
    %1680 = vmatprep.subr.mxu0 0.0
    %1681 = vmatpush1.msra.mxu0 0.0
    %1682 = vmatprep.subr.mxu0 0.0
    %1683 = vmatpush1.msra.mxu0 0.0
    %1684 = vmatprep.subr.mxu0 0.0
    %1685 = vmatpush1.msra.mxu0 0.0
    %1686 = vmatprep.subr.mxu0 0.0
    %1687 = vmatpush1.msra.mxu0 0.0
    %1688 = vmatprep.subr.mxu0 0.0
    %1689 = vmatpush1.msra.mxu0 0.0
    %1690 = vmatprep.subr.mxu0 0.0
    %1691 = vmatpush1.msra.mxu0 0.0
    %1692 = vmatprep.subr.mxu0 0.0
    %1693 = vmatpush1.msra.mxu0 0.0
    %1694 = vmatprep.subr.mxu0 0.0
    %1695 = vmatpush1.msra.mxu0 0.0
    %1696 = vmatprep.subr.mxu0 0.0
    %1697 = vmatpush1.msra.mxu0 0.0
    %1698 = vmatprep.subr.mxu0 0.0
    %1699 = vmatpush1.msra.mxu0 %v1661
    %1700 = vmatprep.subr.mxu0 0.0
    %1701 = vmatpush1.msra.mxu0 %v1659
    %1702 = vmatprep.subr.mxu0 0.0
    %1703 = vmatpush2.msra.mxu0 0.0
    %1704 = vmatprep.subr.mxu0 0.0
    %1705 = vmatpush2.msra.mxu0 0.0
    %1706 = vmatprep.subr.mxu0 0.0
    %1707 = vmatpush2.msra.mxu0 0.0
    %1708 = vmatprep.subr.mxu0 0.0
    %1709 = vmatpush2.msra.mxu0 0.0
    %1710 = vmatprep.subr.mxu0 0.0
    %1711 = vmatpush2.msra.mxu0 0.0
    %1712 = vmatprep.subr.mxu0 0.0
    %1713 = vmatpush2.msra.mxu0 0.0
    %1714 = vmatprep.subr.mxu0 0.0
    %1715 = vmatpush2.msra.mxu0 0.0
    %1716 = vmatprep.subr.mxu0 0.0
    %1717 = vmatpush2.msra.mxu0 0.0
    %1718 = vmatprep.subr.mxu0 0.0
    %1719 = vmatpush2.msra.mxu0 0.0
    %1720 = vmatprep.subr.mxu0 0.0
    %1721 = vmatpush2.msra.mxu0 0.0
    %1722 = vmatprep.subr.mxu0 0.0
    %1723 = vmatpush2.msra.mxu0 0.0
    %1724 = vmatprep.subr.mxu0 0.0
    %1725 = vmatpush2.msra.mxu0 0.0
    %1726 = vmatprep.subr.mxu0 0.0
    %1727 = vmatpush2.msra.mxu0 0.0
    %1728 = vmatprep.subr.mxu0 0.0
    %1729 = vmatpush2.msra.mxu0 0.0
    %1730 = vmatprep.subr.mxu0 0.0
    %1731 = vmatpush2.msra.mxu0 0.0
    %1732 = vmatprep.subr.mxu0 0.0
    %1733 = vmatpush2.msra.mxu0 0.0
    %1734 = vmatprep.mubr.f32.mxu0 0.0
    %1735 = vmatmul.mubr.f32.gmra.mxu0 %v1665
    %v1736 = vpop.f32.mrf.mxu0
    %v1737 = vadd.f32 0.0, %v1736
    %v1738 = vpop.f32.mrf.mxu0
    %1739 = vmatprep.mubr.f32.mxu0 0.0
    %1740 = vmatmul.mubr.f32.gmra.mxu0 %v1668
    %v1741 = vpop.f32.mrf.mxu0
    %v1742 = vadd.f32 0.0, %v1741
    %v1743 = vpop.f32.mrf.mxu0
    %1744 = vdwg.mxu0
    %1747 = vrot.lane.b32.xlu0 %v1737, 16
    %v1748 = vpop.permute.xlu0 %1747
    %1749 = vrot.lane.b32.xlu0 %v1742, 16
    %v1750 = vpop.permute.xlu0 %1749
    %v1753 = vsel %vm407, %v1533, %v1748
    %v1754 = vsel %vm407, %v1538, %v1750
    %s1755 = scalar_lea.vmem %s12, 32
    %v1756 = vld [vmem:[%s1755] sm:$0xff]
    %v1757 = vld [vmem:[%s1755 + $0x8] sm:$0xff]
    %v1758 = vld [vmem:[%s1755 + $0x10] sm:$0xff]
    %v1759 = vld [vmem:[%s1755 + $0x18] sm:$0xff]
    %s1760 = scalar_lea.vmem %s13, 1
    %v1761 = vld [vmem:[%s1760] sm:$0x1]
    %v1763 = vlaneseq
    %v1764 = vshrl.u32 %v1763, 7
    %v1765 = vsub.s32 0, %v1764
    %v1766 = vrot.slane %v1761, %v1765
    %v1769 = vsel %vm248, %v1753, 0
    %v1772 = vsel %vm248, %v1754, 0
    %1774 = vmatprep.subr.mxu0 0.0
    %1775 = vmatpush1.msra.mxu0 0.0
    %1776 = vmatprep.subr.mxu0 0.0
    %1777 = vmatpush1.msra.mxu0 0.0
    %1778 = vmatprep.subr.mxu0 0.0
    %1779 = vmatpush1.msra.mxu0 0.0
    %1780 = vmatprep.subr.mxu0 0.0
    %1781 = vmatpush1.msra.mxu0 0.0
    %1782 = vmatprep.subr.mxu0 0.0
    %1783 = vmatpush1.msra.mxu0 0.0
    %1784 = vmatprep.subr.mxu0 0.0
    %1785 = vmatpush1.msra.mxu0 0.0
    %1786 = vmatprep.subr.mxu0 0.0
    %1787 = vmatpush1.msra.mxu0 0.0
    %1788 = vmatprep.subr.mxu0 0.0
    %1789 = vmatpush1.msra.mxu0 0.0
    %1790 = vmatprep.subr.mxu0 0.0
    %1791 = vmatpush1.msra.mxu0 0.0
    %1792 = vmatprep.subr.mxu0 0.0
    %1793 = vmatpush1.msra.mxu0 0.0
    %1794 = vmatprep.subr.mxu0 0.0
    %1795 = vmatpush1.msra.mxu0 0.0
    %1796 = vmatprep.subr.mxu0 0.0
    %1797 = vmatpush1.msra.mxu0 0.0
    %1798 = vmatprep.subr.mxu0 0.0
    %1799 = vmatpush1.msra.mxu0 %v1759
    %1800 = vmatprep.subr.mxu0 0.0
    %1801 = vmatpush1.msra.mxu0 %v1758
    %1802 = vmatprep.subr.mxu0 0.0
    %1803 = vmatpush1.msra.mxu0 %v1757
    %1804 = vmatprep.subr.mxu0 0.0
    %1805 = vmatpush1.msra.mxu0 %v1756
    %1806 = vmatprep.subr.mxu0 0.0
    %1807 = vmatpush2.msra.mxu0 0.0
    %1808 = vmatprep.subr.mxu0 0.0
    %1809 = vmatpush2.msra.mxu0 0.0
    %1810 = vmatprep.subr.mxu0 0.0
    %1811 = vmatpush2.msra.mxu0 0.0
    %1812 = vmatprep.subr.mxu0 0.0
    %1813 = vmatpush2.msra.mxu0 0.0
    %1814 = vmatprep.subr.mxu0 0.0
    %1815 = vmatpush2.msra.mxu0 0.0
    %1816 = vmatprep.subr.mxu0 0.0
    %1817 = vmatpush2.msra.mxu0 0.0
    %1818 = vmatprep.subr.mxu0 0.0
    %1819 = vmatpush2.msra.mxu0 0.0
    %1820 = vmatprep.subr.mxu0 0.0
    %1821 = vmatpush2.msra.mxu0 0.0
    %1822 = vmatprep.subr.mxu0 0.0
    %1823 = vmatpush2.msra.mxu0 0.0
    %1824 = vmatprep.subr.mxu0 0.0
    %1825 = vmatpush2.msra.mxu0 0.0
    %1826 = vmatprep.subr.mxu0 0.0
    %1827 = vmatpush2.msra.mxu0 0.0
    %1828 = vmatprep.subr.mxu0 0.0
    %1829 = vmatpush2.msra.mxu0 0.0
    %1830 = vmatprep.subr.mxu0 0.0
    %1831 = vmatpush2.msra.mxu0 0.0
    %1832 = vmatprep.subr.mxu0 0.0
    %1833 = vmatpush2.msra.mxu0 0.0
    %1834 = vmatprep.subr.mxu0 0.0
    %1835 = vmatpush2.msra.mxu0 0.0
    %1836 = vmatprep.subr.mxu0 0.0
    %1837 = vmatpush2.msra.mxu0 0.0
    %1838 = vmatprep.mubr.f32.mxu0 0.0
    %1839 = vmatmul.mubr.f32.gmra.mxu0 %v1769
    %v1840 = vpop.f32.mrf.mxu0
    %v1841 = vadd.f32 %v1766, %v1840
    %v1842 = vpop.f32.mrf.mxu0
    %1843 = vmatprep.mubr.f32.mxu0 0.0
    %1844 = vmatmul.mubr.f32.gmra.mxu0 %v1772
    %v1845 = vpop.f32.mrf.mxu0
    %v1846 = vadd.f32 %v1766, %v1845
    %v1847 = vpop.f32.mrf.mxu0
    %1848 = vdwg.mxu0
    %v1849 = vadd.f32 %v1243, %v1841
    %v1850 = vadd.f32 %v1244, %v1846
    %s1851 = scalar_lea.vmem %s14, 1
    %v1852 = vld [vmem:[%s1851] sm:$0x1]
    %s1853 = scalar_lea.vmem %s15, 1
    %v1854 = vld [vmem:[%s1853] sm:$0x1]
    %v1855 = vsel %vm248, %v1849, 0.0
    %1856 = vadd.xlane.f32.xlu0 %v1855
    %v1857 = vpop.xlane.xlu0 %1856
    %v1858 = vsel %vm248, %v1850, 0.0
    %1859 = vadd.xlane.f32.xlu0 %v1858
    %v1860 = vpop.xlane.xlu0 %1859
    %v1861 = vmul.f32 %v1857, %v255
    %v1862 = vmul.f32 %v1860, %v255
    %v1863 = vsub.f32 %v1849, %v1861
    %v1864 = vsub.f32 %v1850, %v1862
    %v1865 = vmul.f32 %v1863, %v1863
    %v1866 = vmul.f32 %v1864, %v1864
    %v1867 = vsel %vm248, %v1865, 0.0
    %1868 = vadd.xlane.f32.xlu0 %v1867
    %v1869 = vpop.xlane.xlu0 %1868
    %v1870 = vsel %vm248, %v1866, 0.0
    %1871 = vadd.xlane.f32.xlu0 %v1870
    %v1872 = vpop.xlane.xlu0 %1871
    %v1873 = vmul.f32 %v1869, %v255
    %v1874 = vmul.f32 %v1872, %v255
    %v1875 = vadd.f32 %v1873, 1e-12
    %v1876 = vadd.f32 %v1874, 1e-12
    %v1877 = vrsqrt.pop %v1875
    %v1878 = vrsqrt.pop %v1876
    %v1879 = vmul.f32 %v1863, %v1877
    %v1880 = vmul.f32 %v1864, %v1878
    %v1882 = vlaneseq
    %v1883 = vshrl.u32 %v1882, 7
    %v1884 = vsub.s32 0, %v1883
    %v1885 = vrot.slane %v1852, %v1884
    %v1887 = vmul.f32 %v1879, %v1885
    %v1888 = vmul.f32 %v1880, %v1885
    %v1890 = vlaneseq
    %v1891 = vshrl.u32 %v1890, 7
    %v1892 = vsub.s32 0, %v1891
    %v1893 = vrot.slane %v1854, %v1892
    %v1895 = vadd.f32 %v1887, %v1893
    %v1896 = vadd.f32 %v1888, %v1893
    %s1897 = scalar_lea.vmem %s16, 32
    %v1898 = vld [vmem:[%s1897] sm:$0xff]
    %v1899 = vld [vmem:[%s1897 + $0x8] sm:$0xff]
    %v1900 = vld [vmem:[%s1897 + $0x10] sm:$0xff]
    %v1901 = vld [vmem:[%s1897 + $0x18] sm:$0xff]
    %s1902 = scalar_lea.vmem %s17, 1
    %v1903 = vld [vmem:[%s1902] sm:$0x1]
    %v1905 = vlaneseq
    %v1906 = vshrl.u32 %v1905, 7
    %v1907 = vsub.s32 0, %v1906
    %v1908 = vrot.slane %v1903, %v1907
    %v1911 = vsel %vm248, %v1895, 0
    %v1914 = vsel %vm248, %v1896, 0
    %1916 = vmatprep.subr.mxu0 0.0
    %1917 = vmatpush1.msra.mxu0 0.0
    %1918 = vmatprep.subr.mxu0 0.0
    %1919 = vmatpush1.msra.mxu0 0.0
    %1920 = vmatprep.subr.mxu0 0.0
    %1921 = vmatpush1.msra.mxu0 0.0
    %1922 = vmatprep.subr.mxu0 0.0
    %1923 = vmatpush1.msra.mxu0 0.0
    %1924 = vmatprep.subr.mxu0 0.0
    %1925 = vmatpush1.msra.mxu0 0.0
    %1926 = vmatprep.subr.mxu0 0.0
    %1927 = vmatpush1.msra.mxu0 0.0
    %1928 = vmatprep.subr.mxu0 0.0
    %1929 = vmatpush1.msra.mxu0 0.0
    %1930 = vmatprep.subr.mxu0 0.0
    %1931 = vmatpush1.msra.mxu0 0.0
    %1932 = vmatprep.subr.mxu0 0.0
    %1933 = vmatpush1.msra.mxu0 0.0
    %1934 = vmatprep.subr.mxu0 0.0
    %1935 = vmatpush1.msra.mxu0 0.0
    %1936 = vmatprep.subr.mxu0 0.0
    %1937 = vmatpush1.msra.mxu0 0.0
    %1938 = vmatprep.subr.mxu0 0.0
    %1939 = vmatpush1.msra.mxu0 0.0
    %1940 = vmatprep.subr.mxu0 0.0
    %1941 = vmatpush1.msra.mxu0 %v1901
    %1942 = vmatprep.subr.mxu0 0.0
    %1943 = vmatpush1.msra.mxu0 %v1900
    %1944 = vmatprep.subr.mxu0 0.0
    %1945 = vmatpush1.msra.mxu0 %v1899
    %1946 = vmatprep.subr.mxu0 0.0
    %1947 = vmatpush1.msra.mxu0 %v1898
    %1948 = vmatprep.subr.mxu0 0.0
    %1949 = vmatpush2.msra.mxu0 0.0
    %1950 = vmatprep.subr.mxu0 0.0
    %1951 = vmatpush2.msra.mxu0 0.0
    %1952 = vmatprep.subr.mxu0 0.0
    %1953 = vmatpush2.msra.mxu0 0.0
    %1954 = vmatprep.subr.mxu0 0.0
    %1955 = vmatpush2.msra.mxu0 0.0
    %1956 = vmatprep.subr.mxu0 0.0
    %1957 = vmatpush2.msra.mxu0 0.0
    %1958 = vmatprep.subr.mxu0 0.0
    %1959 = vmatpush2.msra.mxu0 0.0
    %1960 = vmatprep.subr.mxu0 0.0
    %1961 = vmatpush2.msra.mxu0 0.0
    %1962 = vmatprep.subr.mxu0 0.0
    %1963 = vmatpush2.msra.mxu0 0.0
    %1964 = vmatprep.subr.mxu0 0.0
    %1965 = vmatpush2.msra.mxu0 0.0
    %1966 = vmatprep.subr.mxu0 0.0
    %1967 = vmatpush2.msra.mxu0 0.0
    %1968 = vmatprep.subr.mxu0 0.0
    %1969 = vmatpush2.msra.mxu0 0.0
    %1970 = vmatprep.subr.mxu0 0.0
    %1971 = vmatpush2.msra.mxu0 0.0
    %1972 = vmatprep.subr.mxu0 0.0
    %1973 = vmatpush2.msra.mxu0 0.0
    %1974 = vmatprep.subr.mxu0 0.0
    %1975 = vmatpush2.msra.mxu0 0.0
    %1976 = vmatprep.subr.mxu0 0.0
    %1977 = vmatpush2.msra.mxu0 0.0
    %1978 = vmatprep.subr.mxu0 0.0
    %1979 = vmatpush2.msra.mxu0 0.0
    %1980 = vmatprep.mubr.f32.mxu0 0.0
    %1981 = vmatmul.mubr.f32.gmra.mxu0 %v1911
    %v1982 = vpop.f32.mrf.mxu0
    %v1983 = vadd.f32 %v1908, %v1982
    %v1984 = vpop.f32.mrf.mxu0
    %1985 = vmatprep.mubr.f32.mxu0 0.0
    %1986 = vmatmul.mubr.f32.gmra.mxu0 %v1914
    %v1987 = vpop.f32.mrf.mxu0
    %v1988 = vadd.f32 %v1908, %v1987
    %v1989 = vpop.f32.mrf.mxu0
    %1990 = vdwg.mxu0
    %v1991 = vmul.f32 %v1983, 0.5
    %v1992 = vmul.f32 %v1988, 0.5
    %v1993 = vmul.f32 %v1983, 0.70710677
    %v1994 = vmul.f32 %v1988, 0.70710677
    %vm1995 = vcmp.ge.f32.partialorder %v1993, 0.0
    %vm1996 = vcmp.ge.f32.partialorder %v1994, 0.0
    %v1997 = vsel %vm1995, 1.0, -1.0
    %v1998 = vsel %vm1996, 1.0, -1.0
    %v1999 = vand.u32 2147483647, %v1993
    %v2000 = vand.u32 2147483647, %v1994
    %v2001 = vmul.f32 %v1999, 0.3275911
    %v2002 = vmul.f32 %v2000, 0.3275911
    %v2003 = vadd.f32 %v2001, 1.0
    %v2004 = vadd.f32 %v2002, 1.0
    %v2005 = vrcp.pop %v2003
    %v2006 = vmul.f32 1.0, %v2005
    %v2007 = vrcp.pop %v2004
    %v2008 = vmul.f32 1.0, %v2007
    %v2009 = vmul.f32 %v2006, 1.0614054
    %v2010 = vmul.f32 %v2008, 1.0614054
    %v2011 = vadd.f32 %v2009, -1.4531521
    %v2012 = vadd.f32 %v2010, -1.4531521
    %v2013 = vmul.f32 %v2011, %v2006
    %v2014 = vmul.f32 %v2012, %v2008
    %v2015 = vadd.f32 %v2013, 1.4214138
    %v2016 = vadd.f32 %v2014, 1.4214138
    %v2017 = vmul.f32 %v2015, %v2006
    %v2018 = vmul.f32 %v2016, %v2008
    %v2019 = vadd.f32 %v2017, -0.28449672
    %v2020 = vadd.f32 %v2018, -0.28449672
    %v2021 = vmul.f32 %v2019, %v2006
    %v2022 = vmul.f32 %v2020, %v2008
    %v2023 = vadd.f32 %v2021, 0.2548296
    %v2024 = vadd.f32 %v2022, 0.2548296
    %v2025 = vmul.f32 %v2023, %v2006
    %v2026 = vmul.f32 %v2024, %v2008
    %v2027 = vsub.f32 0.0, %v1999
    %v2028 = vsub.f32 0.0, %v2000
    %v2029 = vmul.f32 %v2027, %v1999
    %v2030 = vmul.f32 %v2028, %v2000
    %v2031 = vmul.f32 %v2029, 1.442695
    %v2032 = vpow.pop %v2031
    %v2033 = vmul.f32 %v2030, 1.442695
    %v2034 = vpow.pop %v2033
    %v2035 = vmul.f32 %v2025, %v2032
    %v2036 = vmul.f32 %v2026, %v2034
    %v2037 = vsub.f32 1.0, %v2035
    %v2038 = vsub.f32 1.0, %v2036
    %v2039 = vmul.f32 %v1997, %v2037
    %v2040 = vmul.f32 %v1998, %v2038
    %v2041 = vadd.f32 %v2039, 1.0
    %v2042 = vadd.f32 %v2040, 1.0
    %v2043 = vmul.f32 %v1991, %v2041
    %v2044 = vmul.f32 %v1992, %v2042
    %s2045 = scalar_lea.vmem %s18, 64
    %v2046 = vld [vmem:[%s2045] sm:$0xff]
    %v2047 = vld [vmem:[%s2045 + $0x8] sm:$0xff]
    %v2048 = vld [vmem:[%s2045 + $0x10] sm:$0xff]
    %v2049 = vld [vmem:[%s2045 + $0x18] sm:$0xff]
    %v2050 = vld [vmem:[%s2045 + $0x20] sm:$0xff]
    %v2051 = vld [vmem:[%s2045 + $0x28] sm:$0xff]
    %v2052 = vld [vmem:[%s2045 + $0x30] sm:$0xff]
    %v2053 = vld [vmem:[%s2045 + $0x38] sm:$0xff]
    %s2054 = scalar_lea.vmem %s19, 1
    %v2055 = vld [vmem:[%s2054] sm:$0x1]
    %v2057 = vlaneseq
    %v2058 = vshrl.u32 %v2057, 7
    %v2059 = vsub.s32 0, %v2058
    %v2060 = vrot.slane %v2055, %v2059
    %v2063 = vsel %vm1117, %v2043, 0
    %v2066 = vsel %vm1117, %v2044, 0
    %2068 = vmatprep.subr.mxu0 0.0
    %2069 = vmatpush1.msra.mxu0 0.0
    %2070 = vmatprep.subr.mxu0 0.0
    %2071 = vmatpush1.msra.mxu0 0.0
    %2072 = vmatprep.subr.mxu0 0.0
    %2073 = vmatpush1.msra.mxu0 0.0
    %2074 = vmatprep.subr.mxu0 0.0
    %2075 = vmatpush1.msra.mxu0 0.0
    %2076 = vmatprep.subr.mxu0 0.0
    %2077 = vmatpush1.msra.mxu0 0.0
    %2078 = vmatprep.subr.mxu0 0.0
    %2079 = vmatpush1.msra.mxu0 0.0
    %2080 = vmatprep.subr.mxu0 0.0
    %2081 = vmatpush1.msra.mxu0 0.0
    %2082 = vmatprep.subr.mxu0 0.0
    %2083 = vmatpush1.msra.mxu0 0.0
    %2084 = vmatprep.subr.mxu0 0.0
    %2085 = vmatpush1.msra.mxu0 %v2053
    %2086 = vmatprep.subr.mxu0 0.0
    %2087 = vmatpush1.msra.mxu0 %v2052
    %2088 = vmatprep.subr.mxu0 0.0
    %2089 = vmatpush1.msra.mxu0 %v2051
    %2090 = vmatprep.subr.mxu0 0.0
    %2091 = vmatpush1.msra.mxu0 %v2050
    %2092 = vmatprep.subr.mxu0 0.0
    %2093 = vmatpush1.msra.mxu0 %v2049
    %2094 = vmatprep.subr.mxu0 0.0
    %2095 = vmatpush1.msra.mxu0 %v2048
    %2096 = vmatprep.subr.mxu0 0.0
    %2097 = vmatpush1.msra.mxu0 %v2047
    %2098 = vmatprep.subr.mxu0 0.0
    %2099 = vmatpush1.msra.mxu0 %v2046
    %2100 = vmatprep.subr.mxu0 0.0
    %2101 = vmatpush2.msra.mxu0 0.0
    %2102 = vmatprep.subr.mxu0 0.0
    %2103 = vmatpush2.msra.mxu0 0.0
    %2104 = vmatprep.subr.mxu0 0.0
    %2105 = vmatpush2.msra.mxu0 0.0
    %2106 = vmatprep.subr.mxu0 0.0
    %2107 = vmatpush2.msra.mxu0 0.0
    %2108 = vmatprep.subr.mxu0 0.0
    %2109 = vmatpush2.msra.mxu0 0.0
    %2110 = vmatprep.subr.mxu0 0.0
    %2111 = vmatpush2.msra.mxu0 0.0
    %2112 = vmatprep.subr.mxu0 0.0
    %2113 = vmatpush2.msra.mxu0 0.0
    %2114 = vmatprep.subr.mxu0 0.0
    %2115 = vmatpush2.msra.mxu0 0.0
    %2116 = vmatprep.subr.mxu0 0.0
    %2117 = vmatpush2.msra.mxu0 0.0
    %2118 = vmatprep.subr.mxu0 0.0
    %2119 = vmatpush2.msra.mxu0 0.0
    %2120 = vmatprep.subr.mxu0 0.0
    %2121 = vmatpush2.msra.mxu0 0.0
    %2122 = vmatprep.subr.mxu0 0.0
    %2123 = vmatpush2.msra.mxu0 0.0
    %2124 = vmatprep.subr.mxu0 0.0
    %2125 = vmatpush2.msra.mxu0 0.0
    %2126 = vmatprep.subr.mxu0 0.0
    %2127 = vmatpush2.msra.mxu0 0.0
    %2128 = vmatprep.subr.mxu0 0.0
    %2129 = vmatpush2.msra.mxu0 0.0
    %2130 = vmatprep.subr.mxu0 0.0
    %2131 = vmatpush2.msra.mxu0 0.0
    %2132 = vmatprep.mubr.f32.mxu0 0.0
    %2133 = vmatmul.mubr.f32.gmra.mxu0 %v2063
    %v2134 = vpop.f32.mrf.mxu0
    %v2135 = vadd.f32 %v2060, %v2134
    %v2136 = vpop.f32.mrf.mxu0
    %2137 = vmatprep.mubr.f32.mxu0 0.0
    %2138 = vmatmul.mubr.f32.gmra.mxu0 %v2066
    %v2139 = vpop.f32.mrf.mxu0
    %v2140 = vadd.f32 %v2060, %v2139
    %v2141 = vpop.f32.mrf.mxu0
    %2142 = vdwg.mxu0
    %v2143 = vadd.f32 %v1895, %v2135
    %v2144 = vadd.f32 %v1896, %v2140
    %s2145 = scalar_lea.vmem %s20, 1
    %v2146 = vld [vmem:[%s2145] sm:$0x1]
    %s2147 = scalar_lea.vmem %s21, 1
    %v2148 = vld [vmem:[%s2147] sm:$0x1]
    %v2149 = vsel %vm248, %v2143, 0.0
    %2150 = vadd.xlane.f32.xlu0 %v2149
    %v2151 = vpop.xlane.xlu0 %2150
    %v2152 = vsel %vm248, %v2144, 0.0
    %2153 = vadd.xlane.f32.xlu0 %v2152
    %v2154 = vpop.xlane.xlu0 %2153
    %v2155 = vmul.f32 %v2151, %v255
    %v2156 = vmul.f32 %v2154, %v255
    %v2157 = vsub.f32 %v2143, %v2155
    %v2158 = vsub.f32 %v2144, %v2156
    %v2159 = vmul.f32 %v2157, %v2157
    %v2160 = vmul.f32 %v2158, %v2158
    %v2161 = vsel %vm248, %v2159, 0.0
    %2162 = vadd.xlane.f32.xlu0 %v2161
    %v2163 = vpop.xlane.xlu0 %2162
    %v2164 = vsel %vm248, %v2160, 0.0
    %2165 = vadd.xlane.f32.xlu0 %v2164
    %v2166 = vpop.xlane.xlu0 %2165
    %v2167 = vmul.f32 %v2163, %v255
    %v2168 = vmul.f32 %v2166, %v255
    %v2169 = vadd.f32 %v2167, 1e-12
    %v2170 = vadd.f32 %v2168, 1e-12
    %v2171 = vrsqrt.pop %v2169
    %v2172 = vrsqrt.pop %v2170
    %v2173 = vmul.f32 %v2157, %v2171
    %v2174 = vmul.f32 %v2158, %v2172
    %v2176 = vlaneseq
    %v2177 = vshrl.u32 %v2176, 7
    %v2178 = vsub.s32 0, %v2177
    %v2179 = vrot.slane %v2146, %v2178
    %v2181 = vmul.f32 %v2173, %v2179
    %v2182 = vmul.f32 %v2174, %v2179
    %v2184 = vlaneseq
    %v2185 = vshrl.u32 %v2184, 7
    %v2186 = vsub.s32 0, %v2185
    %v2187 = vrot.slane %v2148, %v2186
    %v2189 = vadd.f32 %v2181, %v2187
    %v2190 = vadd.f32 %v2182, %v2187
    %v2191 = vld [vmem:[%s4] sm:$0x3]
    %v2193 = vsel %vm407, %v2191, 0
    %2195 = vmatprep.subr.mxu0 0.0
    %2196 = vmatpush1.msra.mxu0 0.0
    %2197 = vmatprep.subr.mxu0 0.0
    %2198 = vmatpush1.msra.mxu0 0.0
    %2199 = vmatprep.subr.mxu0 0.0
    %2200 = vmatpush1.msra.mxu0 0.0
    %2201 = vmatprep.subr.mxu0 0.0
    %2202 = vmatpush1.msra.mxu0 0.0
    %2203 = vmatprep.subr.mxu0 0.0
    %2204 = vmatpush1.msra.mxu0 0.0
    %2205 = vmatprep.subr.mxu0 0.0
    %2206 = vmatpush1.msra.mxu0 0.0
    %2207 = vmatprep.subr.mxu0 0.0
    %2208 = vmatpush1.msra.mxu0 0.0
    %2209 = vmatprep.subr.mxu0 0.0
    %2210 = vmatpush1.msra.mxu0 0.0
    %2211 = vmatprep.subr.mxu0 0.0
    %2212 = vmatpush1.msra.mxu0 0.0
    %2213 = vmatprep.subr.mxu0 0.0
    %2214 = vmatpush1.msra.mxu0 0.0
    %2215 = vmatprep.subr.mxu0 0.0
    %2216 = vmatpush1.msra.mxu0 0.0
    %2217 = vmatprep.subr.mxu0 0.0
    %2218 = vmatpush1.msra.mxu0 0.0
    %2219 = vmatprep.subr.mxu0 0.0
    %2220 = vmatpush1.msra.mxu0 0.0
    %2221 = vmatprep.subr.mxu0 0.0
    %2222 = vmatpush1.msra.mxu0 0.0
    %2223 = vmatprep.subr.mxu0 0.0
    %2224 = vmatpush1.msra.mxu0 %v2190
    %2225 = vmatprep.subr.mxu0 0.0
    %2226 = vmatpush1.msra.mxu0 %v2189
    %2227 = vmatprep.subr.mxu0 0.0
    %2228 = vmatpush2.msra.mxu0 0.0
    %2229 = vmatprep.subr.mxu0 0.0
    %2230 = vmatpush2.msra.mxu0 0.0
    %2231 = vmatprep.subr.mxu0 0.0
    %2232 = vmatpush2.msra.mxu0 0.0
    %2233 = vmatprep.subr.mxu0 0.0
    %2234 = vmatpush2.msra.mxu0 0.0
    %2235 = vmatprep.subr.mxu0 0.0
    %2236 = vmatpush2.msra.mxu0 0.0
    %2237 = vmatprep.subr.mxu0 0.0
    %2238 = vmatpush2.msra.mxu0 0.0
    %2239 = vmatprep.subr.mxu0 0.0
    %2240 = vmatpush2.msra.mxu0 0.0
    %2241 = vmatprep.subr.mxu0 0.0
    %2242 = vmatpush2.msra.mxu0 0.0
    %2243 = vmatprep.subr.mxu0 0.0
    %2244 = vmatpush2.msra.mxu0 0.0
    %2245 = vmatprep.subr.mxu0 0.0
    %2246 = vmatpush2.msra.mxu0 0.0
    %2247 = vmatprep.subr.mxu0 0.0
    %2248 = vmatpush2.msra.mxu0 0.0
    %2249 = vmatprep.subr.mxu0 0.0
    %2250 = vmatpush2.msra.mxu0 0.0
    %2251 = vmatprep.subr.mxu0 0.0
    %2252 = vmatpush2.msra.mxu0 0.0
    %2253 = vmatprep.subr.mxu0 0.0
    %2254 = vmatpush2.msra.mxu0 0.0
    %2255 = vmatprep.subr.mxu0 0.0
    %2256 = vmatpush2.msra.mxu0 0.0
    %2257 = vmatprep.subr.mxu0 0.0
    %2258 = vmatpush2.msra.mxu0 0.0
    %2259 = vmatprep.mubr.f32.mxu0 0.0
    %2260 = vmatmul.mubr.f32.gmra.mxu0 %v2193
    %v2261 = vpop.f32.mrf.mxu0
    %v2262 = vadd.f32 0.0, %v2261
    %v2263 = vpop.f32.mrf.mxu0
    %2264 = vdwg.mxu0
    %v2265 = vld [vmem:[%s22] sm:$0xff]
    %v2266 = vld [vmem:[%s22 + $0x8] sm:$0xff]
    %v2267 = vld [vmem:[%s22 + $0x10] sm:$0xff]
    %v2268 = vld [vmem:[%s22 + $0x18] sm:$0xff]
    %v2269 = vld [vmem:[%s23] sm:$0x1]
    %v2271 = vlaneseq
    %v2272 = vshrl.u32 %v2271, 7
    %v2273 = vsub.s32 0, %v2272
    %v2274 = vrot.slane %v2269, %v2273
    %v2277 = vsel %vm248, %v2262, 0
    %2279 = vmatprep.subr.mxu0 0.0
    %2280 = vmatpush1.msra.mxu0 0.0
    %2281 = vmatprep.subr.mxu0 0.0
    %2282 = vmatpush1.msra.mxu0 0.0
    %2283 = vmatprep.subr.mxu0 0.0
    %2284 = vmatpush1.msra.mxu0 0.0
    %2285 = vmatprep.subr.mxu0 0.0
    %2286 = vmatpush1.msra.mxu0 0.0
    %2287 = vmatprep.subr.mxu0 0.0
    %2288 = vmatpush1.msra.mxu0 0.0
    %2289 = vmatprep.subr.mxu0 0.0
    %2290 = vmatpush1.msra.mxu0 0.0
    %2291 = vmatprep.subr.mxu0 0.0
    %2292 = vmatpush1.msra.mxu0 0.0
    %2293 = vmatprep.subr.mxu0 0.0
    %2294 = vmatpush1.msra.mxu0 0.0
    %2295 = vmatprep.subr.mxu0 0.0
    %2296 = vmatpush1.msra.mxu0 0.0
    %2297 = vmatprep.subr.mxu0 0.0
    %2298 = vmatpush1.msra.mxu0 0.0
    %2299 = vmatprep.subr.mxu0 0.0
    %2300 = vmatpush1.msra.mxu0 0.0
    %2301 = vmatprep.subr.mxu0 0.0
    %2302 = vmatpush1.msra.mxu0 0.0
    %2303 = vmatprep.subr.mxu0 0.0
    %2304 = vmatpush1.msra.mxu0 %v2268
    %2305 = vmatprep.subr.mxu0 0.0
    %2306 = vmatpush1.msra.mxu0 %v2267
    %2307 = vmatprep.subr.mxu0 0.0
    %2308 = vmatpush1.msra.mxu0 %v2266
    %2309 = vmatprep.subr.mxu0 0.0
    %2310 = vmatpush1.msra.mxu0 %v2265
    %2311 = vmatprep.subr.mxu0 0.0
    %2312 = vmatpush2.msra.mxu0 0.0
    %2313 = vmatprep.subr.mxu0 0.0
    %2314 = vmatpush2.msra.mxu0 0.0
    %2315 = vmatprep.subr.mxu0 0.0
    %2316 = vmatpush2.msra.mxu0 0.0
    %2317 = vmatprep.subr.mxu0 0.0
    %2318 = vmatpush2.msra.mxu0 0.0
    %2319 = vmatprep.subr.mxu0 0.0
    %2320 = vmatpush2.msra.mxu0 0.0
    %2321 = vmatprep.subr.mxu0 0.0
    %2322 = vmatpush2.msra.mxu0 0.0
    %2323 = vmatprep.subr.mxu0 0.0
    %2324 = vmatpush2.msra.mxu0 0.0
    %2325 = vmatprep.subr.mxu0 0.0
    %2326 = vmatpush2.msra.mxu0 0.0
    %2327 = vmatprep.subr.mxu0 0.0
    %2328 = vmatpush2.msra.mxu0 0.0
    %2329 = vmatprep.subr.mxu0 0.0
    %2330 = vmatpush2.msra.mxu0 0.0
    %2331 = vmatprep.subr.mxu0 0.0
    %2332 = vmatpush2.msra.mxu0 0.0
    %2333 = vmatprep.subr.mxu0 0.0
    %2334 = vmatpush2.msra.mxu0 0.0
    %2335 = vmatprep.subr.mxu0 0.0
    %2336 = vmatpush2.msra.mxu0 0.0
    %2337 = vmatprep.subr.mxu0 0.0
    %2338 = vmatpush2.msra.mxu0 0.0
    %2339 = vmatprep.subr.mxu0 0.0
    %2340 = vmatpush2.msra.mxu0 0.0
    %2341 = vmatprep.subr.mxu0 0.0
    %2342 = vmatpush2.msra.mxu0 0.0
    %2343 = vmatprep.mubr.f32.mxu0 0.0
    %2344 = vmatmul.mubr.f32.gmra.mxu0 %v2277
    %v2345 = vpop.f32.mrf.mxu0
    %v2346 = vadd.f32 %v2274, %v2345
    %v2347 = vpop.f32.mrf.mxu0
    %2348 = vdwg.mxu0
    %v2349 = vtanh.pop %v2346
    %v2350 = vld [vmem:[%s24] sm:$0xff]
    %v2351 = vld [vmem:[%s24 + $0x8] sm:$0xff]
    %v2352 = vld [vmem:[%s24 + $0x10] sm:$0xff]
    %v2353 = vld [vmem:[%s24 + $0x18] sm:$0xff]
    %v2354 = vld [vmem:[%s25] sm:$0x1]
    %v2356 = vlaneseq
    %v2357 = vshrl.u32 %v2356, 7
    %v2358 = vsub.s32 0, %v2357
    %v2359 = vrot.slane %v2354, %v2358
    %v2362 = vsel %vm248, %v2349, 0
    %2364 = vmatprep.subr.mxu0 0.0
    %2365 = vmatpush1.msra.mxu0 0.0
    %2366 = vmatprep.subr.mxu0 0.0
    %2367 = vmatpush1.msra.mxu0 0.0
    %2368 = vmatprep.subr.mxu0 0.0
    %2369 = vmatpush1.msra.mxu0 0.0
    %2370 = vmatprep.subr.mxu0 0.0
    %2371 = vmatpush1.msra.mxu0 0.0
    %2372 = vmatprep.subr.mxu0 0.0
    %2373 = vmatpush1.msra.mxu0 0.0
    %2374 = vmatprep.subr.mxu0 0.0
    %2375 = vmatpush1.msra.mxu0 0.0
    %2376 = vmatprep.subr.mxu0 0.0
    %2377 = vmatpush1.msra.mxu0 0.0
    %2378 = vmatprep.subr.mxu0 0.0
    %2379 = vmatpush1.msra.mxu0 0.0
    %2380 = vmatprep.subr.mxu0 0.0
    %2381 = vmatpush1.msra.mxu0 0.0
    %2382 = vmatprep.subr.mxu0 0.0
    %2383 = vmatpush1.msra.mxu0 0.0
    %2384 = vmatprep.subr.mxu0 0.0
    %2385 = vmatpush1.msra.mxu0 0.0
    %2386 = vmatprep.subr.mxu0 0.0
    %2387 = vmatpush1.msra.mxu0 0.0
    %2388 = vmatprep.subr.mxu0 0.0
    %2389 = vmatpush1.msra.mxu0 %v2353
    %2390 = vmatprep.subr.mxu0 0.0
    %2391 = vmatpush1.msra.mxu0 %v2352
    %2392 = vmatprep.subr.mxu0 0.0
    %2393 = vmatpush1.msra.mxu0 %v2351
    %2394 = vmatprep.subr.mxu0 0.0
    %2395 = vmatpush1.msra.mxu0 %v2350
    %2396 = vmatprep.subr.mxu0 0.0
    %2397 = vmatpush2.msra.mxu0 0.0
    %2398 = vmatprep.subr.mxu0 0.0
    %2399 = vmatpush2.msra.mxu0 0.0
    %2400 = vmatprep.subr.mxu0 0.0
    %2401 = vmatpush2.msra.mxu0 0.0
    %2402 = vmatprep.subr.mxu0 0.0
    %2403 = vmatpush2.msra.mxu0 0.0
    %2404 = vmatprep.subr.mxu0 0.0
    %2405 = vmatpush2.msra.mxu0 0.0
    %2406 = vmatprep.subr.mxu0 0.0
    %2407 = vmatpush2.msra.mxu0 0.0
    %2408 = vmatprep.subr.mxu0 0.0
    %2409 = vmatpush2.msra.mxu0 0.0
    %2410 = vmatprep.subr.mxu0 0.0
    %2411 = vmatpush2.msra.mxu0 0.0
    %2412 = vmatprep.subr.mxu0 0.0
    %2413 = vmatpush2.msra.mxu0 0.0
    %2414 = vmatprep.subr.mxu0 0.0
    %2415 = vmatpush2.msra.mxu0 0.0
    %2416 = vmatprep.subr.mxu0 0.0
    %2417 = vmatpush2.msra.mxu0 0.0
    %2418 = vmatprep.subr.mxu0 0.0
    %2419 = vmatpush2.msra.mxu0 0.0
    %2420 = vmatprep.subr.mxu0 0.0
    %2421 = vmatpush2.msra.mxu0 0.0
    %2422 = vmatprep.subr.mxu0 0.0
    %2423 = vmatpush2.msra.mxu0 0.0
    %2424 = vmatprep.subr.mxu0 0.0
    %2425 = vmatpush2.msra.mxu0 0.0
    %2426 = vmatprep.subr.mxu0 0.0
    %2427 = vmatpush2.msra.mxu0 0.0
    %2428 = vmatprep.mubr.f32.mxu0 0.0
    %2429 = vmatmul.mubr.f32.gmra.mxu0 %v2362
    %v2430 = vpop.f32.mrf.mxu0
    %v2431 = vadd.f32 %v2359, %v2430
    %v2432 = vpop.f32.mrf.mxu0
    %2433 = vdwg.mxu0
    %v2434 = vmax.f32 %v2431, 0.0
    %v2435 = vld [vmem:[%s26] sm:$0xff]
    %v2436 = vld [vmem:[%s26 + $0x8] sm:$0xff]
    %v2437 = vld [vmem:[%s27] sm:$0x1]
    %v2439 = vlaneseq
    %v2440 = vshrl.u32 %v2439, 7
    %v2441 = vsub.s32 0, %v2440
    %v2442 = vrot.slane %v2437, %v2441
    %v2445 = vsel %vm407, %v2434, 0
    %2447 = vmatprep.subr.mxu0 0.0
    %2448 = vmatpush1.msra.mxu0 0.0
    %2449 = vmatprep.subr.mxu0 0.0
    %2450 = vmatpush1.msra.mxu0 0.0
    %2451 = vmatprep.subr.mxu0 0.0
    %2452 = vmatpush1.msra.mxu0 0.0
    %2453 = vmatprep.subr.mxu0 0.0
    %2454 = vmatpush1.msra.mxu0 0.0
    %2455 = vmatprep.subr.mxu0 0.0
    %2456 = vmatpush1.msra.mxu0 0.0
    %2457 = vmatprep.subr.mxu0 0.0
    %2458 = vmatpush1.msra.mxu0 0.0
    %2459 = vmatprep.subr.mxu0 0.0
    %2460 = vmatpush1.msra.mxu0 0.0
    %2461 = vmatprep.subr.mxu0 0.0
    %2462 = vmatpush1.msra.mxu0 0.0
    %2463 = vmatprep.subr.mxu0 0.0
    %2464 = vmatpush1.msra.mxu0 0.0
    %2465 = vmatprep.subr.mxu0 0.0
    %2466 = vmatpush1.msra.mxu0 0.0
    %2467 = vmatprep.subr.mxu0 0.0
    %2468 = vmatpush1.msra.mxu0 0.0
    %2469 = vmatprep.subr.mxu0 0.0
    %2470 = vmatpush1.msra.mxu0 0.0
    %2471 = vmatprep.subr.mxu0 0.0
    %2472 = vmatpush1.msra.mxu0 0.0
    %2473 = vmatprep.subr.mxu0 0.0
    %2474 = vmatpush1.msra.mxu0 0.0
    %2475 = vmatprep.subr.mxu0 0.0
    %2476 = vmatpush1.msra.mxu0 %v2436
    %2477 = vmatprep.subr.mxu0 0.0
    %2478 = vmatpush1.msra.mxu0 %v2435
    %2479 = vmatprep.subr.mxu0 0.0
    %2480 = vmatpush2.msra.mxu0 0.0
    %2481 = vmatprep.subr.mxu0 0.0
    %2482 = vmatpush2.msra.mxu0 0.0
    %2483 = vmatprep.subr.mxu0 0.0
    %2484 = vmatpush2.msra.mxu0 0.0
    %2485 = vmatprep.subr.mxu0 0.0
    %2486 = vmatpush2.msra.mxu0 0.0
    %2487 = vmatprep.subr.mxu0 0.0
    %2488 = vmatpush2.msra.mxu0 0.0
    %2489 = vmatprep.subr.mxu0 0.0
    %2490 = vmatpush2.msra.mxu0 0.0
    %2491 = vmatprep.subr.mxu0 0.0
    %2492 = vmatpush2.msra.mxu0 0.0
    %2493 = vmatprep.subr.mxu0 0.0
    %2494 = vmatpush2.msra.mxu0 0.0
    %2495 = vmatprep.subr.mxu0 0.0
    %2496 = vmatpush2.msra.mxu0 0.0
    %2497 = vmatprep.subr.mxu0 0.0
    %2498 = vmatpush2.msra.mxu0 0.0
    %2499 = vmatprep.subr.mxu0 0.0
    %2500 = vmatpush2.msra.mxu0 0.0
    %2501 = vmatprep.subr.mxu0 0.0
    %2502 = vmatpush2.msra.mxu0 0.0
    %2503 = vmatprep.subr.mxu0 0.0
    %2504 = vmatpush2.msra.mxu0 0.0
    %2505 = vmatprep.subr.mxu0 0.0
    %2506 = vmatpush2.msra.mxu0 0.0
    %2507 = vmatprep.subr.mxu0 0.0
    %2508 = vmatpush2.msra.mxu0 0.0
    %2509 = vmatprep.subr.mxu0 0.0
    %2510 = vmatpush2.msra.mxu0 0.0
    %2511 = vmatprep.mubr.f32.mxu0 0.0
    %2512 = vmatmul.mubr.f32.gmra.mxu0 %v2445
    %v2513 = vpop.f32.mrf.mxu0
    %v2514 = vadd.f32 %v2442, %v2513
    %v2515 = vpop.f32.mrf.mxu0
    %2516 = vdwg.mxu0
    %2517 = vst [vmem:[#allocation2] sm:$0x3] %v2514
    // Predicated region
    $region114: #{bert_sentiment_forward.1} parent=1 // pred_check
      _
    $region115: #{bert_sentiment_forward.1} parent=1 // pred_check_branch
      %2519 = sbr.rel (0) target = $region117
    $region116: #{bert_sentiment_forward.1} parent=1 // pred_region
      %s2521 = ssub.s32 32, 32
      %2522 = vsyncadd [#allocation3], %s2521
      %s2524 = sshll.u32 [#allocation2], 4
      %s2525 = int_to_ptr.vmem [resolvable:$true] %s2524
      %2527 = dma.vmem_to_hbm [thread:$0]  %s2525, 32, %s28, [#allocation3]
    $region117: #{bert_sentiment_forward.1} parent=1 // pred_fallthru
      _
    // Predicated region
    $region118: #{bert_sentiment_forward.1} parent=1 // pred_check
      _
    $region119: #{bert_sentiment_forward.1} parent=1 // pred_check_branch
      %2529 = sbr.rel (0) target = $region121
    $region120: #{bert_sentiment_forward.1} parent=1 // pred_region
      %2530 = dma.done [#allocation3], 32
    $region121: #{bert_sentiment_forward.1} parent=1 // pred_fallthru
      _
    %2531 = vsyncpa [#allocation3], 1

</llo_original>
